<compile_context>
chip_gen: v5e
topology: v5e:2x2
jax: 0.10.0
libtpu: 0.0.40
codegen_flags: <defaults>
</compile_context>

<pallas_src>
import functools
import numpy as np
import jax
import jax.numpy as jnp
from jax import lax
from jax.experimental import pallas as pl
from jax.experimental.pallas import tpu as pltpu

# ----------------------- hyper-parameters (small) ---------------------------
MAX_N, MAX_L = 3, 3
N_BLOCKS = 2
UNITS = 16
CUTOFF, TB_CUTOFF = 5.0, 4.0
N_ATOM_TYPES = 95
SHF_DIM = (MAX_L + 1) ** 2          # 16
RBF_DIM = MAX_N * SHF_DIM           # 48
MEAN, STD = 0.0, 1.0

_TILE_M = 4096                      # row tile for pipelined grids


# ----------------------- shape helpers --------------------------------------
def _round_up(x, m):
    return ((x + m - 1) // m) * m


def _padded_count(m):
    """Pad a row count once: multiple of 8, and of _TILE_M if larger."""
    m_pad = max(_round_up(m, 8), 8)
    if m_pad > _TILE_M:
        m_pad = _round_up(m_pad, _TILE_M)
    return m_pad


def _tile_rows(m_pad):
    return min(m_pad, _TILE_M)


# Mosaic-friendly dot_general dimension numbers (avoid HBM transposes).
_NT = (((1,), (1,)), ((), ()))   # a @ b.T
_TN = (((0,), (0,)), ((), ()))   # a.T @ b


# ----------------------- fused dense (matmul + bias + swish) -----------------
def _dense_fwd_kernel(x_ref, w_ref, b_ref, o_ref):
    h = jnp.dot(x_ref[...], w_ref[...],
                preferred_element_type=jnp.float32) + b_ref[...]
    o_ref[...] = h * jax.nn.sigmoid(h)              # swish


def _dense_bwd_kernel(x_ref, w_ref, b_ref, g_ref, dx_ref, dw_ref, db_ref):
    x = x_ref[...]
    w = w_ref[...]
    g = g_ref[...]
    h = jnp.dot(x, w, preferred_element_type=jnp.float32) + b_ref[...]
    s = jax.nn.sigmoid(h)
    dh = g * (s + h * s * (1.0 - s))
    dx_ref[...] = lax.dot_general(dh, w, _NT, preferred_element_type=jnp.float32)
    # per-tile partial dW / db (summed outside) -> grid stays "parallel"
    dw_ref[...] = lax.dot_general(x, dh, _TN, preferred_element_type=jnp.float32)
    db_ref[...] = jnp.sum(dh, axis=0, keepdims=True)


def _dense_forward(x, w, b):
    M, K = x.shape
    N = w.shape[1]
    tile = _tile_rows(M)
    b2 = b.reshape(1, N)
    return pl.pallas_call(
        _dense_fwd_kernel,
        out_shape=jax.ShapeDtypeStruct((M, N), jnp.float32),
        grid=(M // tile,),
        in_specs=[pl.BlockSpec((tile, K), lambda i: (i, 0)),
                  pl.BlockSpec((K, N), lambda i: (0, 0)),
                  pl.BlockSpec((1, N), lambda i: (0, 0))],
        out_specs=pl.BlockSpec((tile, N), lambda i: (i, 0)),
        compiler_params=pltpu.CompilerParams(
            dimension_semantics=("parallel",)),
        cost_estimate=pl.CostEstimate(
            flops=2 * M * K * N,
            transcendentals=M * N,
            bytes_accessed=4 * (M * K + K * N + M * N)),
    )(x, w, b2)


def _dense_backward(x, w, b, g):
    M, K = x.shape
    N = w.shape[1]
    tile = _tile_rows(M)
    nt = M // tile
    b2 = b.reshape(1, N)
    dx, dwp, dbp = pl.pallas_call(
        _dense_bwd_kernel,
        out_shape=(jax.ShapeDtypeStruct((M, K), jnp.float32),
                   jax.ShapeDtypeStruct((nt, K, N), jnp.float32),
                   jax.ShapeDtypeStruct((nt, 1, N), jnp.float32)),
        grid=(nt,),
        in_specs=[pl.BlockSpec((tile, K), lambda i: (i, 0)),
                  pl.BlockSpec((K, N), lambda i: (0, 0)),
                  pl.BlockSpec((1, N), lambda i: (0, 0)),
                  pl.BlockSpec((tile, N), lambda i: (i, 0))],
        out_specs=(pl.BlockSpec((tile, K), lambda i: (i, 0)),
                   pl.BlockSpec((None, K, N), lambda i: (i, 0, 0)),
                   pl.BlockSpec((None, 1, N), lambda i: (i, 0, 0))),
        compiler_params=pltpu.CompilerParams(
            dimension_semantics=("parallel",)),
        cost_estimate=pl.CostEstimate(
            flops=6 * M * K * N,
            transcendentals=M * N,
            bytes_accessed=4 * (2 * M * K + 2 * M * N + (nt + 1) * K * N)),
    )(x, w, b2, g)
    return dx, jnp.sum(dwp, axis=0), jnp.sum(dbp, axis=0).reshape(b.shape)


@jax.custom_vjp
def dense_swish(x, w, b):
    return _dense_forward(x, w, b)


def _ds_fwd(x, w, b):
    return _dense_forward(x, w, b), (x, w, b)


def _ds_bwd(res, g):
    x, w, b = res
    return _dense_backward(x, w, b, g)


dense_swish.defvjp(_ds_fwd, _ds_bwd)


# ----------------------- gated MLP with fused residual add -------------------
# h = x @ [wg|wv] + b ; out = sigmoid(h_g) * swish(h_v) + residual
def _gated_res_fwd_kernel(x_ref, w_ref, b_ref, r_ref, o_ref):
    h = jnp.dot(x_ref[...], w_ref[...],
                preferred_element_type=jnp.float32) + b_ref[...]
    gate = jax.nn.sigmoid(h[:, :UNITS])
    v = h[:, UNITS:]
    o_ref[...] = gate * (v * jax.nn.sigmoid(v)) + r_ref[...]


def _gated_res_bwd_kernel(x_ref, w_ref, b_ref, g_ref, dx_ref, dw_ref, db_ref):
    x = x_ref[...]
    w = w_ref[...]
    g = g_ref[...]
    h = jnp.dot(x, w, preferred_element_type=jnp.float32) + b_ref[...]
    sg = jax.nn.sigmoid(h[:, :UNITS])
    v = h[:, UNITS:]
    sv = jax.nn.sigmoid(v)
    val = v * sv                                    # swish(v)
    d_gate = g * val * sg * (1.0 - sg)
    d_val = g * sg * (sv + val * (1.0 - sv))
    dh = jnp.concatenate([d_gate, d_val], axis=1)   # (tile, 2U)
    dx_ref[...] = lax.dot_general(dh, w, _NT, preferred_element_type=jnp.float32)
    dw_ref[...] = lax.dot_general(x, dh, _TN, preferred_element_type=jnp.float32)
    db_ref[...] = jnp.sum(dh, axis=0, keepdims=True)


def _gated_res_forward(x, wcat, bcat, residual):
    M, K = x.shape
    N2 = wcat.shape[1]
    tile = _tile_rows(M)
    b2 = bcat.reshape(1, N2)
    return pl.pallas_call(
        _gated_res_fwd_kernel,
        out_shape=jax.ShapeDtypeStruct((M, UNITS), jnp.float32),
        grid=(M // tile,),
        in_specs=[pl.BlockSpec((tile, K), lambda i: (i, 0)),
                  pl.BlockSpec((K, N2), lambda i: (0, 0)),
                  pl.BlockSpec((1, N2), lambda i: (0, 0)),
                  pl.BlockSpec((tile, UNITS), lambda i: (i, 0))],
        out_specs=pl.BlockSpec((tile, UNITS), lambda i: (i, 0)),
        input_output_aliases={3: 0},    # residual buffer reused for the output
        compiler_params=pltpu.CompilerParams(
            dimension_semantics=("parallel",)),
        cost_estimate=pl.CostEstimate(
            flops=2 * M * K * N2,
            transcendentals=M * N2,
            bytes_accessed=4 * (M * K + K * N2 + 2 * M * UNITS)),
    )(x, wcat, b2, residual)


def _gated_res_backward(x, wcat, bcat, g):
    M, K = x.shape
    N2 = wcat.shape[1]
    tile = _tile_rows(M)
    nt = M // tile
    b2 = bcat.reshape(1, N2)
    dx, dwp, dbp = pl.pallas_call(
        _gated_res_bwd_kernel,
        out_shape=(jax.ShapeDtypeStruct((M, K), jnp.float32),
                   jax.ShapeDtypeStruct((nt, K, N2), jnp.float32),
                   jax.ShapeDtypeStruct((nt, 1, N2), jnp.float32)),
        grid=(nt,),
        in_specs=[pl.BlockSpec((tile, K), lambda i: (i, 0)),
                  pl.BlockSpec((K, N2), lambda i: (0, 0)),
                  pl.BlockSpec((1, N2), lambda i: (0, 0)),
                  pl.BlockSpec((tile, UNITS), lambda i: (i, 0))],
        out_specs=(pl.BlockSpec((tile, K), lambda i: (i, 0)),
                   pl.BlockSpec((None, K, N2), lambda i: (i, 0, 0)),
                   pl.BlockSpec((None, 1, N2), lambda i: (i, 0, 0))),
        compiler_params=pltpu.CompilerParams(
            dimension_semantics=("parallel",)),
        cost_estimate=pl.CostEstimate(
            flops=6 * M * K * N2,
            transcendentals=M * N2,
            bytes_accessed=4 * (2 * M * K + 2 * M * UNITS + (nt + 1) * K * N2)),
    )(x, wcat, b2, g)
    return dx, jnp.sum(dwp, axis=0), jnp.sum(dbp, axis=0).reshape(bcat.shape)


@jax.custom_vjp
def gated_mlp_res_p(x, wcat, bcat, r):
    return _gated_res_forward(x, wcat, bcat, r)


def _gmlpr_fwd(x, wcat, bcat, r):
    # residual intentionally NOT saved (it is aliased to the output).
    return _gated_res_forward(x, wcat, bcat, r), (x, wcat, bcat)


def _gmlpr_bwd(res, g):
    x, wcat, bcat = res
    dx, dw, db = _gated_res_backward(x, wcat, bcat, g)
    return dx, dw, db, g     # d(residual) is the incoming cotangent


gated_mlp_res_p.defvjp(_gmlpr_fwd, _gmlpr_bwd)


# ----------------------- fused ConcatAtoms bond-net + atom-net ---------------
# One pallas_call per block:
#   h1 = xs @ W1[:U] + xr @ W1[U:2U] + xb @ W1[2U:3U] + b1   (no HBM concat)
#   bond = sigmoid(h1_g) * swish(h1_v)
#   h2 = bond @ W2 + b2 ; msgs = sigmoid(h2_g) * swish(h2_v)
def _block_fwd_kernel(xs_ref, xr_ref, xb_ref, w1_ref, b1_ref, w2_ref, b2_ref,
                      bond_ref, msg_ref):
    h1 = (jnp.dot(xs_ref[...], w1_ref[0:UNITS, :],
                  preferred_element_type=jnp.float32)
          + jnp.dot(xr_ref[...], w1_ref[UNITS:2 * UNITS, :],
                    preferred_element_type=jnp.float32)
          + jnp.dot(xb_ref[...], w1_ref[2 * UNITS:3 * UNITS, :],
                    preferred_element_type=jnp.float32)
          + b1_ref[...])
    g1 = jax.nn.sigmoid(h1[:, :UNITS])
    v1 = h1[:, UNITS:]
    bond = g1 * (v1 * jax.nn.sigmoid(v1))
    h2 = jnp.dot(bond, w2_ref[...], preferred_element_type=jnp.float32) + b2_ref[...]
    g2 = jax.nn.sigmoid(h2[:, :UNITS])
    v2 = h2[:, UNITS:]
    bond_ref[...] = bond
    msg_ref[...] = g2 * (v2 * jax.nn.sigmoid(v2))


def _block_bwd_kernel(xs_ref, xr_ref, xb_ref, w1_ref, b1_ref, w2_ref, b2_ref,
                      gb_ref, gm_ref,
                      dxs_ref, dxr_ref, dxb_ref,
                      dw1_ref, db1_ref, dw2_ref, db2_ref):
    xs = xs_ref[...]
    xr = xr_ref[...]
    xb = xb_ref[...]
    ws = w1_ref[0:UNITS, :]
    wr = w1_ref[UNITS:2 * UNITS, :]
    wb = w1_ref[2 * UNITS:3 * UNITS, :]
    w2 = w2_ref[...]
    # recompute forward activations
    h1 = (jnp.dot(xs, ws, preferred_element_type=jnp.float32)
          + jnp.dot(xr, wr, preferred_element_type=jnp.float32)
          + jnp.dot(xb, wb, preferred_element_type=jnp.float32) + b1_ref[...])
    s1 = jax.nn.sigmoid(h1[:, :UNITS])
    v1 = h1[:, UNITS:]
    sv1 = jax.nn.sigmoid(v1)
    val1 = v1 * sv1
    bond = s1 * val1
    h2 = jnp.dot(bond, w2, preferred_element_type=jnp.float32) + b2_ref[...]
    s2 = jax.nn.sigmoid(h2[:, :UNITS])
    v2 = h2[:, UNITS:]
    sv2 = jax.nn.sigmoid(v2)
    val2 = v2 * sv2
    # backward through atom_net gated epilogue
    gm = gm_ref[...]
    dh2 = jnp.concatenate(
        [gm * val2 * s2 * (1.0 - s2),
         gm * s2 * (sv2 + val2 * (1.0 - sv2))], axis=1)           # (tile, 2U)
    d_bond = gb_ref[...] + lax.dot_general(dh2, w2, _NT,
                                           preferred_element_type=jnp.float32)
    # backward through bond_net gated epilogue
    dh1 = jnp.concatenate(
        [d_bond * val1 * s1 * (1.0 - s1),
         d_bond * s1 * (sv1 + val1 * (1.0 - sv1))], axis=1)       # (tile, 2U)
    dxs_ref[...] = lax.dot_general(dh1, ws, _NT, preferred_element_type=jnp.float32)
    dxr_ref[...] = lax.dot_general(dh1, wr, _NT, preferred_element_type=jnp.float32)
    dxb_ref[...] = lax.dot_general(dh1, wb, _NT, preferred_element_type=jnp.float32)
    dw1_ref[...] = jnp.concatenate(
        [lax.dot_general(xs, dh1, _TN, preferred_element_type=jnp.float32),
         lax.dot_general(xr, dh1, _TN, preferred_element_type=jnp.float32),
         lax.dot_general(xb, dh1, _TN, preferred_element_type=jnp.float32)], axis=0)
    db1_ref[...] = jnp.sum(dh1, axis=0, keepdims=True)
    dw2_ref[...] = lax.dot_general(bond, dh2, _TN, preferred_element_type=jnp.float32)
    db2_ref[...] = jnp.sum(dh2, axis=0, keepdims=True)


def _block_forward(xs, xr, xb, w1, b1, w2, b2):
    M = xs.shape[0]
    tile = _tile_rows(M)
    U, U2, U3 = UNITS, 2 * UNITS, 3 * UNITS
    b1r = b1.reshape(1, U2)
    b2r = b2.reshape(1, U2)
    row_u = pl.BlockSpec((tile, U), lambda i: (i, 0))
    return pl.pallas_call(
        _block_fwd_kernel,
        out_shape=(jax.ShapeDtypeStruct((M, U), jnp.float32),
                   jax.ShapeDtypeStruct((M, U), jnp.float32)),
        grid=(M // tile,),
        in_specs=[row_u, row_u, row_u,
                  pl.BlockSpec((U3, U2), lambda i: (0, 0)),
                  pl.BlockSpec((1, U2), lambda i: (0, 0)),
                  pl.BlockSpec((U, U2), lambda i: (0, 0)),
                  pl.BlockSpec((1, U2), lambda i: (0, 0))],
        out_specs=(row_u, row_u),
        compiler_params=pltpu.CompilerParams(
            dimension_semantics=("parallel",)),
        cost_estimate=pl.CostEstimate(
            flops=2 * M * (U3 + U) * U2,
            transcendentals=4 * M * U2,
            bytes_accessed=4 * (5 * M * U + (U3 + U + 2) * U2)),
    )(xs, xr, xb, w1, b1r, w2, b2r)


def _block_backward(xs, xr, xb, w1, b1, w2, b2, g_bond, g_msgs):
    M = xs.shape[0]
    tile = _tile_rows(M)
    nt = M // tile
    U, U2, U3 = UNITS, 2 * UNITS, 3 * UNITS
    b1r = b1.reshape(1, U2)
    b2r = b2.reshape(1, U2)
    row_u = pl.BlockSpec((tile, U), lambda i: (i, 0))
    outs = pl.pallas_call(
        _block_bwd_kernel,
        out_shape=(jax.ShapeDtypeStruct((M, U), jnp.float32),
                   jax.ShapeDtypeStruct((M, U), jnp.float32),
                   jax.ShapeDtypeStruct((M, U), jnp.float32),
                   jax.ShapeDtypeStruct((nt, U3, U2), jnp.float32),
                   jax.ShapeDtypeStruct((nt, 1, U2), jnp.float32),
                   jax.ShapeDtypeStruct((nt, U, U2), jnp.float32),
                   jax.ShapeDtypeStruct((nt, 1, U2), jnp.float32)),
        grid=(nt,),
        in_specs=[row_u, row_u, row_u,
                  pl.BlockSpec((U3, U2), lambda i: (0, 0)),
                  pl.BlockSpec((1, U2), lambda i: (0, 0)),
                  pl.BlockSpec((U, U2), lambda i: (0, 0)),
                  pl.BlockSpec((1, U2), lambda i: (0, 0)),
                  row_u, row_u],
        out_specs=(row_u, row_u, row_u,
                   pl.BlockSpec((None, U3, U2), lambda i: (i, 0, 0)),
                   pl.BlockSpec((None, 1, U2), lambda i: (i, 0, 0)),
                   pl.BlockSpec((None, U, U2), lambda i: (i, 0, 0)),
                   pl.BlockSpec((None, 1, U2), lambda i: (i, 0, 0))),
        compiler_params=pltpu.CompilerParams(
            dimension_semantics=("parallel",)),
        cost_estimate=pl.CostEstimate(
            flops=6 * M * (U3 + U) * U2,
            transcendentals=4 * M * U2,
            bytes_accessed=4 * (8 * M * U + (nt + 1) * (U3 + U + 2) * U2)),
    )(xs, xr, xb, w1, b1r, w2, b2r, g_bond, g_msgs)
    dxs, dxr, dxb, dw1p, db1p, dw2p, db2p = outs
    return (dxs, dxr, dxb,
            jnp.sum(dw1p, axis=0), jnp.sum(db1p, axis=0).reshape(b1.shape),
            jnp.sum(dw2p, axis=0), jnp.sum(db2p, axis=0).reshape(b2.shape))


@jax.custom_vjp
def fused_block_p(xs, xr, xb, w1, b1, w2, b2):
    return _block_forward(xs, xr, xb, w1, b1, w2, b2)


def _fb_fwd(xs, xr, xb, w1, b1, w2, b2):
    return (_block_forward(xs, xr, xb, w1, b1, w2, b2),
            (xs, xr, xb, w1, b1, w2, b2))


def _fb_bwd(res, cot):
    xs, xr, xb, w1, b1, w2, b2 = res
    g_bond, g_msgs = cot
    return _block_backward(xs, xr, xb, w1, b1, w2, b2, g_bond, g_msgs)


fused_block_p.defvjp(_fb_fwd, _fb_bwd)


# ----------------------- parameter init --------------------------------------
def dense_init(key, din, dout):
    kw, kb = jax.random.split(key)
    scale = 1.0 / np.sqrt(din)
    return {'w': jax.random.uniform(kw, (din, dout), jnp.float32, -scale, scale),
            'b': jax.random.uniform(kb, (dout,), jnp.float32, -scale, scale)}


def gated_init(key, din, dout):
    k1, k2 = jax.random.split(key)
    pg = dense_init(k1, din, dout)
    pv = dense_init(k2, din, dout)
    # store [wg | wv] concatenated so the gated MLP is a single matmul
    return {'w': jnp.concatenate([pg['w'], pv['w']], axis=1),
            'b': jnp.concatenate([pg['b'], pv['b']], axis=0)}


def init_params(key):
    n_keys = 3 + 4 * N_BLOCKS
    keys = jax.random.split(key, n_keys)
    i = 0
    params = {}
    params['embedding'] = 0.1 * jax.random.normal(
        keys[i], (N_ATOM_TYPES, UNITS), jnp.float32); i += 1
    params['bond_proj'] = dense_init(keys[i], MAX_N, UNITS); i += 1
    params['readout'] = dense_init(keys[i], UNITS, 1); i += 1
    blocks = []
    for _ in range(N_BLOCKS):
        blocks.append({
            'three_update': dense_init(keys[i], UNITS, RBF_DIM),
            'three_fusion': gated_init(keys[i + 1], RBF_DIM, UNITS),
            'bond_net': gated_init(keys[i + 2], 3 * UNITS, UNITS),
            'atom_net': gated_init(keys[i + 3], UNITS, UNITS),
        })
        i += 4
    params['blocks'] = blocks
    return params


# ----------------------- basis functions -------------------------------------
def spherical_bessel_rbf(r, cutoff, max_n):
    # j0-style radial basis: sqrt(2/c) * sin(n*pi*r/c) / r, n = 1..max_n
    n = jnp.arange(1, max_n + 1, dtype=jnp.float32)
    r = r.reshape(-1, 1)
    return (jnp.sqrt(2.0 / cutoff) * jnp.sin(n * jnp.pi * r / cutoff)
            / jnp.maximum(r, 1e-8))


def three_body_basis(triple_len, cos_theta):
    radial = spherical_bessel_rbf(triple_len, TB_CUTOFF, MAX_N)             # (T, MAX_N)
    angular = jnp.stack([cos_theta ** i for i in range(SHF_DIM)], axis=-1)  # (T, SHF_DIM)
    return (radial[:, :, None] * angular[:, None, :]).reshape(-1, RBF_DIM)


# ----------------------- graph preparation (pad once) ------------------------
def prepare_graph(graph, n_atoms):
    bond_idx = np.asarray(graph['bond_idx'])
    triple_idx = np.asarray(graph['triple_idx'])
    A, E, T = int(n_atoms), bond_idx.shape[0], triple_idx.shape[0]
    A_pad, E_pad, T_pad = _padded_count(A), _padded_count(E), _padded_count(T)

    sender = bond_idx[:, 0].astype(np.int32)
    receiver = bond_idx[:, 1].astype(np.int32)
    b1 = triple_idx[:, 0].astype(np.int32)
    b2 = triple_idx[:, 1].astype(np.int32)
    end_atom = receiver[b2]

    def pad_idx(a, n_pad, fill):
        out = np.full((n_pad,), fill, dtype=np.int32)
        out[:a.shape[0]] = a
        return jnp.asarray(out)

    return dict(
        A=A, E=E, T=T, A_pad=A_pad, E_pad=E_pad, T_pad=T_pad,
        n_graphs=int(graph['n_graphs']),
        sender=jnp.asarray(sender),
        receiver=jnp.asarray(receiver),
        b1=jnp.asarray(b1),
        b2=jnp.asarray(b2),
        # gathers: padded rows read index 0 (their contribution is masked/zero)
        sender_gather=pad_idx(sender, E_pad, 0),
        receiver_gather=pad_idx(receiver, E_pad, 0),
        end_atom_gather=pad_idx(end_atom, T_pad, 0),
        # scatters: padded rows go to a dummy segment / contribute zero
        receiver_scatter=pad_idx(receiver, E_pad, A_pad),
        b1_scatter=pad_idx(b1, T_pad, 0),
        batch_atom_scatter=pad_idx(np.asarray(graph['batch_atom']).astype(np.int32),
                                   A_pad, int(graph['n_graphs'])),
        atom_types_pad=pad_idx(np.asarray(graph['atom_types']).astype(np.int32),
                               A_pad, 0),
        triple_mask=jnp.asarray(
            (np.arange(T_pad) < T).astype(np.float32).reshape(-1, 1)),
        bond_graph_idx=jnp.asarray(
            np.asarray(graph['bond_graph_idx']).astype(np.int32)),
        pbc_offsets=jnp.asarray(graph['pbc_offsets'], dtype=jnp.float32),
    )


# ----------------------- M3GNet forward (energy head) ------------------------
def m3gnet_forward(params, prep, bond_len, cos_theta, triple_len):
    A_pad, E_pad = prep['A_pad'], prep['E_pad']

    atom_feat = params['embedding'][prep['atom_types_pad']]                 # (A_pad, U)
    rbf = spherical_bessel_rbf(bond_len[:, 0], CUTOFF, MAX_N)               # (E_pad, MAX_N)
    bond_feat = dense_swish(rbf, params['bond_proj']['w'],
                            params['bond_proj']['b'])                       # (E_pad, U)
    # padded triple rows are zeroed so they contribute nothing to segment 0
    basis = three_body_basis(triple_len, cos_theta) * prep['triple_mask']   # (T_pad, RBF)

    for blk in params['blocks']:
        # ---- ThreeDInteraction ----
        atom_msg = dense_swish(atom_feat, blk['three_update']['w'],
                               blk['three_update']['b'])                    # (A_pad, RBF)
        # TODO(synk): fuse this gather * basis * segment_sum into a Pallas
        # kernel with PrefetchScalarGridSpec (sorted triples) — left in XLA.
        triple_w = atom_msg[prep['end_atom_gather']] * basis                # (T_pad, RBF)
        bond_agg = jax.ops.segment_sum(triple_w, prep['b1_scatter'],
                                       num_segments=E_pad)                  # (E_pad, RBF)
        bond_feat = gated_mlp_res_p(bond_agg, blk['three_fusion']['w'],
                                    blk['three_fusion']['b'], bond_feat)
        # ---- GraphNetworkLayer: fused bond update + atom messages ----
        xs = atom_feat[prep['sender_gather']]                               # (E_pad, U)
        xr = atom_feat[prep['receiver_gather']]                             # (E_pad, U)
        bond_feat, msgs = fused_block_p(xs, xr, bond_feat,
                                        blk['bond_net']['w'], blk['bond_net']['b'],
                                        blk['atom_net']['w'], blk['atom_net']['b'])
        atom_upd = jax.ops.segment_sum(msgs, prep['receiver_scatter'],
                                       num_segments=A_pad + 1)[:A_pad]      # dummy seg
        atom_feat = atom_feat + atom_upd

    # readout MLP([units, 1]): N=1 output -> plain XLA reduction (no kernel)
    per_atom = atom_feat @ params['readout']['w'] + params['readout']['b']  # (A_pad, 1)
    total = jax.ops.segment_sum(per_atom, prep['batch_atom_scatter'],
                                num_segments=prep['n_graphs'] + 1)[:prep['n_graphs']]
    return total * STD + MEAN


# ----------------------- Potential forward -----------------------------------
def potential_forward(params, graph, positions, lattices,
                      compute_forces=True, compute_stress=True):
    prep = prepare_graph(graph, positions.shape[0])
    sender, receiver = prep['sender'], prep['receiver']
    b1, b2 = prep['b1'], prep['b2']
    E, T = prep['E'], prep['T']
    E_pad, T_pad = prep['E_pad'], prep['T_pad']

    def energy_fn(pos, lat):
        vec = pos[receiver] - pos[sender]                                   # (E, 3)
        rep_lat = lat[prep['bond_graph_idx']]                               # (E, 3, 3)
        vec = vec + jnp.einsum('bi,bij->bj', prep['pbc_offsets'], rep_lat)
        bond_len = jnp.linalg.norm(vec, axis=1, keepdims=True)              # (E, 1)
        v1 = vec[b1]
        v2 = vec[b2]
        triple_len = jnp.linalg.norm(v2, axis=1)
        denom = jnp.linalg.norm(v1, axis=1) * triple_len
        cos = jnp.sum(v1 * v2, axis=1) / jnp.maximum(denom, 1e-8)
        cos = jnp.clip(cos, -1.0, 1.0)
        # pad once; padded rows are masked / routed to dummy segments later
        bond_len_p = jnp.pad(bond_len, ((0, E_pad - E), (0, 0)),
                             constant_values=1.0)
        cos_p = jnp.pad(cos, (0, T_pad - T))
        triple_len_p = jnp.pad(triple_len, (0, T_pad - T), constant_values=1.0)
        e = m3gnet_forward(params, prep, bond_len_p, cos_p, triple_len_p)
        return e.sum(), e

    (_, total_energy), (g_pos, g_lat) = jax.value_and_grad(
        energy_fn, argnums=(0, 1), has_aux=True)(positions, lattices)

    forces = -g_pos if compute_forces else None
    if compute_stress:
        volume = jnp.linalg.det(lattices).reshape(-1, 1, 1)
        stress = g_lat / volume          # matches the reference Potential.forward
    else:
        stress = None

    if np.asarray(graph['n_atoms_per_graph']).shape[0] == 1:
        return (total_energy.squeeze(0), forces,
                stress.squeeze(0) if stress is not None else None)
    return total_energy, forces, stress


# ----------------------- main -------------------------------------------------
if __name__ == "__main__":
    key = jax.random.PRNGKey(0)
    k_param, k_pos, k_lat, k_type, k_off = jax.random.split(key, 5)

    params = init_params(k_param)

    n_graphs = 2
    atoms_per_graph = 4
    n_atoms = n_graphs * atoms_per_graph

    # graph connectivity (static numpy)
    bond_list = []
    for g in range(n_graphs):
        base = g * atoms_per_graph
        for i in range(atoms_per_graph):
            for j in range(atoms_per_graph):
                if i != j:
                    bond_list.append((base + i, base + j))
    bond_idx = np.array(bond_list, dtype=np.int32)                          # (24, 2)
    n_bonds = bond_idx.shape[0]
    bonds_per_graph = n_bonds // n_graphs

    triple_list = []
    for bi, (si, _) in enumerate(bond_list):
        for bj, (sj, _) in enumerate(bond_list):
            if bi != bj and si == sj:
                triple_list.append((bi, bj))
    triple_idx = np.array(triple_list, dtype=np.int32)                      # (48, 2)

    graph = {
        'atom_types': np.array(
            jax.random.randint(k_type, (n_atoms,), 1, N_ATOM_TYPES), dtype=np.int32),
        'bond_idx': bond_idx,
        'triple_idx': triple_idx,
        'bond_graph_idx': np.repeat(np.arange(n_graphs), bonds_per_graph).astype(np.int32),
        'batch_atom': np.repeat(np.arange(n_graphs), atoms_per_graph).astype(np.int32),
        'n_atoms_per_graph': np.full((n_graphs,), atoms_per_graph, dtype=np.int32),
        'n_graphs': n_graphs,
        'pbc_offsets': jnp.asarray(
            jax.random.randint(k_off, (n_bonds, 3), -1, 2), dtype=jnp.float32),
    }

    positions = jax.random.uniform(k_pos, (n_atoms, 3), jnp.float32, 0.0, 2.0)
    positions = positions + (
        np.repeat(np.arange(n_graphs), atoms_per_graph)[:, None].astype(np.float32) * 10.0)
    lattices = (jnp.eye(3, dtype=jnp.float32)[None] * 5.0
                + 0.1 * jax.random.normal(k_lat, (n_graphs, 3, 3), jnp.float32))

    pot = jax.jit(lambda p, pos, lat: potential_forward(p, graph, pos, lat))
    energy, forces, stress = pot(params, positions, lattices)

    jax.block_until_ready((energy, forces, stress))
    assert energy.shape == (n_graphs, 1)
    assert forces.shape == (n_atoms, 3)
    assert stress.shape == (n_graphs, 3, 3)
    assert bool(jnp.all(jnp.isfinite(energy)))
    assert bool(jnp.all(jnp.isfinite(forces)))
    assert bool(jnp.all(jnp.isfinite(stress)))
    print("KERNEL_OK")
</pallas_src>

<mosaic_0001>
module attributes {stable_mosaic.version = 11 : i64} {
  func.func @_dense_fwd_kernel(%arg0: i32, %arg1: memref<8x16xf32, #tpu.memory_space<vmem>>, %arg2: memref<16x48xf32, #tpu.memory_space<vmem>>, %arg3: memref<1x48xf32, #tpu.memory_space<vmem>>, %arg4: memref<8x48xf32, #tpu.memory_space<vmem>>) attributes {dimension_semantics = [#tpu.dimension_semantics<parallel>], iteration_bounds = array<i64: 1>, scalar_prefetch = 0 : i64, scratch_operands = 0 : i64, tpu.core_type = #tpu.core_type<tc>, window_params = [{transform_indices = @transform_0, window_bounds = array<i64: 8, 16>}, {pipeline_mode = #tpu.pipeline_mode<synchronous>, transform_indices = @transform_1, window_bounds = array<i64: 16, 48>}, {pipeline_mode = #tpu.pipeline_mode<synchronous>, transform_indices = @transform_2, window_bounds = array<i64: 1, 48>}, {transform_indices = @transform_3, window_bounds = array<i64: 8, 48>}]} {
    %c0 = arith.constant 0 : index
    %c0_0 = arith.constant 0 : index
    %0 = vector.load %arg1[%c0, %c0_0] : memref<8x16xf32, #tpu.memory_space<vmem>>, vector<8x16xf32>
    %c0_1 = arith.constant 0 : index
    %c0_2 = arith.constant 0 : index
    %1 = vector.load %arg2[%c0_1, %c0_2] : memref<16x48xf32, #tpu.memory_space<vmem>>, vector<16x48xf32>
    %cst = arith.constant dense<0.000000e+00> : vector<8x48xf32>
    %2 = tpu.matmul %0, %1, %cst {dimension_numbers = #tpu.dot_dimension_numbers<[1], [0], [0], [1], [0, 0, 1, 1], [], []>} : vector<8x16xf32>, vector<16x48xf32>, vector<8x48xf32> -> vector<8x48xf32>
    %c0_3 = arith.constant 0 : index
    %c0_4 = arith.constant 0 : index
    %3 = vector.load %arg3[%c0_3, %c0_4] : memref<1x48xf32, #tpu.memory_space<vmem>>, vector<1x48xf32>
    %4 = vector.broadcast %3 : vector<1x48xf32> to vector<8x48xf32>
    %5 = arith.addf %2, %4 : vector<8x48xf32>
    %6 = arith.negf %5 : vector<8x48xf32>
    %7 = math.exp %6 : vector<8x48xf32>
    %cst_5 = arith.constant 1.000000e+00 : f32
    %8 = vector.broadcast %cst_5 : f32 to vector<8x48xf32>
    %9 = arith.addf %8, %7 : vector<8x48xf32>
    %10 = arith.divf %8, %9 : vector<8x48xf32>
    %11 = arith.mulf %5, %10 : vector<8x48xf32>
    %c0_6 = arith.constant 0 : index
    %c0_7 = arith.constant 0 : index
    %12 = vector.load %arg4[%c0_6, %c0_7] : memref<8x48xf32, #tpu.memory_space<vmem>>, vector<8x48xf32>
    tpu.vector_store %arg4[%c0_6, %c0_7], %11 {strides = array<i32>} : memref<8x48xf32, #tpu.memory_space<vmem>>, vector<8x48xf32>,
    return
  }
  func.func @transform_0(%arg0: i32) -> (i32, i32) {
    %c0_i32 = arith.constant 0 : i32
    %c0_i32_0 = arith.constant 0 : i32
    return %arg0, %c0_i32 : i32, i32
  }
  func.func @transform_1(%arg0: i32) -> (i32, i32) {
    %c0_i32 = arith.constant 0 : i32
    %c0_i32_0 = arith.constant 0 : i32
    %c0_i32_1 = arith.constant 0 : i32
    return %c0_i32, %c0_i32_0 : i32, i32
  }
  func.func @transform_2(%arg0: i32) -> (i32, i32) {
    %c0_i32 = arith.constant 0 : i32
    %c0_i32_0 = arith.constant 0 : i32
    %c0_i32_1 = arith.constant 0 : i32
    return %c0_i32, %c0_i32_0 : i32, i32
  }
  func.func @transform_3(%arg0: i32) -> (i32, i32) {
    %c0_i32 = arith.constant 0 : i32
    %c0_i32_0 = arith.constant 0 : i32
    return %arg0, %c0_i32 : i32, i32
  }
}

module attributes {stable_mosaic.version = 11 : i64} {
  func.func @_dense_fwd_kernel(%arg0: i32, %arg1: memref<24x3xf32, #tpu.memory_space<vmem>>, %arg2: memref<3x16xf32, #tpu.memory_space<vmem>>, %arg3: memref<1x16xf32, #tpu.memory_space<vmem>>, %arg4: memref<24x16xf32, #tpu.memory_space<vmem>>) attributes {dimension_semantics = [#tpu.dimension_semantics<parallel>], iteration_bounds = array<i64: 1>, scalar_prefetch = 0 : i64, scratch_operands = 0 : i64, tpu.core_type = #tpu.core_type<tc>, window_params = [{transform_indices = @transform_0, window_bounds = array<i64: 24, 3>}, {pipeline_mode = #tpu.pipeline_mode<synchronous>, transform_indices = @transform_1, window_bounds = array<i64: 3, 16>}, {pipeline_mode = #tpu.pipeline_mode<synchronous>, transform_indices = @transform_2, window_bounds = array<i64: 1, 16>}, {transform_indices = @transform_3, window_bounds = array<i64: 24, 16>}]} {
    %c0 = arith.constant 0 : index
    %c0_0 = arith.constant 0 : index
    %0 = vector.load %arg1[%c0, %c0_0] : memref<24x3xf32, #tpu.memory_space<vmem>>, vector<24x3xf32>
    %c0_1 = arith.constant 0 : index
    %c0_2 = arith.constant 0 : index
    %1 = vector.load %arg2[%c0_1, %c0_2] : memref<3x16xf32, #tpu.memory_space<vmem>>, vector<3x16xf32>
    %cst = arith.constant dense<0.000000e+00> : vector<24x16xf32>
    %2 = tpu.matmul %0, %1, %cst {dimension_numbers = #tpu.dot_dimension_numbers<[1], [0], [0], [1], [0, 0, 1, 1], [], []>} : vector<24x3xf32>, vector<3x16xf32>, vector<24x16xf32> -> vector<24x16xf32>
    %c0_3 = arith.constant 0 : index
    %c0_4 = arith.constant 0 : index
    %3 = vector.load %arg3[%c0_3, %c0_4] : memref<1x16xf32, #tpu.memory_space<vmem>>, vector<1x16xf32>
    %4 = vector.broadcast %3 : vector<1x16xf32> to vector<24x16xf32>
    %5 = arith.addf %2, %4 : vector<24x16xf32>
    %6 = arith.negf %5 : vector<24x16xf32>
    %7 = math.exp %6 : vector<24x16xf32>
    %cst_5 = arith.constant 1.000000e+00 : f32
    %8 = vector.broadcast %cst_5 : f32 to vector<24x16xf32>
    %9 = arith.addf %8, %7 : vector<24x16xf32>
    %10 = arith.divf %8, %9 : vector<24x16xf32>
    %11 = arith.mulf %5, %10 : vector<24x16xf32>
    %c0_6 = arith.constant 0 : index
    %c0_7 = arith.constant 0 : index
    %12 = vector.load %arg4[%c0_6, %c0_7] : memref<24x16xf32, #tpu.memory_space<vmem>>, vector<24x16xf32>
    tpu.vector_store %arg4[%c0_6, %c0_7], %11 {strides = array<i32>} : memref<24x16xf32, #tpu.memory_space<vmem>>, vector<24x16xf32>,
    return
  }
  func.func @transform_0(%arg0: i32) -> (i32, i32) {
    %c0_i32 = arith.constant 0 : i32
    %c0_i32_0 = arith.constant 0 : i32
    return %arg0, %c0_i32 : i32, i32
  }
  func.func @transform_1(%arg0: i32) -> (i32, i32) {
    %c0_i32 = arith.constant 0 : i32
    %c0_i32_0 = arith.constant 0 : i32
    %c0_i32_1 = arith.constant 0 : i32
    return %c0_i32, %c0_i32_0 : i32, i32
  }
  func.func @transform_2(%arg0: i32) -> (i32, i32) {
    %c0_i32 = arith.constant 0 : i32
    %c0_i32_0 = arith.constant 0 : i32
    %c0_i32_1 = arith.constant 0 : i32
    return %c0_i32, %c0_i32_0 : i32, i32
  }
  func.func @transform_3(%arg0: i32) -> (i32, i32) {
    %c0_i32 = arith.constant 0 : i32
    %c0_i32_0 = arith.constant 0 : i32
    return %arg0, %c0_i32 : i32, i32
  }
}

module attributes {stable_mosaic.version = 11 : i64} {
  func.func @_gated_res_fwd_kernel(%arg0: i32, %arg1: memref<24x48xf32, #tpu.memory_space<vmem>>, %arg2: memref<48x32xf32, #tpu.memory_space<vmem>>, %arg3: memref<1x32xf32, #tpu.memory_space<vmem>>, %arg4: memref<24x16xf32, #tpu.memory_space<vmem>>, %arg5: memref<24x16xf32, #tpu.memory_space<vmem>>) attributes {dimension_semantics = [#tpu.dimension_semantics<parallel>], iteration_bounds = array<i64: 1>, scalar_prefetch = 0 : i64, scratch_operands = 0 : i64, tpu.core_type = #tpu.core_type<tc>, window_params = [{transform_indices = @transform_0, window_bounds = array<i64: 24, 48>}, {pipeline_mode = #tpu.pipeline_mode<synchronous>, transform_indices = @transform_1, window_bounds = array<i64: 48, 32>}, {pipeline_mode = #tpu.pipeline_mode<synchronous>, transform_indices = @transform_2, window_bounds = array<i64: 1, 32>}, {transform_indices = @transform_3, window_bounds = array<i64: 24, 16>}, {transform_indices = @transform_4, window_bounds = array<i64: 24, 16>}]} {
    %c0 = arith.constant 0 : index
    %c0_0 = arith.constant 0 : index
    %0 = vector.load %arg1[%c0, %c0_0] : memref<24x48xf32, #tpu.memory_space<vmem>>, vector<24x48xf32>
    %c0_1 = arith.constant 0 : index
    %c0_2 = arith.constant 0 : index
    %1 = vector.load %arg2[%c0_1, %c0_2] : memref<48x32xf32, #tpu.memory_space<vmem>>, vector<48x32xf32>
    %cst = arith.constant dense<0.000000e+00> : vector<24x32xf32>
    %2 = tpu.matmul %0, %1, %cst {dimension_numbers = #tpu.dot_dimension_numbers<[1], [0], [0], [1], [0, 0, 1, 1], [], []>} : vector<24x48xf32>, vector<48x32xf32>, vector<24x32xf32> -> vector<24x32xf32>
    %c0_3 = arith.constant 0 : index
    %c0_4 = arith.constant 0 : index
    %3 = vector.load %arg3[%c0_3, %c0_4] : memref<1x32xf32, #tpu.memory_space<vmem>>, vector<1x32xf32>
    %4 = vector.broadcast %3 : vector<1x32xf32> to vector<24x32xf32>
    %5 = arith.addf %2, %4 : vector<24x32xf32>
    %6 = vector.extract_strided_slice %5 {offsets = [0, 0], sizes = [24, 16], strides = [1, 1]} : vector<24x32xf32> to vector<24x16xf32>
    %7 = arith.negf %6 : vector<24x16xf32>
    %8 = math.exp %7 : vector<24x16xf32>
    %cst_5 = arith.constant 1.000000e+00 : f32
    %9 = vector.broadcast %cst_5 : f32 to vector<24x16xf32>
    %10 = arith.addf %9, %8 : vector<24x16xf32>
    %11 = arith.divf %9, %10 : vector<24x16xf32>
    %12 = vector.extract_strided_slice %5 {offsets = [0, 16], sizes = [24, 16], strides = [1, 1]} : vector<24x32xf32> to vector<24x16xf32>
    %13 = arith.negf %12 : vector<24x16xf32>
    %14 = math.exp %13 : vector<24x16xf32>
    %cst_6 = arith.constant 1.000000e+00 : f32
    %15 = vector.broadcast %cst_6 : f32 to vector<24x16xf32>
    %16 = arith.addf %15, %14 : vector<24x16xf32>
    %17 = arith.divf %15, %16 : vector<24x16xf32>
    %18 = arith.mulf %12, %17 : vector<24x16xf32>
    %19 = arith.mulf %11, %18 : vector<24x16xf32>
    %c0_7 = arith.constant 0 : index
    %c0_8 = arith.constant 0 : index
    %20 = vector.load %arg4[%c0_7, %c0_8] : memref<24x16xf32, #tpu.memory_space<vmem>>, vector<24x16xf32>
    %21 = arith.addf %19, %20 : vector<24x16xf32>
    %c0_9 = arith.constant 0 : index
    %c0_10 = arith.constant 0 : index
    %22 = vector.load %arg5[%c0_9, %c0_10] : memref<24x16xf32, #tpu.memory_space<vmem>>, vector<24x16xf32>
    tpu.vector_store %arg5[%c0_9, %c0_10], %21 {strides = array<i32>} : memref<24x16xf32, #tpu.memory_space<vmem>>, vector<24x16xf32>,
    return
  }
  func.func @transform_0(%arg0: i32) -> (i32, i32) {
    %c0_i32 = arith.constant 0 : i32
    %c0_i32_0 = arith.constant 0 : i32
    return %arg0, %c0_i32 : i32, i32
  }
  func.func @transform_1(%arg0: i32) -> (i32, i32) {
    %c0_i32 = arith.constant 0 : i32
    %c0_i32_0 = arith.constant 0 : i32
    %c0_i32_1 = arith.constant 0 : i32
    return %c0_i32, %c0_i32_0 : i32, i32
  }
  func.func @transform_2(%arg0: i32) -> (i32, i32) {
    %c0_i32 = arith.constant 0 : i32
    %c0_i32_0 = arith.constant 0 : i32
    %c0_i32_1 = arith.constant 0 : i32
    return %c0_i32, %c0_i32_0 : i32, i32
  }
  func.func @transform_3(%arg0: i32) -> (i32, i32) {
    %c0_i32 = arith.constant 0 : i32
    %c0_i32_0 = arith.constant 0 : i32
    return %arg0, %c0_i32 : i32, i32
  }
  func.func @transform_4(%arg0: i32) -> (i32, i32) {
    %c0_i32 = arith.constant 0 : i32
    %c0_i32_0 = arith.constant 0 : i32
    return %arg0, %c0_i32 : i32, i32
  }
}

module attributes {stable_mosaic.version = 11 : i64} {
  func.func @_block_fwd_kernel(%arg0: i32, %arg1: memref<24x16xf32, #tpu.memory_space<vmem>>, %arg2: memref<24x16xf32, #tpu.memory_space<vmem>>, %arg3: memref<24x16xf32, #tpu.memory_space<vmem>>, %arg4: memref<48x32xf32, #tpu.memory_space<vmem>>, %arg5: memref<1x32xf32, #tpu.memory_space<vmem>>, %arg6: memref<16x32xf32, #tpu.memory_space<vmem>>, %arg7: memref<1x32xf32, #tpu.memory_space<vmem>>, %arg8: memref<24x16xf32, #tpu.memory_space<vmem>>, %arg9: memref<24x16xf32, #tpu.memory_space<vmem>>) attributes {dimension_semantics = [#tpu.dimension_semantics<parallel>], iteration_bounds = array<i64: 1>, scalar_prefetch = 0 : i64, scratch_operands = 0 : i64, tpu.core_type = #tpu.core_type<tc>, window_params = [{transform_indices = @transform_0, window_bounds = array<i64: 24, 16>}, {transform_indices = @transform_1, window_bounds = array<i64: 24, 16>}, {transform_indices = @transform_2, window_bounds = array<i64: 24, 16>}, {pipeline_mode = #tpu.pipeline_mode<synchronous>, transform_indices = @transform_3, window_bounds = array<i64: 48, 32>}, {pipeline_mode = #tpu.pipeline_mode<synchronous>, transform_indices = @transform_4, window_bounds = array<i64: 1, 32>}, {pipeline_mode = #tpu.pipeline_mode<synchronous>, transform_indices = @transform_5, window_bounds = array<i64: 16, 32>}, {pipeline_mode = #tpu.pipeline_mode<synchronous>, transform_indices = @transform_6, window_bounds = array<i64: 1, 32>}, {transform_indices = @transform_7, window_bounds = array<i64: 24, 16>}, {transform_indices = @transform_8, window_bounds = array<i64: 24, 16>}]} {
    %c0 = arith.constant 0 : index
    %c0_0 = arith.constant 0 : index
    %0 = vector.load %arg1[%c0, %c0_0] : memref<24x16xf32, #tpu.memory_space<vmem>>, vector<24x16xf32>
    %c0_1 = arith.constant 0 : index
    %c0_2 = arith.constant 0 : index
    %1 = vector.load %arg4[%c0_1, %c0_2] : memref<48x32xf32, #tpu.memory_space<vmem>>, vector<16x32xf32>
    %cst = arith.constant dense<0.000000e+00> : vector<24x32xf32>
    %2 = tpu.matmul %0, %1, %cst {dimension_numbers = #tpu.dot_dimension_numbers<[1], [0], [0], [1], [0, 0, 1, 1], [], []>} : vector<24x16xf32>, vector<16x32xf32>, vector<24x32xf32> -> vector<24x32xf32>
    %c0_3 = arith.constant 0 : index
    %c0_4 = arith.constant 0 : index
    %3 = vector.load %arg2[%c0_3, %c0_4] : memref<24x16xf32, #tpu.memory_space<vmem>>, vector<24x16xf32>
    %c16 = arith.constant 16 : index
    %c0_5 = arith.constant 0 : index
    %4 = vector.load %arg4[%c16, %c0_5] : memref<48x32xf32, #tpu.memory_space<vmem>>, vector<16x32xf32>
    %cst_6 = arith.constant dense<0.000000e+00> : vector<24x32xf32>
    %5 = tpu.matmul %3, %4, %cst_6 {dimension_numbers = #tpu.dot_dimension_numbers<[1], [0], [0], [1], [0, 0, 1, 1], [], []>} : vector<24x16xf32>, vector<16x32xf32>, vector<24x32xf32> -> vector<24x32xf32>
    %6 = arith.addf %2, %5 : vector<24x32xf32>
    %c0_7 = arith.constant 0 : index
    %c0_8 = arith.constant 0 : index
    %7 = vector.load %arg3[%c0_7, %c0_8] : memref<24x16xf32, #tpu.memory_space<vmem>>, vector<24x16xf32>
    %c32 = arith.constant 32 : index
    %c0_9 = arith.constant 0 : index
    %8 = vector.load %arg4[%c32, %c0_9] : memref<48x32xf32, #tpu.memory_space<vmem>>, vector<16x32xf32>
    %cst_10 = arith.constant dense<0.000000e+00> : vector<24x32xf32>
    %9 = tpu.matmul %7, %8, %cst_10 {dimension_numbers = #tpu.dot_dimension_numbers<[1], [0], [0], [1], [0, 0, 1, 1], [], []>} : vector<24x16xf32>, vector<16x32xf32>, vector<24x32xf32> -> vector<24x32xf32>
    %10 = arith.addf %6, %9 : vector<24x32xf32>
    %c0_11 = arith.constant 0 : index
    %c0_12 = arith.constant 0 : index
    %11 = vector.load %arg5[%c0_11, %c0_12] : memref<1x32xf32, #tpu.memory_space<vmem>>, vector<1x32xf32>
    %12 = vector.broadcast %11 : vector<1x32xf32> to vector<24x32xf32>
    %13 = arith.addf %10, %12 : vector<24x32xf32>
    %14 = vector.extract_strided_slice %13 {offsets = [0, 0], sizes = [24, 16], strides = [1, 1]} : vector<24x32xf32> to vector<24x16xf32>
    %15 = arith.negf %14 : vector<24x16xf32>
    %16 = math.exp %15 : vector<24x16xf32>
    %cst_13 = arith.constant 1.000000e+00 : f32
    %17 = vector.broadcast %cst_13 : f32 to vector<24x16xf32>
    %18 = arith.addf %17, %16 : vector<24x16xf32>
    %19 = arith.divf %17, %18 : vector<24x16xf32>
    %20 = vector.extract_strided_slice %13 {offsets = [0, 16], sizes = [24, 16], strides = [1, 1]} : vector<24x32xf32> to vector<24x16xf32>
    %21 = arith.negf %20 : vector<24x16xf32>
    %22 = math.exp %21 : vector<24x16xf32>
    %cst_14 = arith.constant 1.000000e+00 : f32
    %23 = vector.broadcast %cst_14 : f32 to vector<24x16xf32>
    %24 = arith.addf %23, %22 : vector<24x16xf32>
    %25 = arith.divf %23, %24 : vector<24x16xf32>
    %26 = arith.mulf %20, %25 : vector<24x16xf32>
    %27 = arith.mulf %19, %26 : vector<24x16xf32>
    %c0_15 = arith.constant 0 : index
    %c0_16 = arith.constant 0 : index
    %28 = vector.load %arg6[%c0_15, %c0_16] : memref<16x32xf32, #tpu.memory_space<vmem>>, vector<16x32xf32>
    %cst_17 = arith.constant dense<0.000000e+00> : vector<24x32xf32>
    %29 = tpu.matmul %27, %28, %cst_17 {dimension_numbers = #tpu.dot_dimension_numbers<[1], [0], [0], [1], [0, 0, 1, 1], [], []>} : vector<24x16xf32>, vector<16x32xf32>, vector<24x32xf32> -> vector<24x32xf32>
    %c0_18 = arith.constant 0 : index
    %c0_19 = arith.constant 0 : index
    %30 = vector.load %arg7[%c0_18, %c0_19] : memref<1x32xf32, #tpu.memory_space<vmem>>, vector<1x32xf32>
    %31 = vector.broadcast %30 : vector<1x32xf32> to vector<24x32xf32>
    %32 = arith.addf %29, %31 : vector<24x32xf32>
    %33 = vector.extract_strided_slice %32 {offsets = [0, 0], sizes = [24, 16], strides = [1, 1]} : vector<24x32xf32> to vector<24x16xf32>
    %34 = arith.negf %33 : vector<24x16xf32>
    %35 = math.exp %34 : vector<24x16xf32>
    %cst_20 = arith.constant 1.000000e+00 : f32
    %36 = vector.broadcast %cst_20 : f32 to vector<24x16xf32>
    %37 = arith.addf %36, %35 : vector<24x16xf32>
    %38 = arith.divf %36, %37 : vector<24x16xf32>
    %39 = vector.extract_strided_slice %32 {offsets = [0, 16], sizes = [24, 16], strides = [1, 1]} : vector<24x32xf32> to vector<24x16xf32>
    %c0_21 = arith.constant 0 : index
    %c0_22 = arith.constant 0 : index
    %40 = vector.load %arg8[%c0_21, %c0_22] : memref<24x16xf32, #tpu.memory_space<vmem>>, vector<24x16xf32>
    tpu.vector_store %arg8[%c0_21, %c0_22], %27 {strides = array<i32>} : memref<24x16xf32, #tpu.memory_space<vmem>>, vector<24x16xf32>,
    %41 = arith.negf %39 : vector<24x16xf32>
    %42 = math.exp %41 : vector<24x16xf32>
    %cst_23 = arith.constant 1.000000e+00 : f32
    %43 = vector.broadcast %cst_23 : f32 to vector<24x16xf32>
    %44 = arith.addf %43, %42 : vector<24x16xf32>
    %45 = arith.divf %43, %44 : vector<24x16xf32>
    %46 = arith.mulf %39, %45 : vector<24x16xf32>
    %47 = arith.mulf %38, %46 : vector<24x16xf32>
    %c0_24 = arith.constant 0 : index
    %c0_25 = arith.constant 0 : index
    %48 = vector.load %arg9[%c0_24, %c0_25] : memref<24x16xf32, #tpu.memory_space<vmem>>, vector<24x16xf32>
    tpu.vector_store %arg9[%c0_24, %c0_25], %47 {strides = array<i32>} : memref<24x16xf32, #tpu.memory_space<vmem>>, vector<24x16xf32>,
    return
  }
  func.func @transform_0(%arg0: i32) -> (i32, i32) {
    %c0_i32 = arith.constant 0 : i32
    %c0_i32_0 = arith.constant 0 : i32
    return %arg0, %c0_i32 : i32, i32
  }
  func.func @transform_1(%arg0: i32) -> (i32, i32) {
    %c0_i32 = arith.constant 0 : i32
    %c0_i32_0 = arith.constant 0 : i32
    return %arg0, %c0_i32 : i32, i32
  }
  func.func @transform_2(%arg0: i32) -> (i32, i32) {
    %c0_i32 = arith.constant 0 : i32
    %c0_i32_0 = arith.constant 0 : i32
    return %arg0, %c0_i32 : i32, i32
  }
  func.func @transform_3(%arg0: i32) -> (i32, i32) {
    %c0_i32 = arith.constant 0 : i32
    %c0_i32_0 = arith.constant 0 : i32
    %c0_i32_1 = arith.constant 0 : i32
    return %c0_i32, %c0_i32_0 : i32, i32
  }
  func.func @transform_4(%arg0: i32) -> (i32, i32) {
    %c0_i32 = arith.constant 0 : i32
    %c0_i32_0 = arith.constant 0 : i32
    %c0_i32_1 = arith.constant 0 : i32
    return %c0_i32, %c0_i32_0 : i32, i32
  }
  func.func @transform_5(%arg0: i32) -> (i32, i32) {
    %c0_i32 = arith.constant 0 : i32
    %c0_i32_0 = arith.constant 0 : i32
    %c0_i32_1 = arith.constant 0 : i32
    return %c0_i32, %c0_i32_0 : i32, i32
  }
  func.func @transform_6(%arg0: i32) -> (i32, i32) {
    %c0_i32 = arith.constant 0 : i32
    %c0_i32_0 = arith.constant 0 : i32
    %c0_i32_1 = arith.constant 0 : i32
    return %c0_i32, %c0_i32_0 : i32, i32
  }
  func.func @transform_7(%arg0: i32) -> (i32, i32) {
    %c0_i32 = arith.constant 0 : i32
    %c0_i32_0 = arith.constant 0 : i32
    return %arg0, %c0_i32 : i32, i32
  }
  func.func @transform_8(%arg0: i32) -> (i32, i32) {
    %c0_i32 = arith.constant 0 : i32
    %c0_i32_0 = arith.constant 0 : i32
    return %arg0, %c0_i32 : i32, i32
  }
}

module attributes {stable_mosaic.version = 11 : i64} {
  func.func @_block_fwd_kernel(%arg0: i32, %arg1: memref<24x16xf32, #tpu.memory_space<vmem>>, %arg2: memref<24x16xf32, #tpu.memory_space<vmem>>, %arg3: memref<24x16xf32, #tpu.memory_space<vmem>>, %arg4: memref<48x32xf32, #tpu.memory_space<vmem>>, %arg5: memref<1x32xf32, #tpu.memory_space<vmem>>, %arg6: memref<16x32xf32, #tpu.memory_space<vmem>>, %arg7: memref<1x32xf32, #tpu.memory_space<vmem>>, %arg8: memref<24x16xf32, #tpu.memory_space<vmem>>, %arg9: memref<24x16xf32, #tpu.memory_space<vmem>>) attributes {dimension_semantics = [#tpu.dimension_semantics<parallel>], iteration_bounds = array<i64: 1>, scalar_prefetch = 0 : i64, scratch_operands = 0 : i64, tpu.core_type = #tpu.core_type<tc>, window_params = [{transform_indices = @transform_0, window_bounds = array<i64: 24, 16>}, {transform_indices = @transform_1, window_bounds = array<i64: 24, 16>}, {transform_indices = @transform_2, window_bounds = array<i64: 24, 16>}, {pipeline_mode = #tpu.pipeline_mode<synchronous>, transform_indices = @transform_3, window_bounds = array<i64: 48, 32>}, {pipeline_mode = #tpu.pipeline_mode<synchronous>, transform_indices = @transform_4, window_bounds = array<i64: 1, 32>}, {pipeline_mode = #tpu.pipeline_mode<synchronous>, transform_indices = @transform_5, window_bounds = array<i64: 16, 32>}, {pipeline_mode = #tpu.pipeline_mode<synchronous>, transform_indices = @transform_6, window_bounds = array<i64: 1, 32>}, {transform_indices = @transform_7, window_bounds = array<i64: 24, 16>}, {transform_indices = @transform_8, window_bounds = array<i64: 24, 16>}]} {
    %c0 = arith.constant 0 : index
    %c0_0 = arith.constant 0 : index
    %0 = vector.load %arg1[%c0, %c0_0] : memref<24x16xf32, #tpu.memory_space<vmem>>, vector<24x16xf32>
    %c0_1 = arith.constant 0 : index
    %c0_2 = arith.constant 0 : index
    %1 = vector.load %arg4[%c0_1, %c0_2] : memref<48x32xf32, #tpu.memory_space<vmem>>, vector<16x32xf32>
    %cst = arith.constant dense<0.000000e+00> : vector<24x32xf32>
    %2 = tpu.matmul %0, %1, %cst {dimension_numbers = #tpu.dot_dimension_numbers<[1], [0], [0], [1], [0, 0, 1, 1], [], []>} : vector<24x16xf32>, vector<16x32xf32>, vector<24x32xf32> -> vector<24x32xf32>
    %c0_3 = arith.constant 0 : index
    %c0_4 = arith.constant 0 : index
    %3 = vector.load %arg2[%c0_3, %c0_4] : memref<24x16xf32, #tpu.memory_space<vmem>>, vector<24x16xf32>
    %c16 = arith.constant 16 : index
    %c0_5 = arith.constant 0 : index
    %4 = vector.load %arg4[%c16, %c0_5] : memref<48x32xf32, #tpu.memory_space<vmem>>, vector<16x32xf32>
    %cst_6 = arith.constant dense<0.000000e+00> : vector<24x32xf32>
    %5 = tpu.matmul %3, %4, %cst_6 {dimension_numbers = #tpu.dot_dimension_numbers<[1], [0], [0], [1], [0, 0, 1, 1], [], []>} : vector<24x16xf32>, vector<16x32xf32>, vector<24x32xf32> -> vector<24x32xf32>
    %6 = arith.addf %2, %5 : vector<24x32xf32>
    %c0_7 = arith.constant 0 : index
    %c0_8 = arith.constant 0 : index
    %7 = vector.load %arg3[%c0_7, %c0_8] : memref<24x16xf32, #tpu.memory_space<vmem>>, vector<24x16xf32>
    %c32 = arith.constant 32 : index
    %c0_9 = arith.constant 0 : index
    %8 = vector.load %arg4[%c32, %c0_9] : memref<48x32xf32, #tpu.memory_space<vmem>>, vector<16x32xf32>
    %cst_10 = arith.constant dense<0.000000e+00> : vector<24x32xf32>
    %9 = tpu.matmul %7, %8, %cst_10 {dimension_numbers = #tpu.dot_dimension_numbers<[1], [0], [0], [1], [0, 0, 1, 1], [], []>} : vector<24x16xf32>, vector<16x32xf32>, vector<24x32xf32> -> vector<24x32xf32>
    %10 = arith.addf %6, %9 : vector<24x32xf32>
    %c0_11 = arith.constant 0 : index
    %c0_12 = arith.constant 0 : index
    %11 = vector.load %arg5[%c0_11, %c0_12] : memref<1x32xf32, #tpu.memory_space<vmem>>, vector<1x32xf32>
    %12 = vector.broadcast %11 : vector<1x32xf32> to vector<24x32xf32>
    %13 = arith.addf %10, %12 : vector<24x32xf32>
    %14 = vector.extract_strided_slice %13 {offsets = [0, 0], sizes = [24, 16], strides = [1, 1]} : vector<24x32xf32> to vector<24x16xf32>
    %15 = arith.negf %14 : vector<24x16xf32>
    %16 = math.exp %15 : vector<24x16xf32>
    %cst_13 = arith.constant 1.000000e+00 : f32
    %17 = vector.broadcast %cst_13 : f32 to vector<24x16xf32>
    %18 = arith.addf %17, %16 : vector<24x16xf32>
    %19 = arith.divf %17, %18 : vector<24x16xf32>
    %20 = vector.extract_strided_slice %13 {offsets = [0, 16], sizes = [24, 16], strides = [1, 1]} : vector<24x32xf32> to vector<24x16xf32>
    %21 = arith.negf %20 : vector<24x16xf32>
    %22 = math.exp %21 : vector<24x16xf32>
    %cst_14 = arith.constant 1.000000e+00 : f32
    %23 = vector.broadcast %cst_14 : f32 to vector<24x16xf32>
    %24 = arith.addf %23, %22 : vector<24x16xf32>
    %25 = arith.divf %23, %24 : vector<24x16xf32>
    %26 = arith.mulf %20, %25 : vector<24x16xf32>
    %27 = arith.mulf %19, %26 : vector<24x16xf32>
    %c0_15 = arith.constant 0 : index
    %c0_16 = arith.constant 0 : index
    %28 = vector.load %arg6[%c0_15, %c0_16] : memref<16x32xf32, #tpu.memory_space<vmem>>, vector<16x32xf32>
    %cst_17 = arith.constant dense<0.000000e+00> : vector<24x32xf32>
    %29 = tpu.matmul %27, %28, %cst_17 {dimension_numbers = #tpu.dot_dimension_numbers<[1], [0], [0], [1], [0, 0, 1, 1], [], []>} : vector<24x16xf32>, vector<16x32xf32>, vector<24x32xf32> -> vector<24x32xf32>
    %c0_18 = arith.constant 0 : index
    %c0_19 = arith.constant 0 : index
    %30 = vector.load %arg7[%c0_18, %c0_19] : memref<1x32xf32, #tpu.memory_space<vmem>>, vector<1x32xf32>
    %31 = vector.broadcast %30 : vector<1x32xf32> to vector<24x32xf32>
    %32 = arith.addf %29, %31 : vector<24x32xf32>
    %33 = vector.extract_strided_slice %32 {offsets = [0, 0], sizes = [24, 16], strides = [1, 1]} : vector<24x32xf32> to vector<24x16xf32>
    %34 = arith.negf %33 : vector<24x16xf32>
    %35 = math.exp %34 : vector<24x16xf32>
    %cst_20 = arith.constant 1.000000e+00 : f32
    %36 = vector.broadcast %cst_20 : f32 to vector<24x16xf32>
    %37 = arith.addf %36, %35 : vector<24x16xf32>
    %38 = arith.divf %36, %37 : vector<24x16xf32>
    %39 = vector.extract_strided_slice %32 {offsets = [0, 16], sizes = [24, 16], strides = [1, 1]} : vector<24x32xf32> to vector<24x16xf32>
    %c0_21 = arith.constant 0 : index
    %c0_22 = arith.constant 0 : index
    %40 = vector.load %arg8[%c0_21, %c0_22] : memref<24x16xf32, #tpu.memory_space<vmem>>, vector<24x16xf32>
    tpu.vector_store %arg8[%c0_21, %c0_22], %27 {strides = array<i32>} : memref<24x16xf32, #tpu.memory_space<vmem>>, vector<24x16xf32>,
    %41 = arith.negf %39 : vector<24x16xf32>
    %42 = math.exp %41 : vector<24x16xf32>
    %cst_23 = arith.constant 1.000000e+00 : f32
    %43 = vector.broadcast %cst_23 : f32 to vector<24x16xf32>
    %44 = arith.addf %43, %42 : vector<24x16xf32>
    %45 = arith.divf %43, %44 : vector<24x16xf32>
    %46 = arith.mulf %39, %45 : vector<24x16xf32>
    %47 = arith.mulf %38, %46 : vector<24x16xf32>
    %c0_24 = arith.constant 0 : index
    %c0_25 = arith.constant 0 : index
    %48 = vector.load %arg9[%c0_24, %c0_25] : memref<24x16xf32, #tpu.memory_space<vmem>>, vector<24x16xf32>
    tpu.vector_store %arg9[%c0_24, %c0_25], %47 {strides = array<i32>} : memref<24x16xf32, #tpu.memory_space<vmem>>, vector<24x16xf32>,
    return
  }
  func.func @transform_0(%arg0: i32) -> (i32, i32) {
    %c0_i32 = arith.constant 0 : i32
    %c0_i32_0 = arith.constant 0 : i32
    return %arg0, %c0_i32 : i32, i32
  }
  func.func @transform_1(%arg0: i32) -> (i32, i32) {
    %c0_i32 = arith.constant 0 : i32
    %c0_i32_0 = arith.constant 0 : i32
    return %arg0, %c0_i32 : i32, i32
  }
  func.func @transform_2(%arg0: i32) -> (i32, i32) {
    %c0_i32 = arith.constant 0 : i32
    %c0_i32_0 = arith.constant 0 : i32
    return %arg0, %c0_i32 : i32, i32
  }
  func.func @transform_3(%arg0: i32) -> (i32, i32) {
    %c0_i32 = arith.constant 0 : i32
    %c0_i32_0 = arith.constant 0 : i32
    %c0_i32_1 = arith.constant 0 : i32
    return %c0_i32, %c0_i32_0 : i32, i32
  }
  func.func @transform_4(%arg0: i32) -> (i32, i32) {
    %c0_i32 = arith.constant 0 : i32
    %c0_i32_0 = arith.constant 0 : i32
    %c0_i32_1 = arith.constant 0 : i32
    return %c0_i32, %c0_i32_0 : i32, i32
  }
  func.func @transform_5(%arg0: i32) -> (i32, i32) {
    %c0_i32 = arith.constant 0 : i32
    %c0_i32_0 = arith.constant 0 : i32
    %c0_i32_1 = arith.constant 0 : i32
    return %c0_i32, %c0_i32_0 : i32, i32
  }
  func.func @transform_6(%arg0: i32) -> (i32, i32) {
    %c0_i32 = arith.constant 0 : i32
    %c0_i32_0 = arith.constant 0 : i32
    %c0_i32_1 = arith.constant 0 : i32
    return %c0_i32, %c0_i32_0 : i32, i32
  }
  func.func @transform_7(%arg0: i32) -> (i32, i32) {
    %c0_i32 = arith.constant 0 : i32
    %c0_i32_0 = arith.constant 0 : i32
    return %arg0, %c0_i32 : i32, i32
  }
  func.func @transform_8(%arg0: i32) -> (i32, i32) {
    %c0_i32 = arith.constant 0 : i32
    %c0_i32_0 = arith.constant 0 : i32
    return %arg0, %c0_i32 : i32, i32
  }
}

module attributes {stable_mosaic.version = 11 : i64} {
  func.func @_block_bwd_kernel(%arg0: i32, %arg1: memref<24x16xf32, #tpu.memory_space<vmem>>, %arg2: memref<24x16xf32, #tpu.memory_space<vmem>>, %arg3: memref<24x16xf32, #tpu.memory_space<vmem>>, %arg4: memref<48x32xf32, #tpu.memory_space<vmem>>, %arg5: memref<1x32xf32, #tpu.memory_space<vmem>>, %arg6: memref<16x32xf32, #tpu.memory_space<vmem>>, %arg7: memref<1x32xf32, #tpu.memory_space<vmem>>, %arg8: memref<24x16xf32, #tpu.memory_space<vmem>>, %arg9: memref<24x16xf32, #tpu.memory_space<vmem>>, %arg10: memref<24x16xf32, #tpu.memory_space<vmem>>, %arg11: memref<24x16xf32, #tpu.memory_space<vmem>>, %arg12: memref<24x16xf32, #tpu.memory_space<vmem>>, %arg13: memref<1x48x32xf32, #tpu.memory_space<vmem>>, %arg14: memref<1x1x32xf32, #tpu.memory_space<vmem>>, %arg15: memref<1x16x32xf32, #tpu.memory_space<vmem>>, %arg16: memref<1x1x32xf32, #tpu.memory_space<vmem>>) attributes {dimension_semantics = [#tpu.dimension_semantics<parallel>], iteration_bounds = array<i64: 1>, scalar_prefetch = 0 : i64, scratch_operands = 0 : i64, tpu.core_type = #tpu.core_type<tc>, window_params = [{transform_indices = @transform_0, window_bounds = array<i64: 24, 16>}, {transform_indices = @transform_1, window_bounds = array<i64: 24, 16>}, {transform_indices = @transform_2, window_bounds = array<i64: 24, 16>}, {pipeline_mode = #tpu.pipeline_mode<synchronous>, transform_indices = @transform_3, window_bounds = array<i64: 48, 32>}, {pipeline_mode = #tpu.pipeline_mode<synchronous>, transform_indices = @transform_4, window_bounds = array<i64: 1, 32>}, {pipeline_mode = #tpu.pipeline_mode<synchronous>, transform_indices = @transform_5, window_bounds = array<i64: 16, 32>}, {pipeline_mode = #tpu.pipeline_mode<synchronous>, transform_indices = @transform_6, window_bounds = array<i64: 1, 32>}, {transform_indices = @transform_7, window_bounds = array<i64: 24, 16>}, {transform_indices = @transform_8, window_bounds = array<i64: 24, 16>}, {transform_indices = @transform_9, window_bounds = array<i64: 24, 16>}, {transform_indices = @transform_10, window_bounds = array<i64: 24, 16>}, {transform_indices = @transform_11, window_bounds = array<i64: 24, 16>}, {transform_indices = @transform_12, window_bounds = array<i64: 1, 48, 32>}, {transform_indices = @transform_13, window_bounds = array<i64: 1, 1, 32>}, {transform_indices = @transform_14, window_bounds = array<i64: 1, 16, 32>}, {transform_indices = @transform_15, window_bounds = array<i64: 1, 1, 32>}]} {
    %c0 = arith.constant 0 : index
    %c0_0 = arith.constant 0 : index
    %0 = vector.load %arg1[%c0, %c0_0] : memref<24x16xf32, #tpu.memory_space<vmem>>, vector<24x16xf32>
    %c0_1 = arith.constant 0 : index
    %c0_2 = arith.constant 0 : index
    %1 = vector.load %arg2[%c0_1, %c0_2] : memref<24x16xf32, #tpu.memory_space<vmem>>, vector<24x16xf32>
    %c0_3 = arith.constant 0 : index
    %c0_4 = arith.constant 0 : index
    %2 = vector.load %arg3[%c0_3, %c0_4] : memref<24x16xf32, #tpu.memory_space<vmem>>, vector<24x16xf32>
    %c0_5 = arith.constant 0 : index
    %c0_6 = arith.constant 0 : index
    %3 = vector.load %arg4[%c0_5, %c0_6] : memref<48x32xf32, #tpu.memory_space<vmem>>, vector<16x32xf32>
    %c16 = arith.constant 16 : index
    %c0_7 = arith.constant 0 : index
    %4 = vector.load %arg4[%c16, %c0_7] : memref<48x32xf32, #tpu.memory_space<vmem>>, vector<16x32xf32>
    %c32 = arith.constant 32 : index
    %c0_8 = arith.constant 0 : index
    %5 = vector.load %arg4[%c32, %c0_8] : memref<48x32xf32, #tpu.memory_space<vmem>>, vector<16x32xf32>
    %c0_9 = arith.constant 0 : index
    %c0_10 = arith.constant 0 : index
    %6 = vector.load %arg6[%c0_9, %c0_10] : memref<16x32xf32, #tpu.memory_space<vmem>>, vector<16x32xf32>
    %cst = arith.constant dense<0.000000e+00> : vector<24x32xf32>
    %7 = tpu.matmul %0, %3, %cst {dimension_numbers = #tpu.dot_dimension_numbers<[1], [0], [0], [1], [0, 0, 1, 1], [], []>} : vector<24x16xf32>, vector<16x32xf32>, vector<24x32xf32> -> vector<24x32xf32>
    %cst_11 = arith.constant dense<0.000000e+00> : vector<24x32xf32>
    %8 = tpu.matmul %1, %4, %cst_11 {dimension_numbers = #tpu.dot_dimension_numbers<[1], [0], [0], [1], [0, 0, 1, 1], [], []>} : vector<24x16xf32>, vector<16x32xf32>, vector<24x32xf32> -> vector<24x32xf32>
    %9 = arith.addf %7, %8 : vector<24x32xf32>
    %cst_12 = arith.constant dense<0.000000e+00> : vector<24x32xf32>
    %10 = tpu.matmul %2, %5, %cst_12 {dimension_numbers = #tpu.dot_dimension_numbers<[1], [0], [0], [1], [0, 0, 1, 1], [], []>} : vector<24x16xf32>, vector<16x32xf32>, vector<24x32xf32> -> vector<24x32xf32>
    %11 = arith.addf %9, %10 : vector<24x32xf32>
    %c0_13 = arith.constant 0 : index
    %c0_14 = arith.constant 0 : index
    %12 = vector.load %arg5[%c0_13, %c0_14] : memref<1x32xf32, #tpu.memory_space<vmem>>, vector<1x32xf32>
    %13 = vector.broadcast %12 : vector<1x32xf32> to vector<24x32xf32>
    %14 = arith.addf %11, %13 : vector<24x32xf32>
    %15 = vector.extract_strided_slice %14 {offsets = [0, 0], sizes = [24, 16], strides = [1, 1]} : vector<24x32xf32> to vector<24x16xf32>
    %16 = arith.negf %15 : vector<24x16xf32>
    %17 = math.exp %16 : vector<24x16xf32>
    %cst_15 = arith.constant 1.000000e+00 : f32
    %18 = vector.broadcast %cst_15 : f32 to vector<24x16xf32>
    %19 = arith.addf %18, %17 : vector<24x16xf32>
    %20 = arith.divf %18, %19 : vector<24x16xf32>
    %21 = vector.extract_strided_slice %14 {offsets = [0, 16], sizes = [24, 16], strides = [1, 1]} : vector<24x32xf32> to vector<24x16xf32>
    %22 = arith.negf %21 : vector<24x16xf32>
    %23 = math.exp %22 : vector<24x16xf32>
    %cst_16 = arith.constant 1.000000e+00 : f32
    %24 = vector.broadcast %cst_16 : f32 to vector<24x16xf32>
    %25 = arith.addf %24, %23 : vector<24x16xf32>
    %26 = arith.divf %24, %25 : vector<24x16xf32>
    %27 = arith.mulf %21, %26 : vector<24x16xf32>
    %28 = arith.mulf %20, %27 : vector<24x16xf32>
    %cst_17 = arith.constant dense<0.000000e+00> : vector<24x32xf32>
    %29 = tpu.matmul %28, %6, %cst_17 {dimension_numbers = #tpu.dot_dimension_numbers<[1], [0], [0], [1], [0, 0, 1, 1], [], []>} : vector<24x16xf32>, vector<16x32xf32>, vector<24x32xf32> -> vector<24x32xf32>
    %c0_18 = arith.constant 0 : index
    %c0_19 = arith.constant 0 : index
    %30 = vector.load %arg7[%c0_18, %c0_19] : memref<1x32xf32, #tpu.memory_space<vmem>>, vector<1x32xf32>
    %31 = vector.broadcast %30 : vector<1x32xf32> to vector<24x32xf32>
    %32 = arith.addf %29, %31 : vector<24x32xf32>
    %33 = vector.extract_strided_slice %32 {offsets = [0, 0], sizes = [24, 16], strides = [1, 1]} : vector<24x32xf32> to vector<24x16xf32>
    %34 = arith.negf %33 : vector<24x16xf32>
    %35 = math.exp %34 : vector<24x16xf32>
    %cst_20 = arith.constant 1.000000e+00 : f32
    %36 = vector.broadcast %cst_20 : f32 to vector<24x16xf32>
    %37 = arith.addf %36, %35 : vector<24x16xf32>
    %38 = arith.divf %36, %37 : vector<24x16xf32>
    %39 = vector.extract_strided_slice %32 {offsets = [0, 16], sizes = [24, 16], strides = [1, 1]} : vector<24x32xf32> to vector<24x16xf32>
    %40 = arith.negf %39 : vector<24x16xf32>
    %41 = math.exp %40 : vector<24x16xf32>
    %cst_21 = arith.constant 1.000000e+00 : f32
    %42 = vector.broadcast %cst_21 : f32 to vector<24x16xf32>
    %43 = arith.addf %42, %41 : vector<24x16xf32>
    %44 = arith.divf %42, %43 : vector<24x16xf32>
    %45 = arith.mulf %39, %44 : vector<24x16xf32>
    %c0_22 = arith.constant 0 : index
    %c0_23 = arith.constant 0 : index
    %46 = vector.load %arg9[%c0_22, %c0_23] : memref<24x16xf32, #tpu.memory_space<vmem>>, vector<24x16xf32>
    %47 = arith.mulf %46, %45 : vector<24x16xf32>
    %48 = arith.mulf %47, %38 : vector<24x16xf32>
    %cst_24 = arith.constant 1.000000e+00 : f32
    %49 = vector.broadcast %cst_24 : f32 to vector<24x16xf32>
    %50 = arith.subf %49, %38 : vector<24x16xf32>
    %51 = arith.mulf %48, %50 : vector<24x16xf32>
    %52 = arith.mulf %46, %38 : vector<24x16xf32>
    %cst_25 = arith.constant 1.000000e+00 : f32
    %53 = vector.broadcast %cst_25 : f32 to vector<24x16xf32>
    %54 = arith.subf %53, %44 : vector<24x16xf32>
    %55 = arith.mulf %45, %54 : vector<24x16xf32>
    %56 = arith.addf %44, %55 : vector<24x16xf32>
    %57 = arith.mulf %52, %56 : vector<24x16xf32>
    %58 = tpu.concatenate %51, %57 in 1 : vector<24x16xf32>, vector<24x16xf32> -> vector<24x32xf32>
    %c0_26 = arith.constant 0 : index
    %c0_27 = arith.constant 0 : index
    %59 = vector.load %arg8[%c0_26, %c0_27] : memref<24x16xf32, #tpu.memory_space<vmem>>, vector<24x16xf32>
    %cst_28 = arith.constant dense<0.000000e+00> : vector<24x16xf32>
    %60 = tpu.matmul %58, %6, %cst_28 {dimension_numbers = #tpu.dot_dimension_numbers<[1], [1], [0], [0], [0, 0, 1, 0], [], []>} : vector<24x32xf32>, vector<16x32xf32>, vector<24x16xf32> -> vector<24x16xf32>
    %61 = arith.addf %59, %60 : vector<24x16xf32>
    %62 = arith.mulf %61, %27 : vector<24x16xf32>
    %63 = arith.mulf %62, %20 : vector<24x16xf32>
    %cst_29 = arith.constant 1.000000e+00 : f32
    %64 = vector.broadcast %cst_29 : f32 to vector<24x16xf32>
    %65 = arith.subf %64, %20 : vector<24x16xf32>
    %66 = arith.mulf %63, %65 : vector<24x16xf32>
    %67 = arith.mulf %61, %20 : vector<24x16xf32>
    %cst_30 = arith.constant 1.000000e+00 : f32
    %68 = vector.broadcast %cst_30 : f32 to vector<24x16xf32>
    %69 = arith.subf %68, %26 : vector<24x16xf32>
    %70 = arith.mulf %27, %69 : vector<24x16xf32>
    %71 = arith.addf %26, %70 : vector<24x16xf32>
    %72 = arith.mulf %67, %71 : vector<24x16xf32>
    %73 = tpu.concatenate %66, %72 in 1 : vector<24x16xf32>, vector<24x16xf32> -> vector<24x32xf32>
    %cst_31 = arith.constant dense<0.000000e+00> : vector<24x16xf32>
    %74 = tpu.matmul %73, %3, %cst_31 {dimension_numbers = #tpu.dot_dimension_numbers<[1], [1], [0], [0], [0, 0, 1, 0], [], []>} : vector<24x32xf32>, vector<16x32xf32>, vector<24x16xf32> -> vector<24x16xf32>
    %c0_32 = arith.constant 0 : index
    %c0_33 = arith.constant 0 : index
    %75 = vector.load %arg10[%c0_32, %c0_33] : memref<24x16xf32, #tpu.memory_space<vmem>>, vector<24x16xf32>
    tpu.vector_store %arg10[%c0_32, %c0_33], %74 {strides = array<i32>} : memref<24x16xf32, #tpu.memory_space<vmem>>, vector<24x16xf32>,
    %cst_34 = arith.constant dense<0.000000e+00> : vector<24x16xf32>
    %76 = tpu.matmul %73, %4, %cst_34 {dimension_numbers = #tpu.dot_dimension_numbers<[1], [1], [0], [0], [0, 0, 1, 0], [], []>} : vector<24x32xf32>, vector<16x32xf32>, vector<24x16xf32> -> vector<24x16xf32>
    %c0_35 = arith.constant 0 : index
    %c0_36 = arith.constant 0 : index
    %77 = vector.load %arg11[%c0_35, %c0_36] : memref<24x16xf32, #tpu.memory_space<vmem>>, vector<24x16xf32>
    tpu.vector_store %arg11[%c0_35, %c0_36], %76 {strides = array<i32>} : memref<24x16xf32, #tpu.memory_space<vmem>>, vector<24x16xf32>,
    %cst_37 = arith.constant dense<0.000000e+00> : vector<24x16xf32>
    %78 = tpu.matmul %73, %5, %cst_37 {dimension_numbers = #tpu.dot_dimension_numbers<[1], [1], [0], [0], [0, 0, 1, 0], [], []>} : vector<24x32xf32>, vector<16x32xf32>, vector<24x16xf32> -> vector<24x16xf32>
    %c0_38 = arith.constant 0 : index
    %c0_39 = arith.constant 0 : index
    %79 = vector.load %arg12[%c0_38, %c0_39] : memref<24x16xf32, #tpu.memory_space<vmem>>, vector<24x16xf32>
    tpu.vector_store %arg12[%c0_38, %c0_39], %78 {strides = array<i32>} : memref<24x16xf32, #tpu.memory_space<vmem>>, vector<24x16xf32>,
    %cst_40 = arith.constant dense<0.000000e+00> : vector<16x32xf32>
    %80 = tpu.matmul %0, %73, %cst_40 {dimension_numbers = #tpu.dot_dimension_numbers<[0], [0], [1], [1], [0, 1, 1, 1], [], []>} : vector<24x16xf32>, vector<24x32xf32>, vector<16x32xf32> -> vector<16x32xf32>
    %cst_41 = arith.constant dense<0.000000e+00> : vector<16x32xf32>
    %81 = tpu.matmul %1, %73, %cst_41 {dimension_numbers = #tpu.dot_dimension_numbers<[0], [0], [1], [1], [0, 1, 1, 1], [], []>} : vector<24x16xf32>, vector<24x32xf32>, vector<16x32xf32> -> vector<16x32xf32>
    %cst_42 = arith.constant dense<0.000000e+00> : vector<16x32xf32>
    %82 = tpu.matmul %2, %73, %cst_42 {dimension_numbers = #tpu.dot_dimension_numbers<[0], [0], [1], [1], [0, 1, 1, 1], [], []>} : vector<24x16xf32>, vector<24x32xf32>, vector<16x32xf32> -> vector<16x32xf32>
    %83 = tpu.concatenate %80, %81, %82 in 0 : vector<16x32xf32>, vector<16x32xf32>, vector<16x32xf32> -> vector<48x32xf32>
    %c0_43 = arith.constant 0 : index
    %c0_44 = arith.constant 0 : index
    %c0_45 = arith.constant 0 : index
    %84 = vector.load %arg13[%c0_43, %c0_44, %c0_45] : memref<1x48x32xf32, #tpu.memory_space<vmem>>, vector<1x48x32xf32>
    %85 = vector.shape_cast %84 : vector<1x48x32xf32> to vector<48x32xf32>
    %86 = vector.shape_cast %83 : vector<48x32xf32> to vector<1x48x32xf32>
    tpu.vector_store %arg13[%c0_43, %c0_44, %c0_45], %86 {strides = array<i32>} : memref<1x48x32xf32, #tpu.memory_space<vmem>>, vector<1x48x32xf32>,
    %cst_46 = arith.constant dense<0.000000e+00> : vector<32xf32>
    %87 = vector.multi_reduction <add>, %73, %cst_46 [0] : vector<24x32xf32> to vector<32xf32>
    %88 = vector.shape_cast %87 : vector<32xf32> to vector<1x32xf32>
    %c0_47 = arith.constant 0 : index
    %c0_48 = arith.constant 0 : index
    %c0_49 = arith.constant 0 : index
    %89 = vector.load %arg14[%c0_47, %c0_48, %c0_49] : memref<1x1x32xf32, #tpu.memory_space<vmem>>, vector<1x1x32xf32>
    %90 = vector.shape_cast %89 : vector<1x1x32xf32> to vector<1x32xf32>
    %91 = vector.shape_cast %88 : vector<1x32xf32> to vector<1x1x32xf32>
    tpu.vector_store %arg14[%c0_47, %c0_48, %c0_49], %91 {strides = array<i32>} : memref<1x1x32xf32, #tpu.memory_space<vmem>>, vector<1x1x32xf32>,
    %cst_50 = arith.constant dense<0.000000e+00> : vector<16x32xf32>
    %92 = tpu.matmul %28, %58, %cst_50 {dimension_numbers = #tpu.dot_dimension_numbers<[0], [0], [1], [1], [0, 1, 1, 1], [], []>} : vector<24x16xf32>, vector<24x32xf32>, vector<16x32xf32> -> vector<16x32xf32>
    %c0_51 = arith.constant 0 : index
    %c0_52 = arith.constant 0 : index
    %c0_53 = arith.constant 0 : index
    %93 = vector.load %arg15[%c0_51, %c0_52, %c0_53] : memref<1x16x32xf32, #tpu.memory_space<vmem>>, vector<1x16x32xf32>
    %94 = vector.shape_cast %93 : vector<1x16x32xf32> to vector<16x32xf32>
    %95 = vector.shape_cast %92 : vector<16x32xf32> to vector<1x16x32xf32>
    tpu.vector_store %arg15[%c0_51, %c0_52, %c0_53], %95 {strides = array<i32>} : memref<1x16x32xf32, #tpu.memory_space<vmem>>, vector<1x16x32xf32>,
    %cst_54 = arith.constant dense<0.000000e+00> : vector<32xf32>
    %96 = vector.multi_reduction <add>, %58, %cst_54 [0] : vector<24x32xf32> to vector<32xf32>
    %97 = vector.shape_cast %96 : vector<32xf32> to vector<1x32xf32>
    %c0_55 = arith.constant 0 : index
    %c0_56 = arith.constant 0 : index
    %c0_57 = arith.constant 0 : index
    %98 = vector.load %arg16[%c0_55, %c0_56, %c0_57] : memref<1x1x32xf32, #tpu.memory_space<vmem>>, vector<1x1x32xf32>
    %99 = vector.shape_cast %98 : vector<1x1x32xf32> to vector<1x32xf32>
    %100 = vector.shape_cast %97 : vector<1x32xf32> to vector<1x1x32xf32>
    tpu.vector_store %arg16[%c0_55, %c0_56, %c0_57], %100 {strides = array<i32>} : memref<1x1x32xf32, #tpu.memory_space<vmem>>, vector<1x1x32xf32>,
    return
  }
  func.func @transform_0(%arg0: i32) -> (i32, i32) {
    %c0_i32 = arith.constant 0 : i32
    %c0_i32_0 = arith.constant 0 : i32
    return %arg0, %c0_i32 : i32, i32
  }
  func.func @transform_1(%arg0: i32) -> (i32, i32) {
    %c0_i32 = arith.constant 0 : i32
    %c0_i32_0 = arith.constant 0 : i32
    return %arg0, %c0_i32 : i32, i32
  }
  func.func @transform_2(%arg0: i32) -> (i32, i32) {
    %c0_i32 = arith.constant 0 : i32
    %c0_i32_0 = arith.constant 0 : i32
    return %arg0, %c0_i32 : i32, i32
  }
  func.func @transform_3(%arg0: i32) -> (i32, i32) {
    %c0_i32 = arith.constant 0 : i32
    %c0_i32_0 = arith.constant 0 : i32
    %c0_i32_1 = arith.constant 0 : i32
    return %c0_i32, %c0_i32_0 : i32, i32
  }
  func.func @transform_4(%arg0: i32) -> (i32, i32) {
    %c0_i32 = arith.constant 0 : i32
    %c0_i32_0 = arith.constant 0 : i32
    %c0_i32_1 = arith.constant 0 : i32
    return %c0_i32, %c0_i32_0 : i32, i32
  }
  func.func @transform_5(%arg0: i32) -> (i32, i32) {
    %c0_i32 = arith.constant 0 : i32
    %c0_i32_0 = arith.constant 0 : i32
    %c0_i32_1 = arith.constant 0 : i32
    return %c0_i32, %c0_i32_0 : i32, i32
  }
  func.func @transform_6(%arg0: i32) -> (i32, i32) {
    %c0_i32 = arith.constant 0 : i32
    %c0_i32_0 = arith.constant 0 : i32
    %c0_i32_1 = arith.constant 0 : i32
    return %c0_i32, %c0_i32_0 : i32, i32
  }
  func.func @transform_7(%arg0: i32) -> (i32, i32) {
    %c0_i32 = arith.constant 0 : i32
    %c0_i32_0 = arith.constant 0 : i32
    return %arg0, %c0_i32 : i32, i32
  }
  func.func @transform_8(%arg0: i32) -> (i32, i32) {
    %c0_i32 = arith.constant 0 : i32
    %c0_i32_0 = arith.constant 0 : i32
    return %arg0, %c0_i32 : i32, i32
  }
  func.func @transform_9(%arg0: i32) -> (i32, i32) {
    %c0_i32 = arith.constant 0 : i32
    %c0_i32_0 = arith.constant 0 : i32
    return %arg0, %c0_i32 : i32, i32
  }
  func.func @transform_10(%arg0: i32) -> (i32, i32) {
    %c0_i32 = arith.constant 0 : i32
    %c0_i32_0 = arith.constant 0 : i32
    return %arg0, %c0_i32 : i32, i32
  }
  func.func @transform_11(%arg0: i32) -> (i32, i32) {
    %c0_i32 = arith.constant 0 : i32
    %c0_i32_0 = arith.constant 0 : i32
    return %arg0, %c0_i32 : i32, i32
  }
  func.func @transform_12(%arg0: i32) -> (i32, i32, i32) {
    %c0_i32 = arith.constant 0 : i32
    %c0_i32_0 = arith.constant 0 : i32
    %c0_i32_1 = arith.constant 0 : i32
    return %arg0, %c0_i32, %c0_i32_0 : i32, i32, i32
  }
  func.func @transform_13(%arg0: i32) -> (i32, i32, i32) {
    %c0_i32 = arith.constant 0 : i32
    %c0_i32_0 = arith.constant 0 : i32
    %c0_i32_1 = arith.constant 0 : i32
    return %arg0, %c0_i32, %c0_i32_0 : i32, i32, i32
  }
  func.func @transform_14(%arg0: i32) -> (i32, i32, i32) {
    %c0_i32 = arith.constant 0 : i32
    %c0_i32_0 = arith.constant 0 : i32
    %c0_i32_1 = arith.constant 0 : i32
    return %arg0, %c0_i32, %c0_i32_0 : i32, i32, i32
  }
  func.func @transform_15(%arg0: i32) -> (i32, i32, i32) {
    %c0_i32 = arith.constant 0 : i32
    %c0_i32_0 = arith.constant 0 : i32
    %c0_i32_1 = arith.constant 0 : i32
    return %arg0, %c0_i32, %c0_i32_0 : i32, i32, i32
  }
}

module attributes {stable_mosaic.version = 11 : i64} {
  func.func @_gated_res_bwd_kernel(%arg0: i32, %arg1: memref<24x48xf32, #tpu.memory_space<vmem>>, %arg2: memref<48x32xf32, #tpu.memory_space<vmem>>, %arg3: memref<1x32xf32, #tpu.memory_space<vmem>>, %arg4: memref<24x16xf32, #tpu.memory_space<vmem>>, %arg5: memref<24x48xf32, #tpu.memory_space<vmem>>, %arg6: memref<1x48x32xf32, #tpu.memory_space<vmem>>, %arg7: memref<1x1x32xf32, #tpu.memory_space<vmem>>) attributes {dimension_semantics = [#tpu.dimension_semantics<parallel>], iteration_bounds = array<i64: 1>, scalar_prefetch = 0 : i64, scratch_operands = 0 : i64, tpu.core_type = #tpu.core_type<tc>, window_params = [{transform_indices = @transform_0, window_bounds = array<i64: 24, 48>}, {pipeline_mode = #tpu.pipeline_mode<synchronous>, transform_indices = @transform_1, window_bounds = array<i64: 48, 32>}, {pipeline_mode = #tpu.pipeline_mode<synchronous>, transform_indices = @transform_2, window_bounds = array<i64: 1, 32>}, {transform_indices = @transform_3, window_bounds = array<i64: 24, 16>}, {transform_indices = @transform_4, window_bounds = array<i64: 24, 48>}, {transform_indices = @transform_5, window_bounds = array<i64: 1, 48, 32>}, {transform_indices = @transform_6, window_bounds = array<i64: 1, 1, 32>}]} {
    %c0 = arith.constant 0 : index
    %c0_0 = arith.constant 0 : index
    %0 = vector.load %arg1[%c0, %c0_0] : memref<24x48xf32, #tpu.memory_space<vmem>>, vector<24x48xf32>
    %c0_1 = arith.constant 0 : index
    %c0_2 = arith.constant 0 : index
    %1 = vector.load %arg2[%c0_1, %c0_2] : memref<48x32xf32, #tpu.memory_space<vmem>>, vector<48x32xf32>
    %c0_3 = arith.constant 0 : index
    %c0_4 = arith.constant 0 : index
    %2 = vector.load %arg4[%c0_3, %c0_4] : memref<24x16xf32, #tpu.memory_space<vmem>>, vector<24x16xf32>
    %cst = arith.constant dense<0.000000e+00> : vector<24x32xf32>
    %3 = tpu.matmul %0, %1, %cst {dimension_numbers = #tpu.dot_dimension_numbers<[1], [0], [0], [1], [0, 0, 1, 1], [], []>} : vector<24x48xf32>, vector<48x32xf32>, vector<24x32xf32> -> vector<24x32xf32>
    %c0_5 = arith.constant 0 : index
    %c0_6 = arith.constant 0 : index
    %4 = vector.load %arg3[%c0_5, %c0_6] : memref<1x32xf32, #tpu.memory_space<vmem>>, vector<1x32xf32>
    %5 = vector.broadcast %4 : vector<1x32xf32> to vector<24x32xf32>
    %6 = arith.addf %3, %5 : vector<24x32xf32>
    %7 = vector.extract_strided_slice %6 {offsets = [0, 0], sizes = [24, 16], strides = [1, 1]} : vector<24x32xf32> to vector<24x16xf32>
    %8 = arith.negf %7 : vector<24x16xf32>
    %9 = math.exp %8 : vector<24x16xf32>
    %cst_7 = arith.constant 1.000000e+00 : f32
    %10 = vector.broadcast %cst_7 : f32 to vector<24x16xf32>
    %11 = arith.addf %10, %9 : vector<24x16xf32>
    %12 = arith.divf %10, %11 : vector<24x16xf32>
    %13 = vector.extract_strided_slice %6 {offsets = [0, 16], sizes = [24, 16], strides = [1, 1]} : vector<24x32xf32> to vector<24x16xf32>
    %14 = arith.negf %13 : vector<24x16xf32>
    %15 = math.exp %14 : vector<24x16xf32>
    %cst_8 = arith.constant 1.000000e+00 : f32
    %16 = vector.broadcast %cst_8 : f32 to vector<24x16xf32>
    %17 = arith.addf %16, %15 : vector<24x16xf32>
    %18 = arith.divf %16, %17 : vector<24x16xf32>
    %19 = arith.mulf %13, %18 : vector<24x16xf32>
    %20 = arith.mulf %2, %19 : vector<24x16xf32>
    %21 = arith.mulf %20, %12 : vector<24x16xf32>
    %cst_9 = arith.constant 1.000000e+00 : f32
    %22 = vector.broadcast %cst_9 : f32 to vector<24x16xf32>
    %23 = arith.subf %22, %12 : vector<24x16xf32>
    %24 = arith.mulf %21, %23 : vector<24x16xf32>
    %25 = arith.mulf %2, %12 : vector<24x16xf32>
    %cst_10 = arith.constant 1.000000e+00 : f32
    %26 = vector.broadcast %cst_10 : f32 to vector<24x16xf32>
    %27 = arith.subf %26, %18 : vector<24x16xf32>
    %28 = arith.mulf %19, %27 : vector<24x16xf32>
    %29 = arith.addf %18, %28 : vector<24x16xf32>
    %30 = arith.mulf %25, %29 : vector<24x16xf32>
    %31 = tpu.concatenate %24, %30 in 1 : vector<24x16xf32>, vector<24x16xf32> -> vector<24x32xf32>
    %cst_11 = arith.constant dense<0.000000e+00> : vector<24x48xf32>
    %32 = tpu.matmul %31, %1, %cst_11 {dimension_numbers = #tpu.dot_dimension_numbers<[1], [1], [0], [0], [0, 0, 1, 0], [], []>} : vector<24x32xf32>, vector<48x32xf32>, vector<24x48xf32> -> vector<24x48xf32>
    %c0_12 = arith.constant 0 : index
    %c0_13 = arith.constant 0 : index
    %33 = vector.load %arg5[%c0_12, %c0_13] : memref<24x48xf32, #tpu.memory_space<vmem>>, vector<24x48xf32>
    tpu.vector_store %arg5[%c0_12, %c0_13], %32 {strides = array<i32>} : memref<24x48xf32, #tpu.memory_space<vmem>>, vector<24x48xf32>,
    %cst_14 = arith.constant dense<0.000000e+00> : vector<48x32xf32>
    %34 = tpu.matmul %0, %31, %cst_14 {dimension_numbers = #tpu.dot_dimension_numbers<[0], [0], [1], [1], [0, 1, 1, 1], [], []>} : vector<24x48xf32>, vector<24x32xf32>, vector<48x32xf32> -> vector<48x32xf32>
    %c0_15 = arith.constant 0 : index
    %c0_16 = arith.constant 0 : index
    %c0_17 = arith.constant 0 : index
    %35 = vector.load %arg6[%c0_15, %c0_16, %c0_17] : memref<1x48x32xf32, #tpu.memory_space<vmem>>, vector<1x48x32xf32>
    %36 = vector.shape_cast %35 : vector<1x48x32xf32> to vector<48x32xf32>
    %37 = vector.shape_cast %34 : vector<48x32xf32> to vector<1x48x32xf32>
    tpu.vector_store %arg6[%c0_15, %c0_16, %c0_17], %37 {strides = array<i32>} : memref<1x48x32xf32, #tpu.memory_space<vmem>>, vector<1x48x32xf32>,
    %cst_18 = arith.constant dense<0.000000e+00> : vector<32xf32>
    %38 = vector.multi_reduction <add>, %31, %cst_18 [0] : vector<24x32xf32> to vector<32xf32>
    %39 = vector.shape_cast %38 : vector<32xf32> to vector<1x32xf32>
    %c0_19 = arith.constant 0 : index
    %c0_20 = arith.constant 0 : index
    %c0_21 = arith.constant 0 : index
    %40 = vector.load %arg7[%c0_19, %c0_20, %c0_21] : memref<1x1x32xf32, #tpu.memory_space<vmem>>, vector<1x1x32xf32>
    %41 = vector.shape_cast %40 : vector<1x1x32xf32> to vector<1x32xf32>
    %42 = vector.shape_cast %39 : vector<1x32xf32> to vector<1x1x32xf32>
    tpu.vector_store %arg7[%c0_19, %c0_20, %c0_21], %42 {strides = array<i32>} : memref<1x1x32xf32, #tpu.memory_space<vmem>>, vector<1x1x32xf32>,
    return
  }
  func.func @transform_0(%arg0: i32) -> (i32, i32) {
    %c0_i32 = arith.constant 0 : i32
    %c0_i32_0 = arith.constant 0 : i32
    return %arg0, %c0_i32 : i32, i32
  }
  func.func @transform_1(%arg0: i32) -> (i32, i32) {
    %c0_i32 = arith.constant 0 : i32
    %c0_i32_0 = arith.constant 0 : i32
    %c0_i32_1 = arith.constant 0 : i32
    return %c0_i32, %c0_i32_0 : i32, i32
  }
  func.func @transform_2(%arg0: i32) -> (i32, i32) {
    %c0_i32 = arith.constant 0 : i32
    %c0_i32_0 = arith.constant 0 : i32
    %c0_i32_1 = arith.constant 0 : i32
    return %c0_i32, %c0_i32_0 : i32, i32
  }
  func.func @transform_3(%arg0: i32) -> (i32, i32) {
    %c0_i32 = arith.constant 0 : i32
    %c0_i32_0 = arith.constant 0 : i32
    return %arg0, %c0_i32 : i32, i32
  }
  func.func @transform_4(%arg0: i32) -> (i32, i32) {
    %c0_i32 = arith.constant 0 : i32
    %c0_i32_0 = arith.constant 0 : i32
    return %arg0, %c0_i32 : i32, i32
  }
  func.func @transform_5(%arg0: i32) -> (i32, i32, i32) {
    %c0_i32 = arith.constant 0 : i32
    %c0_i32_0 = arith.constant 0 : i32
    %c0_i32_1 = arith.constant 0 : i32
    return %arg0, %c0_i32, %c0_i32_0 : i32, i32, i32
  }
  func.func @transform_6(%arg0: i32) -> (i32, i32, i32) {
    %c0_i32 = arith.constant 0 : i32
    %c0_i32_0 = arith.constant 0 : i32
    %c0_i32_1 = arith.constant 0 : i32
    return %arg0, %c0_i32, %c0_i32_0 : i32, i32, i32
  }
}

module attributes {stable_mosaic.version = 11 : i64} {
  func.func @_dense_bwd_kernel(%arg0: i32, %arg1: memref<8x16xf32, #tpu.memory_space<vmem>>, %arg2: memref<16x48xf32, #tpu.memory_space<vmem>>, %arg3: memref<1x48xf32, #tpu.memory_space<vmem>>, %arg4: memref<8x48xf32, #tpu.memory_space<vmem>>, %arg5: memref<8x16xf32, #tpu.memory_space<vmem>>, %arg6: memref<1x16x48xf32, #tpu.memory_space<vmem>>, %arg7: memref<1x1x48xf32, #tpu.memory_space<vmem>>) attributes {dimension_semantics = [#tpu.dimension_semantics<parallel>], iteration_bounds = array<i64: 1>, scalar_prefetch = 0 : i64, scratch_operands = 0 : i64, tpu.core_type = #tpu.core_type<tc>, window_params = [{transform_indices = @transform_0, window_bounds = array<i64: 8, 16>}, {pipeline_mode = #tpu.pipeline_mode<synchronous>, transform_indices = @transform_1, window_bounds = array<i64: 16, 48>}, {pipeline_mode = #tpu.pipeline_mode<synchronous>, transform_indices = @transform_2, window_bounds = array<i64: 1, 48>}, {transform_indices = @transform_3, window_bounds = array<i64: 8, 48>}, {transform_indices = @transform_4, window_bounds = array<i64: 8, 16>}, {transform_indices = @transform_5, window_bounds = array<i64: 1, 16, 48>}, {transform_indices = @transform_6, window_bounds = array<i64: 1, 1, 48>}]} {
    %c0 = arith.constant 0 : index
    %c0_0 = arith.constant 0 : index
    %0 = vector.load %arg1[%c0, %c0_0] : memref<8x16xf32, #tpu.memory_space<vmem>>, vector<8x16xf32>
    %c0_1 = arith.constant 0 : index
    %c0_2 = arith.constant 0 : index
    %1 = vector.load %arg2[%c0_1, %c0_2] : memref<16x48xf32, #tpu.memory_space<vmem>>, vector<16x48xf32>
    %c0_3 = arith.constant 0 : index
    %c0_4 = arith.constant 0 : index
    %2 = vector.load %arg4[%c0_3, %c0_4] : memref<8x48xf32, #tpu.memory_space<vmem>>, vector<8x48xf32>
    %cst = arith.constant dense<0.000000e+00> : vector<8x48xf32>
    %3 = tpu.matmul %0, %1, %cst {dimension_numbers = #tpu.dot_dimension_numbers<[1], [0], [0], [1], [0, 0, 1, 1], [], []>} : vector<8x16xf32>, vector<16x48xf32>, vector<8x48xf32> -> vector<8x48xf32>
    %c0_5 = arith.constant 0 : index
    %c0_6 = arith.constant 0 : index
    %4 = vector.load %arg3[%c0_5, %c0_6] : memref<1x48xf32, #tpu.memory_space<vmem>>, vector<1x48xf32>
    %5 = vector.broadcast %4 : vector<1x48xf32> to vector<8x48xf32>
    %6 = arith.addf %3, %5 : vector<8x48xf32>
    %7 = arith.negf %6 : vector<8x48xf32>
    %8 = math.exp %7 : vector<8x48xf32>
    %cst_7 = arith.constant 1.000000e+00 : f32
    %9 = vector.broadcast %cst_7 : f32 to vector<8x48xf32>
    %10 = arith.addf %9, %8 : vector<8x48xf32>
    %11 = arith.divf %9, %10 : vector<8x48xf32>
    %12 = arith.mulf %6, %11 : vector<8x48xf32>
    %cst_8 = arith.constant 1.000000e+00 : f32
    %13 = vector.broadcast %cst_8 : f32 to vector<8x48xf32>
    %14 = arith.subf %13, %11 : vector<8x48xf32>
    %15 = arith.mulf %12, %14 : vector<8x48xf32>
    %16 = arith.addf %11, %15 : vector<8x48xf32>
    %17 = arith.mulf %2, %16 : vector<8x48xf32>
    %cst_9 = arith.constant dense<0.000000e+00> : vector<8x16xf32>
    %18 = tpu.matmul %17, %1, %cst_9 {dimension_numbers = #tpu.dot_dimension_numbers<[1], [1], [0], [0], [0, 0, 1, 0], [], []>} : vector<8x48xf32>, vector<16x48xf32>, vector<8x16xf32> -> vector<8x16xf32>
    %c0_10 = arith.constant 0 : index
    %c0_11 = arith.constant 0 : index
    %19 = vector.load %arg5[%c0_10, %c0_11] : memref<8x16xf32, #tpu.memory_space<vmem>>, vector<8x16xf32>
    tpu.vector_store %arg5[%c0_10, %c0_11], %18 {strides = array<i32>} : memref<8x16xf32, #tpu.memory_space<vmem>>, vector<8x16xf32>,
    %cst_12 = arith.constant dense<0.000000e+00> : vector<16x48xf32>
    %20 = tpu.matmul %0, %17, %cst_12 {dimension_numbers = #tpu.dot_dimension_numbers<[0], [0], [1], [1], [0, 1, 1, 1], [], []>} : vector<8x16xf32>, vector<8x48xf32>, vector<16x48xf32> -> vector<16x48xf32>
    %c0_13 = arith.constant 0 : index
    %c0_14 = arith.constant 0 : index
    %c0_15 = arith.constant 0 : index
    %21 = vector.load %arg6[%c0_13, %c0_14, %c0_15] : memref<1x16x48xf32, #tpu.memory_space<vmem>>, vector<1x16x48xf32>
    %22 = vector.shape_cast %21 : vector<1x16x48xf32> to vector<16x48xf32>
    %23 = vector.shape_cast %20 : vector<16x48xf32> to vector<1x16x48xf32>
    tpu.vector_store %arg6[%c0_13, %c0_14, %c0_15], %23 {strides = array<i32>} : memref<1x16x48xf32, #tpu.memory_space<vmem>>, vector<1x16x48xf32>,
    %cst_16 = arith.constant dense<0.000000e+00> : vector<48xf32>
    %24 = vector.multi_reduction <add>, %17, %cst_16 [0] : vector<8x48xf32> to vector<48xf32>
    %25 = vector.shape_cast %24 : vector<48xf32> to vector<1x48xf32>
    %c0_17 = arith.constant 0 : index
    %c0_18 = arith.constant 0 : index
    %c0_19 = arith.constant 0 : index
    %26 = vector.load %arg7[%c0_17, %c0_18, %c0_19] : memref<1x1x48xf32, #tpu.memory_space<vmem>>, vector<1x1x48xf32>
    %27 = vector.shape_cast %26 : vector<1x1x48xf32> to vector<1x48xf32>
    %28 = vector.shape_cast %25 : vector<1x48xf32> to vector<1x1x48xf32>
    tpu.vector_store %arg7[%c0_17, %c0_18, %c0_19], %28 {strides = array<i32>} : memref<1x1x48xf32, #tpu.memory_space<vmem>>, vector<1x1x48xf32>,
    return
  }
  func.func @transform_0(%arg0: i32) -> (i32, i32) {
    %c0_i32 = arith.constant 0 : i32
    %c0_i32_0 = arith.constant 0 : i32
    return %arg0, %c0_i32 : i32, i32
  }
  func.func @transform_1(%arg0: i32) -> (i32, i32) {
    %c0_i32 = arith.constant 0 : i32
    %c0_i32_0 = arith.constant 0 : i32
    %c0_i32_1 = arith.constant 0 : i32
    return %c0_i32, %c0_i32_0 : i32, i32
  }
  func.func @transform_2(%arg0: i32) -> (i32, i32) {
    %c0_i32 = arith.constant 0 : i32
    %c0_i32_0 = arith.constant 0 : i32
    %c0_i32_1 = arith.constant 0 : i32
    return %c0_i32, %c0_i32_0 : i32, i32
  }
  func.func @transform_3(%arg0: i32) -> (i32, i32) {
    %c0_i32 = arith.constant 0 : i32
    %c0_i32_0 = arith.constant 0 : i32
    return %arg0, %c0_i32 : i32, i32
  }
  func.func @transform_4(%arg0: i32) -> (i32, i32) {
    %c0_i32 = arith.constant 0 : i32
    %c0_i32_0 = arith.constant 0 : i32
    return %arg0, %c0_i32 : i32, i32
  }
  func.func @transform_5(%arg0: i32) -> (i32, i32, i32) {
    %c0_i32 = arith.constant 0 : i32
    %c0_i32_0 = arith.constant 0 : i32
    %c0_i32_1 = arith.constant 0 : i32
    return %arg0, %c0_i32, %c0_i32_0 : i32, i32, i32
  }
  func.func @transform_6(%arg0: i32) -> (i32, i32, i32) {
    %c0_i32 = arith.constant 0 : i32
    %c0_i32_0 = arith.constant 0 : i32
    %c0_i32_1 = arith.constant 0 : i32
    return %arg0, %c0_i32, %c0_i32_0 : i32, i32, i32
  }
}

module attributes {stable_mosaic.version = 11 : i64} {
  func.func @_block_bwd_kernel(%arg0: i32, %arg1: memref<24x16xf32, #tpu.memory_space<vmem>>, %arg2: memref<24x16xf32, #tpu.memory_space<vmem>>, %arg3: memref<24x16xf32, #tpu.memory_space<vmem>>, %arg4: memref<48x32xf32, #tpu.memory_space<vmem>>, %arg5: memref<1x32xf32, #tpu.memory_space<vmem>>, %arg6: memref<16x32xf32, #tpu.memory_space<vmem>>, %arg7: memref<1x32xf32, #tpu.memory_space<vmem>>, %arg8: memref<24x16xf32, #tpu.memory_space<vmem>>, %arg9: memref<24x16xf32, #tpu.memory_space<vmem>>, %arg10: memref<24x16xf32, #tpu.memory_space<vmem>>, %arg11: memref<24x16xf32, #tpu.memory_space<vmem>>, %arg12: memref<24x16xf32, #tpu.memory_space<vmem>>, %arg13: memref<1x48x32xf32, #tpu.memory_space<vmem>>, %arg14: memref<1x1x32xf32, #tpu.memory_space<vmem>>, %arg15: memref<1x16x32xf32, #tpu.memory_space<vmem>>, %arg16: memref<1x1x32xf32, #tpu.memory_space<vmem>>) attributes {dimension_semantics = [#tpu.dimension_semantics<parallel>], iteration_bounds = array<i64: 1>, scalar_prefetch = 0 : i64, scratch_operands = 0 : i64, tpu.core_type = #tpu.core_type<tc>, window_params = [{transform_indices = @transform_0, window_bounds = array<i64: 24, 16>}, {transform_indices = @transform_1, window_bounds = array<i64: 24, 16>}, {transform_indices = @transform_2, window_bounds = array<i64: 24, 16>}, {pipeline_mode = #tpu.pipeline_mode<synchronous>, transform_indices = @transform_3, window_bounds = array<i64: 48, 32>}, {pipeline_mode = #tpu.pipeline_mode<synchronous>, transform_indices = @transform_4, window_bounds = array<i64: 1, 32>}, {pipeline_mode = #tpu.pipeline_mode<synchronous>, transform_indices = @transform_5, window_bounds = array<i64: 16, 32>}, {pipeline_mode = #tpu.pipeline_mode<synchronous>, transform_indices = @transform_6, window_bounds = array<i64: 1, 32>}, {transform_indices = @transform_7, window_bounds = array<i64: 24, 16>}, {transform_indices = @transform_8, window_bounds = array<i64: 24, 16>}, {transform_indices = @transform_9, window_bounds = array<i64: 24, 16>}, {transform_indices = @transform_10, window_bounds = array<i64: 24, 16>}, {transform_indices = @transform_11, window_bounds = array<i64: 24, 16>}, {transform_indices = @transform_12, window_bounds = array<i64: 1, 48, 32>}, {transform_indices = @transform_13, window_bounds = array<i64: 1, 1, 32>}, {transform_indices = @transform_14, window_bounds = array<i64: 1, 16, 32>}, {transform_indices = @transform_15, window_bounds = array<i64: 1, 1, 32>}]} {
    %c0 = arith.constant 0 : index
    %c0_0 = arith.constant 0 : index
    %0 = vector.load %arg1[%c0, %c0_0] : memref<24x16xf32, #tpu.memory_space<vmem>>, vector<24x16xf32>
    %c0_1 = arith.constant 0 : index
    %c0_2 = arith.constant 0 : index
    %1 = vector.load %arg2[%c0_1, %c0_2] : memref<24x16xf32, #tpu.memory_space<vmem>>, vector<24x16xf32>
    %c0_3 = arith.constant 0 : index
    %c0_4 = arith.constant 0 : index
    %2 = vector.load %arg3[%c0_3, %c0_4] : memref<24x16xf32, #tpu.memory_space<vmem>>, vector<24x16xf32>
    %c0_5 = arith.constant 0 : index
    %c0_6 = arith.constant 0 : index
    %3 = vector.load %arg4[%c0_5, %c0_6] : memref<48x32xf32, #tpu.memory_space<vmem>>, vector<16x32xf32>
    %c16 = arith.constant 16 : index
    %c0_7 = arith.constant 0 : index
    %4 = vector.load %arg4[%c16, %c0_7] : memref<48x32xf32, #tpu.memory_space<vmem>>, vector<16x32xf32>
    %c32 = arith.constant 32 : index
    %c0_8 = arith.constant 0 : index
    %5 = vector.load %arg4[%c32, %c0_8] : memref<48x32xf32, #tpu.memory_space<vmem>>, vector<16x32xf32>
    %c0_9 = arith.constant 0 : index
    %c0_10 = arith.constant 0 : index
    %6 = vector.load %arg6[%c0_9, %c0_10] : memref<16x32xf32, #tpu.memory_space<vmem>>, vector<16x32xf32>
    %cst = arith.constant dense<0.000000e+00> : vector<24x32xf32>
    %7 = tpu.matmul %0, %3, %cst {dimension_numbers = #tpu.dot_dimension_numbers<[1], [0], [0], [1], [0, 0, 1, 1], [], []>} : vector<24x16xf32>, vector<16x32xf32>, vector<24x32xf32> -> vector<24x32xf32>
    %cst_11 = arith.constant dense<0.000000e+00> : vector<24x32xf32>
    %8 = tpu.matmul %1, %4, %cst_11 {dimension_numbers = #tpu.dot_dimension_numbers<[1], [0], [0], [1], [0, 0, 1, 1], [], []>} : vector<24x16xf32>, vector<16x32xf32>, vector<24x32xf32> -> vector<24x32xf32>
    %9 = arith.addf %7, %8 : vector<24x32xf32>
    %cst_12 = arith.constant dense<0.000000e+00> : vector<24x32xf32>
    %10 = tpu.matmul %2, %5, %cst_12 {dimension_numbers = #tpu.dot_dimension_numbers<[1], [0], [0], [1], [0, 0, 1, 1], [], []>} : vector<24x16xf32>, vector<16x32xf32>, vector<24x32xf32> -> vector<24x32xf32>
    %11 = arith.addf %9, %10 : vector<24x32xf32>
    %c0_13 = arith.constant 0 : index
    %c0_14 = arith.constant 0 : index
    %12 = vector.load %arg5[%c0_13, %c0_14] : memref<1x32xf32, #tpu.memory_space<vmem>>, vector<1x32xf32>
    %13 = vector.broadcast %12 : vector<1x32xf32> to vector<24x32xf32>
    %14 = arith.addf %11, %13 : vector<24x32xf32>
    %15 = vector.extract_strided_slice %14 {offsets = [0, 0], sizes = [24, 16], strides = [1, 1]} : vector<24x32xf32> to vector<24x16xf32>
    %16 = arith.negf %15 : vector<24x16xf32>
    %17 = math.exp %16 : vector<24x16xf32>
    %cst_15 = arith.constant 1.000000e+00 : f32
    %18 = vector.broadcast %cst_15 : f32 to vector<24x16xf32>
    %19 = arith.addf %18, %17 : vector<24x16xf32>
    %20 = arith.divf %18, %19 : vector<24x16xf32>
    %21 = vector.extract_strided_slice %14 {offsets = [0, 16], sizes = [24, 16], strides = [1, 1]} : vector<24x32xf32> to vector<24x16xf32>
    %22 = arith.negf %21 : vector<24x16xf32>
    %23 = math.exp %22 : vector<24x16xf32>
    %cst_16 = arith.constant 1.000000e+00 : f32
    %24 = vector.broadcast %cst_16 : f32 to vector<24x16xf32>
    %25 = arith.addf %24, %23 : vector<24x16xf32>
    %26 = arith.divf %24, %25 : vector<24x16xf32>
    %27 = arith.mulf %21, %26 : vector<24x16xf32>
    %28 = arith.mulf %20, %27 : vector<24x16xf32>
    %cst_17 = arith.constant dense<0.000000e+00> : vector<24x32xf32>
    %29 = tpu.matmul %28, %6, %cst_17 {dimension_numbers = #tpu.dot_dimension_numbers<[1], [0], [0], [1], [0, 0, 1, 1], [], []>} : vector<24x16xf32>, vector<16x32xf32>, vector<24x32xf32> -> vector<24x32xf32>
    %c0_18 = arith.constant 0 : index
    %c0_19 = arith.constant 0 : index
    %30 = vector.load %arg7[%c0_18, %c0_19] : memref<1x32xf32, #tpu.memory_space<vmem>>, vector<1x32xf32>
    %31 = vector.broadcast %30 : vector<1x32xf32> to vector<24x32xf32>
    %32 = arith.addf %29, %31 : vector<24x32xf32>
    %33 = vector.extract_strided_slice %32 {offsets = [0, 0], sizes = [24, 16], strides = [1, 1]} : vector<24x32xf32> to vector<24x16xf32>
    %34 = arith.negf %33 : vector<24x16xf32>
    %35 = math.exp %34 : vector<24x16xf32>
    %cst_20 = arith.constant 1.000000e+00 : f32
    %36 = vector.broadcast %cst_20 : f32 to vector<24x16xf32>
    %37 = arith.addf %36, %35 : vector<24x16xf32>
    %38 = arith.divf %36, %37 : vector<24x16xf32>
    %39 = vector.extract_strided_slice %32 {offsets = [0, 16], sizes = [24, 16], strides = [1, 1]} : vector<24x32xf32> to vector<24x16xf32>
    %40 = arith.negf %39 : vector<24x16xf32>
    %41 = math.exp %40 : vector<24x16xf32>
    %cst_21 = arith.constant 1.000000e+00 : f32
    %42 = vector.broadcast %cst_21 : f32 to vector<24x16xf32>
    %43 = arith.addf %42, %41 : vector<24x16xf32>
    %44 = arith.divf %42, %43 : vector<24x16xf32>
    %45 = arith.mulf %39, %44 : vector<24x16xf32>
    %c0_22 = arith.constant 0 : index
    %c0_23 = arith.constant 0 : index
    %46 = vector.load %arg9[%c0_22, %c0_23] : memref<24x16xf32, #tpu.memory_space<vmem>>, vector<24x16xf32>
    %47 = arith.mulf %46, %45 : vector<24x16xf32>
    %48 = arith.mulf %47, %38 : vector<24x16xf32>
    %cst_24 = arith.constant 1.000000e+00 : f32
    %49 = vector.broadcast %cst_24 : f32 to vector<24x16xf32>
    %50 = arith.subf %49, %38 : vector<24x16xf32>
    %51 = arith.mulf %48, %50 : vector<24x16xf32>
    %52 = arith.mulf %46, %38 : vector<24x16xf32>
    %cst_25 = arith.constant 1.000000e+00 : f32
    %53 = vector.broadcast %cst_25 : f32 to vector<24x16xf32>
    %54 = arith.subf %53, %44 : vector<24x16xf32>
    %55 = arith.mulf %45, %54 : vector<24x16xf32>
    %56 = arith.addf %44, %55 : vector<24x16xf32>
    %57 = arith.mulf %52, %56 : vector<24x16xf32>
    %58 = tpu.concatenate %51, %57 in 1 : vector<24x16xf32>, vector<24x16xf32> -> vector<24x32xf32>
    %c0_26 = arith.constant 0 : index
    %c0_27 = arith.constant 0 : index
    %59 = vector.load %arg8[%c0_26, %c0_27] : memref<24x16xf32, #tpu.memory_space<vmem>>, vector<24x16xf32>
    %cst_28 = arith.constant dense<0.000000e+00> : vector<24x16xf32>
    %60 = tpu.matmul %58, %6, %cst_28 {dimension_numbers = #tpu.dot_dimension_numbers<[1], [1], [0], [0], [0, 0, 1, 0], [], []>} : vector<24x32xf32>, vector<16x32xf32>, vector<24x16xf32> -> vector<24x16xf32>
    %61 = arith.addf %59, %60 : vector<24x16xf32>
    %62 = arith.mulf %61, %27 : vector<24x16xf32>
    %63 = arith.mulf %62, %20 : vector<24x16xf32>
    %cst_29 = arith.constant 1.000000e+00 : f32
    %64 = vector.broadcast %cst_29 : f32 to vector<24x16xf32>
    %65 = arith.subf %64, %20 : vector<24x16xf32>
    %66 = arith.mulf %63, %65 : vector<24x16xf32>
    %67 = arith.mulf %61, %20 : vector<24x16xf32>
    %cst_30 = arith.constant 1.000000e+00 : f32
    %68 = vector.broadcast %cst_30 : f32 to vector<24x16xf32>
    %69 = arith.subf %68, %26 : vector<24x16xf32>
    %70 = arith.mulf %27, %69 : vector<24x16xf32>
    %71 = arith.addf %26, %70 : vector<24x16xf32>
    %72 = arith.mulf %67, %71 : vector<24x16xf32>
    %73 = tpu.concatenate %66, %72 in 1 : vector<24x16xf32>, vector<24x16xf32> -> vector<24x32xf32>
    %cst_31 = arith.constant dense<0.000000e+00> : vector<24x16xf32>
    %74 = tpu.matmul %73, %3, %cst_31 {dimension_numbers = #tpu.dot_dimension_numbers<[1], [1], [0], [0], [0, 0, 1, 0], [], []>} : vector<24x32xf32>, vector<16x32xf32>, vector<24x16xf32> -> vector<24x16xf32>
    %c0_32 = arith.constant 0 : index
    %c0_33 = arith.constant 0 : index
    %75 = vector.load %arg10[%c0_32, %c0_33] : memref<24x16xf32, #tpu.memory_space<vmem>>, vector<24x16xf32>
    tpu.vector_store %arg10[%c0_32, %c0_33], %74 {strides = array<i32>} : memref<24x16xf32, #tpu.memory_space<vmem>>, vector<24x16xf32>,
    %cst_34 = arith.constant dense<0.000000e+00> : vector<24x16xf32>
    %76 = tpu.matmul %73, %4, %cst_34 {dimension_numbers = #tpu.dot_dimension_numbers<[1], [1], [0], [0], [0, 0, 1, 0], [], []>} : vector<24x32xf32>, vector<16x32xf32>, vector<24x16xf32> -> vector<24x16xf32>
    %c0_35 = arith.constant 0 : index
    %c0_36 = arith.constant 0 : index
    %77 = vector.load %arg11[%c0_35, %c0_36] : memref<24x16xf32, #tpu.memory_space<vmem>>, vector<24x16xf32>
    tpu.vector_store %arg11[%c0_35, %c0_36], %76 {strides = array<i32>} : memref<24x16xf32, #tpu.memory_space<vmem>>, vector<24x16xf32>,
    %cst_37 = arith.constant dense<0.000000e+00> : vector<24x16xf32>
    %78 = tpu.matmul %73, %5, %cst_37 {dimension_numbers = #tpu.dot_dimension_numbers<[1], [1], [0], [0], [0, 0, 1, 0], [], []>} : vector<24x32xf32>, vector<16x32xf32>, vector<24x16xf32> -> vector<24x16xf32>
    %c0_38 = arith.constant 0 : index
    %c0_39 = arith.constant 0 : index
    %79 = vector.load %arg12[%c0_38, %c0_39] : memref<24x16xf32, #tpu.memory_space<vmem>>, vector<24x16xf32>
    tpu.vector_store %arg12[%c0_38, %c0_39], %78 {strides = array<i32>} : memref<24x16xf32, #tpu.memory_space<vmem>>, vector<24x16xf32>,
    %cst_40 = arith.constant dense<0.000000e+00> : vector<16x32xf32>
    %80 = tpu.matmul %0, %73, %cst_40 {dimension_numbers = #tpu.dot_dimension_numbers<[0], [0], [1], [1], [0, 1, 1, 1], [], []>} : vector<24x16xf32>, vector<24x32xf32>, vector<16x32xf32> -> vector<16x32xf32>
    %cst_41 = arith.constant dense<0.000000e+00> : vector<16x32xf32>
    %81 = tpu.matmul %1, %73, %cst_41 {dimension_numbers = #tpu.dot_dimension_numbers<[0], [0], [1], [1], [0, 1, 1, 1], [], []>} : vector<24x16xf32>, vector<24x32xf32>, vector<16x32xf32> -> vector<16x32xf32>
    %cst_42 = arith.constant dense<0.000000e+00> : vector<16x32xf32>
    %82 = tpu.matmul %2, %73, %cst_42 {dimension_numbers = #tpu.dot_dimension_numbers<[0], [0], [1], [1], [0, 1, 1, 1], [], []>} : vector<24x16xf32>, vector<24x32xf32>, vector<16x32xf32> -> vector<16x32xf32>
    %83 = tpu.concatenate %80, %81, %82 in 0 : vector<16x32xf32>, vector<16x32xf32>, vector<16x32xf32> -> vector<48x32xf32>
    %c0_43 = arith.constant 0 : index
    %c0_44 = arith.constant 0 : index
    %c0_45 = arith.constant 0 : index
    %84 = vector.load %arg13[%c0_43, %c0_44, %c0_45] : memref<1x48x32xf32, #tpu.memory_space<vmem>>, vector<1x48x32xf32>
    %85 = vector.shape_cast %84 : vector<1x48x32xf32> to vector<48x32xf32>
    %86 = vector.shape_cast %83 : vector<48x32xf32> to vector<1x48x32xf32>
    tpu.vector_store %arg13[%c0_43, %c0_44, %c0_45], %86 {strides = array<i32>} : memref<1x48x32xf32, #tpu.memory_space<vmem>>, vector<1x48x32xf32>,
    %cst_46 = arith.constant dense<0.000000e+00> : vector<32xf32>
    %87 = vector.multi_reduction <add>, %73, %cst_46 [0] : vector<24x32xf32> to vector<32xf32>
    %88 = vector.shape_cast %87 : vector<32xf32> to vector<1x32xf32>
    %c0_47 = arith.constant 0 : index
    %c0_48 = arith.constant 0 : index
    %c0_49 = arith.constant 0 : index
    %89 = vector.load %arg14[%c0_47, %c0_48, %c0_49] : memref<1x1x32xf32, #tpu.memory_space<vmem>>, vector<1x1x32xf32>
    %90 = vector.shape_cast %89 : vector<1x1x32xf32> to vector<1x32xf32>
    %91 = vector.shape_cast %88 : vector<1x32xf32> to vector<1x1x32xf32>
    tpu.vector_store %arg14[%c0_47, %c0_48, %c0_49], %91 {strides = array<i32>} : memref<1x1x32xf32, #tpu.memory_space<vmem>>, vector<1x1x32xf32>,
    %cst_50 = arith.constant dense<0.000000e+00> : vector<16x32xf32>
    %92 = tpu.matmul %28, %58, %cst_50 {dimension_numbers = #tpu.dot_dimension_numbers<[0], [0], [1], [1], [0, 1, 1, 1], [], []>} : vector<24x16xf32>, vector<24x32xf32>, vector<16x32xf32> -> vector<16x32xf32>
    %c0_51 = arith.constant 0 : index
    %c0_52 = arith.constant 0 : index
    %c0_53 = arith.constant 0 : index
    %93 = vector.load %arg15[%c0_51, %c0_52, %c0_53] : memref<1x16x32xf32, #tpu.memory_space<vmem>>, vector<1x16x32xf32>
    %94 = vector.shape_cast %93 : vector<1x16x32xf32> to vector<16x32xf32>
    %95 = vector.shape_cast %92 : vector<16x32xf32> to vector<1x16x32xf32>
    tpu.vector_store %arg15[%c0_51, %c0_52, %c0_53], %95 {strides = array<i32>} : memref<1x16x32xf32, #tpu.memory_space<vmem>>, vector<1x16x32xf32>,
    %cst_54 = arith.constant dense<0.000000e+00> : vector<32xf32>
    %96 = vector.multi_reduction <add>, %58, %cst_54 [0] : vector<24x32xf32> to vector<32xf32>
    %97 = vector.shape_cast %96 : vector<32xf32> to vector<1x32xf32>
    %c0_55 = arith.constant 0 : index
    %c0_56 = arith.constant 0 : index
    %c0_57 = arith.constant 0 : index
    %98 = vector.load %arg16[%c0_55, %c0_56, %c0_57] : memref<1x1x32xf32, #tpu.memory_space<vmem>>, vector<1x1x32xf32>
    %99 = vector.shape_cast %98 : vector<1x1x32xf32> to vector<1x32xf32>
    %100 = vector.shape_cast %97 : vector<1x32xf32> to vector<1x1x32xf32>
    tpu.vector_store %arg16[%c0_55, %c0_56, %c0_57], %100 {strides = array<i32>} : memref<1x1x32xf32, #tpu.memory_space<vmem>>, vector<1x1x32xf32>,
    return
  }
  func.func @transform_0(%arg0: i32) -> (i32, i32) {
    %c0_i32 = arith.constant 0 : i32
    %c0_i32_0 = arith.constant 0 : i32
    return %arg0, %c0_i32 : i32, i32
  }
  func.func @transform_1(%arg0: i32) -> (i32, i32) {
    %c0_i32 = arith.constant 0 : i32
    %c0_i32_0 = arith.constant 0 : i32
    return %arg0, %c0_i32 : i32, i32
  }
  func.func @transform_2(%arg0: i32) -> (i32, i32) {
    %c0_i32 = arith.constant 0 : i32
    %c0_i32_0 = arith.constant 0 : i32
    return %arg0, %c0_i32 : i32, i32
  }
  func.func @transform_3(%arg0: i32) -> (i32, i32) {
    %c0_i32 = arith.constant 0 : i32
    %c0_i32_0 = arith.constant 0 : i32
    %c0_i32_1 = arith.constant 0 : i32
    return %c0_i32, %c0_i32_0 : i32, i32
  }
  func.func @transform_4(%arg0: i32) -> (i32, i32) {
    %c0_i32 = arith.constant 0 : i32
    %c0_i32_0 = arith.constant 0 : i32
    %c0_i32_1 = arith.constant 0 : i32
    return %c0_i32, %c0_i32_0 : i32, i32
  }
  func.func @transform_5(%arg0: i32) -> (i32, i32) {
    %c0_i32 = arith.constant 0 : i32
    %c0_i32_0 = arith.constant 0 : i32
    %c0_i32_1 = arith.constant 0 : i32
    return %c0_i32, %c0_i32_0 : i32, i32
  }
  func.func @transform_6(%arg0: i32) -> (i32, i32) {
    %c0_i32 = arith.constant 0 : i32
    %c0_i32_0 = arith.constant 0 : i32
    %c0_i32_1 = arith.constant 0 : i32
    return %c0_i32, %c0_i32_0 : i32, i32
  }
  func.func @transform_7(%arg0: i32) -> (i32, i32) {
    %c0_i32 = arith.constant 0 : i32
    %c0_i32_0 = arith.constant 0 : i32
    return %arg0, %c0_i32 : i32, i32
  }
  func.func @transform_8(%arg0: i32) -> (i32, i32) {
    %c0_i32 = arith.constant 0 : i32
    %c0_i32_0 = arith.constant 0 : i32
    return %arg0, %c0_i32 : i32, i32
  }
  func.func @transform_9(%arg0: i32) -> (i32, i32) {
    %c0_i32 = arith.constant 0 : i32
    %c0_i32_0 = arith.constant 0 : i32
    return %arg0, %c0_i32 : i32, i32
  }
  func.func @transform_10(%arg0: i32) -> (i32, i32) {
    %c0_i32 = arith.constant 0 : i32
    %c0_i32_0 = arith.constant 0 : i32
    return %arg0, %c0_i32 : i32, i32
  }
  func.func @transform_11(%arg0: i32) -> (i32, i32) {
    %c0_i32 = arith.constant 0 : i32
    %c0_i32_0 = arith.constant 0 : i32
    return %arg0, %c0_i32 : i32, i32
  }
  func.func @transform_12(%arg0: i32) -> (i32, i32, i32) {
    %c0_i32 = arith.constant 0 : i32
    %c0_i32_0 = arith.constant 0 : i32
    %c0_i32_1 = arith.constant 0 : i32
    return %arg0, %c0_i32, %c0_i32_0 : i32, i32, i32
  }
  func.func @transform_13(%arg0: i32) -> (i32, i32, i32) {
    %c0_i32 = arith.constant 0 : i32
    %c0_i32_0 = arith.constant 0 : i32
    %c0_i32_1 = arith.constant 0 : i32
    return %arg0, %c0_i32, %c0_i32_0 : i32, i32, i32
  }
  func.func @transform_14(%arg0: i32) -> (i32, i32, i32) {
    %c0_i32 = arith.constant 0 : i32
    %c0_i32_0 = arith.constant 0 : i32
    %c0_i32_1 = arith.constant 0 : i32
    return %arg0, %c0_i32, %c0_i32_0 : i32, i32, i32
  }
  func.func @transform_15(%arg0: i32) -> (i32, i32, i32) {
    %c0_i32 = arith.constant 0 : i32
    %c0_i32_0 = arith.constant 0 : i32
    %c0_i32_1 = arith.constant 0 : i32
    return %arg0, %c0_i32, %c0_i32_0 : i32, i32, i32
  }
}

module attributes {stable_mosaic.version = 11 : i64} {
  func.func @_dense_bwd_kernel(%arg0: i32, %arg1: memref<24x3xf32, #tpu.memory_space<vmem>>, %arg2: memref<3x16xf32, #tpu.memory_space<vmem>>, %arg3: memref<1x16xf32, #tpu.memory_space<vmem>>, %arg4: memref<24x16xf32, #tpu.memory_space<vmem>>, %arg5: memref<24x3xf32, #tpu.memory_space<vmem>>, %arg6: memref<1x3x16xf32, #tpu.memory_space<vmem>>, %arg7: memref<1x1x16xf32, #tpu.memory_space<vmem>>) attributes {dimension_semantics = [#tpu.dimension_semantics<parallel>], iteration_bounds = array<i64: 1>, scalar_prefetch = 0 : i64, scratch_operands = 0 : i64, tpu.core_type = #tpu.core_type<tc>, window_params = [{transform_indices = @transform_0, window_bounds = array<i64: 24, 3>}, {pipeline_mode = #tpu.pipeline_mode<synchronous>, transform_indices = @transform_1, window_bounds = array<i64: 3, 16>}, {pipeline_mode = #tpu.pipeline_mode<synchronous>, transform_indices = @transform_2, window_bounds = array<i64: 1, 16>}, {transform_indices = @transform_3, window_bounds = array<i64: 24, 16>}, {transform_indices = @transform_4, window_bounds = array<i64: 24, 3>}, {transform_indices = @transform_5, window_bounds = array<i64: 1, 3, 16>}, {transform_indices = @transform_6, window_bounds = array<i64: 1, 1, 16>}]} {
    %c0 = arith.constant 0 : index
    %c0_0 = arith.constant 0 : index
    %0 = vector.load %arg1[%c0, %c0_0] : memref<24x3xf32, #tpu.memory_space<vmem>>, vector<24x3xf32>
    %c0_1 = arith.constant 0 : index
    %c0_2 = arith.constant 0 : index
    %1 = vector.load %arg2[%c0_1, %c0_2] : memref<3x16xf32, #tpu.memory_space<vmem>>, vector<3x16xf32>
    %c0_3 = arith.constant 0 : index
    %c0_4 = arith.constant 0 : index
    %2 = vector.load %arg4[%c0_3, %c0_4] : memref<24x16xf32, #tpu.memory_space<vmem>>, vector<24x16xf32>
    %cst = arith.constant dense<0.000000e+00> : vector<24x16xf32>
    %3 = tpu.matmul %0, %1, %cst {dimension_numbers = #tpu.dot_dimension_numbers<[1], [0], [0], [1], [0, 0, 1, 1], [], []>} : vector<24x3xf32>, vector<3x16xf32>, vector<24x16xf32> -> vector<24x16xf32>
    %c0_5 = arith.constant 0 : index
    %c0_6 = arith.constant 0 : index
    %4 = vector.load %arg3[%c0_5, %c0_6] : memref<1x16xf32, #tpu.memory_space<vmem>>, vector<1x16xf32>
    %5 = vector.broadcast %4 : vector<1x16xf32> to vector<24x16xf32>
    %6 = arith.addf %3, %5 : vector<24x16xf32>
    %7 = arith.negf %6 : vector<24x16xf32>
    %8 = math.exp %7 : vector<24x16xf32>
    %cst_7 = arith.constant 1.000000e+00 : f32
    %9 = vector.broadcast %cst_7 : f32 to vector<24x16xf32>
    %10 = arith.addf %9, %8 : vector<24x16xf32>
    %11 = arith.divf %9, %10 : vector<24x16xf32>
    %12 = arith.mulf %6, %11 : vector<24x16xf32>
    %cst_8 = arith.constant 1.000000e+00 : f32
    %13 = vector.broadcast %cst_8 : f32 to vector<24x16xf32>
    %14 = arith.subf %13, %11 : vector<24x16xf32>
    %15 = arith.mulf %12, %14 : vector<24x16xf32>
    %16 = arith.addf %11, %15 : vector<24x16xf32>
    %17 = arith.mulf %2, %16 : vector<24x16xf32>
    %cst_9 = arith.constant dense<0.000000e+00> : vector<24x3xf32>
    %18 = tpu.matmul %17, %1, %cst_9 {dimension_numbers = #tpu.dot_dimension_numbers<[1], [1], [0], [0], [0, 0, 1, 0], [], []>} : vector<24x16xf32>, vector<3x16xf32>, vector<24x3xf32> -> vector<24x3xf32>
    %c0_10 = arith.constant 0 : index
    %c0_11 = arith.constant 0 : index
    %19 = vector.load %arg5[%c0_10, %c0_11] : memref<24x3xf32, #tpu.memory_space<vmem>>, vector<24x3xf32>
    tpu.vector_store %arg5[%c0_10, %c0_11], %18 {strides = array<i32>} : memref<24x3xf32, #tpu.memory_space<vmem>>, vector<24x3xf32>,
    %cst_12 = arith.constant dense<0.000000e+00> : vector<3x16xf32>
    %20 = tpu.matmul %0, %17, %cst_12 {dimension_numbers = #tpu.dot_dimension_numbers<[0], [0], [1], [1], [0, 1, 1, 1], [], []>} : vector<24x3xf32>, vector<24x16xf32>, vector<3x16xf32> -> vector<3x16xf32>
    %c0_13 = arith.constant 0 : index
    %c0_14 = arith.constant 0 : index
    %c0_15 = arith.constant 0 : index
    %21 = vector.load %arg6[%c0_13, %c0_14, %c0_15] : memref<1x3x16xf32, #tpu.memory_space<vmem>>, vector<1x3x16xf32>
    %22 = vector.shape_cast %21 : vector<1x3x16xf32> to vector<3x16xf32>
    %23 = vector.shape_cast %20 : vector<3x16xf32> to vector<1x3x16xf32>
    tpu.vector_store %arg6[%c0_13, %c0_14, %c0_15], %23 {strides = array<i32>} : memref<1x3x16xf32, #tpu.memory_space<vmem>>, vector<1x3x16xf32>,
    %cst_16 = arith.constant dense<0.000000e+00> : vector<16xf32>
    %24 = vector.multi_reduction <add>, %17, %cst_16 [0] : vector<24x16xf32> to vector<16xf32>
    %25 = vector.shape_cast %24 : vector<16xf32> to vector<1x16xf32>
    %c0_17 = arith.constant 0 : index
    %c0_18 = arith.constant 0 : index
    %c0_19 = arith.constant 0 : index
    %26 = vector.load %arg7[%c0_17, %c0_18, %c0_19] : memref<1x1x16xf32, #tpu.memory_space<vmem>>, vector<1x1x16xf32>
    %27 = vector.shape_cast %26 : vector<1x1x16xf32> to vector<1x16xf32>
    %28 = vector.shape_cast %25 : vector<1x16xf32> to vector<1x1x16xf32>
    tpu.vector_store %arg7[%c0_17, %c0_18, %c0_19], %28 {strides = array<i32>} : memref<1x1x16xf32, #tpu.memory_space<vmem>>, vector<1x1x16xf32>,
    return
  }
  func.func @transform_0(%arg0: i32) -> (i32, i32) {
    %c0_i32 = arith.constant 0 : i32
    %c0_i32_0 = arith.constant 0 : i32
    return %arg0, %c0_i32 : i32, i32
  }
  func.func @transform_1(%arg0: i32) -> (i32, i32) {
    %c0_i32 = arith.constant 0 : i32
    %c0_i32_0 = arith.constant 0 : i32
    %c0_i32_1 = arith.constant 0 : i32
    return %c0_i32, %c0_i32_0 : i32, i32
  }
  func.func @transform_2(%arg0: i32) -> (i32, i32) {
    %c0_i32 = arith.constant 0 : i32
    %c0_i32_0 = arith.constant 0 : i32
    %c0_i32_1 = arith.constant 0 : i32
    return %c0_i32, %c0_i32_0 : i32, i32
  }
  func.func @transform_3(%arg0: i32) -> (i32, i32) {
    %c0_i32 = arith.constant 0 : i32
    %c0_i32_0 = arith.constant 0 : i32
    return %arg0, %c0_i32 : i32, i32
  }
  func.func @transform_4(%arg0: i32) -> (i32, i32) {
    %c0_i32 = arith.constant 0 : i32
    %c0_i32_0 = arith.constant 0 : i32
    return %arg0, %c0_i32 : i32, i32
  }
  func.func @transform_5(%arg0: i32) -> (i32, i32, i32) {
    %c0_i32 = arith.constant 0 : i32
    %c0_i32_0 = arith.constant 0 : i32
    %c0_i32_1 = arith.constant 0 : i32
    return %arg0, %c0_i32, %c0_i32_0 : i32, i32, i32
  }
  func.func @transform_6(%arg0: i32) -> (i32, i32, i32) {
    %c0_i32 = arith.constant 0 : i32
    %c0_i32_0 = arith.constant 0 : i32
    %c0_i32_1 = arith.constant 0 : i32
    return %arg0, %c0_i32, %c0_i32_0 : i32, i32, i32
  }
}

</mosaic_0001>

<llo_original>
// kernel: jvp__.8
$region0: #{jvp__.8}
  #allocation0 [shape = 'u32[]', space=smem, size = 0x4, offset = 0x4, fixed_abs, tag = 'smem constant byte address 0x4 - core index']
  #allocation1 [shape = 'u32[72,128]{1,0:T(1,128)}', space=vmem, size = 0x9000, scoped, tag = 'internal scratch']
  %s0 = inlined_call_operand.vmem [shape: f32[8,16], index: 0, kind: input, shape index: {}]
  %s1 = inlined_call_operand.vmem [shape: f32[16,48], index: 1, kind: input, shape index: {}]
  %s2 = inlined_call_operand.vmem [shape: f32[1,48], index: 2, kind: input, shape index: {}]
  %s3 = inlined_call_operand.vmem [shape: f32[8,48], index: 3, kind: output, shape index: {}]
  %s4 = sld [smem:[#allocation0]]
  $region22: #{jvp__.8} parent=0
    _
  %s6 = ssub.s32 1, %s4
  %s7 = scalar_select 0, %s6, %s4
  // Predicated region
  $region2: #{jvp__.8} parent=0 // pred_check
    _
  $region3: #{jvp__.8} parent=0 // pred_check_branch
    %9 = sbr.rel (0) target = $region5
  $region4: #{jvp__.8} parent=0 // pred_region
    _
  $region5: #{jvp__.8} parent=0 // pred_fallthru
    _
  // Predicated region
  $region6: #{jvp__.8} parent=0 // pred_check
    _
  $region7: #{jvp__.8} parent=0 // pred_check_branch
    %11 = sbr.rel (0) target = $region9
  $region8: #{jvp__.8} parent=0 // pred_region
    _
  $region9: #{jvp__.8} parent=0 // pred_fallthru
    _
  // Predicated region
  $region10: #{jvp__.8} parent=0 // pred_check
    _
  $region11: #{jvp__.8} parent=0 // pred_check_branch
    %13 = sbr.rel (0) target = $region13
  $region12: #{jvp__.8} parent=0 // pred_region
    _
  $region13: #{jvp__.8} parent=0 // pred_fallthru
    _
  %v14 = vld [vmem:[%s0] sm:$0xff]
  %v15 = vld [vmem:[%s1] sm:$0xff]
  %v16 = vld [vmem:[%s1 + $0x8] sm:$0xff]
  %v17 = vld [vmem:[%s2] sm:$0x1]
  %v19 = vperm.slane %v17, 0
  %vm21 = vcmask 130048
  %v23 = vsel %vm21, %v14, 0
  %25 = vmatpush.msra.mxu0 0.0
  %26 = vmatpush.msra.mxu0 0.0
  %27 = vmatpush.msra.mxu0 0.0
  %28 = vmatpush.msra.mxu0 0.0
  %29 = vmatpush.msra.mxu0 0.0
  %30 = vmatpush.msra.mxu0 0.0
  %31 = vmatpush.msra.mxu0 0.0
  %32 = vmatpush.msra.mxu0 0.0
  %33 = vmatpush.msra.mxu0 0.0
  %34 = vmatpush.msra.mxu0 0.0
  %35 = vmatpush.msra.mxu0 0.0
  %36 = vmatpush.msra.mxu0 0.0
  %37 = vmatpush.msra.mxu0 0.0
  %38 = vmatpush.msra.mxu0 0.0
  %39 = vmatpush.msra.mxu0 %v16
  %40 = vmatpush.msra.mxu0 %v15
  %41 = vmatmul.f32.gmra.mxu0 %v23
  %v42 = vpop.f32.mrf.mxu0
  %v43 = vadd.f32 %v19, %v42
  %44 = vdwg.mxu0
  %v45 = vxor.u32 %v43, 2147483648
  %v46 = vmul.f32 %v45, 1.442695
  %v47 = vpow.pop %v46
  %v48 = vadd.f32 %v47, 1.0
  %v49 = vrcp.pop %v48
  %v50 = vmul.f32 %v48, %v49
  %v51 = vsub.f32 1.0, %v50
  %v52 = vmul.f32 %v49, %v51
  %v53 = vadd.f32 %v49, %v52
  %vm54 = vweird.f32 %v48
  %vm55 = vweird.f32 %v49
  %vm56 = vmor %vm54, %vm55
  %v57 = vsel %vm56, %v49, %v53
  %v58 = vand.u32 2147483647, %v48
  %vm59 = vcmp.eq.f32.partialorder %v58, 8.507059e+37
  %v60 = vand.u32 %v48, 2147483648
  %v61 = vor.u32 1.1754944e-38, %v60
  %v62 = vsel %vm59, %v61, %v57
  %v63 = vmul.f32 1.0, %v62
  %v64 = vmul.f32 %v43, %v63
  %vm65 = vcmask 392192
  %66 = vst.msk [vmem:[%s3] sm:$0xff] %vm65, %v64
  // Predicated region
  $region14: #{jvp__.8} parent=0 // pred_check
    _
  $region15: #{jvp__.8} parent=0 // pred_check_branch
    %68 = sbr.rel (0) target = $region17
  $region16: #{jvp__.8} parent=0 // pred_region
    _
  $region17: #{jvp__.8} parent=0 // pred_fallthru
    _
  // Predicated region
  $region18: #{jvp__.8} parent=0 // pred_check
    _
  $region19: #{jvp__.8} parent=0 // pred_check_branch
    %70 = sbr.rel (0) target = $region21
  $region20: #{jvp__.8} parent=0 // pred_region
    _
  $region21: #{jvp__.8} parent=0 // pred_fallthru
    _

// kernel: jvp__.7
$region0: #{jvp__.7}
  #allocation0 [shape = 'u32[]', space=smem, size = 0x4, offset = 0x4, fixed_abs, tag = 'smem constant byte address 0x4 - core index']
  #allocation1 [shape = 'u32[72,128]{1,0:T(1,128)}', space=vmem, size = 0x9000, scoped, tag = 'internal scratch']
  %s0 = inlined_call_operand.vmem [shape: f32[24,3], index: 0, kind: input, shape index: {}]
  %s1 = inlined_call_operand.vmem [shape: f32[3,16], index: 1, kind: input, shape index: {}]
  %s2 = inlined_call_operand.vmem [shape: f32[1,16], index: 2, kind: input, shape index: {}]
  %s3 = inlined_call_operand.vmem [shape: f32[24,16], index: 3, kind: output, shape index: {}]
  %s4 = sld [smem:[#allocation0]]
  $region22: #{jvp__.7} parent=0
    _
  %s6 = ssub.s32 1, %s4
  %s7 = scalar_select 0, %s6, %s4
  // Predicated region
  $region2: #{jvp__.7} parent=0 // pred_check
    _
  $region3: #{jvp__.7} parent=0 // pred_check_branch
    %9 = sbr.rel (0) target = $region5
  $region4: #{jvp__.7} parent=0 // pred_region
    _
  $region5: #{jvp__.7} parent=0 // pred_fallthru
    _
  // Predicated region
  $region6: #{jvp__.7} parent=0 // pred_check
    _
  $region7: #{jvp__.7} parent=0 // pred_check_branch
    %11 = sbr.rel (0) target = $region9
  $region8: #{jvp__.7} parent=0 // pred_region
    _
  $region9: #{jvp__.7} parent=0 // pred_fallthru
    _
  // Predicated region
  $region10: #{jvp__.7} parent=0 // pred_check
    _
  $region11: #{jvp__.7} parent=0 // pred_check_branch
    %13 = sbr.rel (0) target = $region13
  $region12: #{jvp__.7} parent=0 // pred_region
    _
  $region13: #{jvp__.7} parent=0 // pred_fallthru
    _
  %v14 = vld [vmem:[%s0] sm:$0xff]
  %v15 = vld [vmem:[%s0 + $0x8] sm:$0xff]
  %v16 = vld [vmem:[%s0 + $0x10] sm:$0xff]
  %v17 = vld [vmem:[%s1] sm:$0x7]
  %v18 = vld [vmem:[%s2] sm:$0x1]
  %v20 = vperm.slane %v18, 0
  %vm22 = vcmask 23552
  %v24 = vsel %vm22, %v14, 0
  %v27 = vsel %vm22, %v15, 0
  %v30 = vsel %vm22, %v16, 0
  %vm32 = vcmask 1042432
  %v34 = vsel %vm32, %v17, 0
  %36 = vmatpush.msra.mxu0 0.0
  %37 = vmatpush.msra.mxu0 0.0
  %38 = vmatpush.msra.mxu0 0.0
  %39 = vmatpush.msra.mxu0 0.0
  %40 = vmatpush.msra.mxu0 0.0
  %41 = vmatpush.msra.mxu0 0.0
  %42 = vmatpush.msra.mxu0 0.0
  %43 = vmatpush.msra.mxu0 0.0
  %44 = vmatpush.msra.mxu0 0.0
  %45 = vmatpush.msra.mxu0 0.0
  %46 = vmatpush.msra.mxu0 0.0
  %47 = vmatpush.msra.mxu0 0.0
  %48 = vmatpush.msra.mxu0 0.0
  %49 = vmatpush.msra.mxu0 0.0
  %50 = vmatpush.msra.mxu0 0.0
  %51 = vmatpush.msra.mxu0 %v34
  %52 = vmatmul.f32.gmra.mxu0 %v24
  %v53 = vpop.f32.mrf.mxu0
  %v54 = vadd.f32 %v20, %v53
  %55 = vmatmul.f32.gmra.mxu0 %v27
  %v56 = vpop.f32.mrf.mxu0
  %v57 = vadd.f32 %v20, %v56
  %58 = vmatmul.f32.gmra.mxu0 %v30
  %v59 = vpop.f32.mrf.mxu0
  %v60 = vadd.f32 %v20, %v59
  %61 = vdwg.mxu0
  %v62 = vxor.u32 %v54, 2147483648
  %v63 = vxor.u32 %v57, 2147483648
  %v64 = vxor.u32 %v60, 2147483648
  %v65 = vmul.f32 %v62, 1.442695
  %v66 = vpow.pop %v65
  %v67 = vmul.f32 %v63, 1.442695
  %v68 = vpow.pop %v67
  %v69 = vmul.f32 %v64, 1.442695
  %v70 = vpow.pop %v69
  %v71 = vadd.f32 %v66, 1.0
  %v72 = vadd.f32 %v68, 1.0
  %v73 = vadd.f32 %v70, 1.0
  %v74 = vrcp.pop %v71
  %v75 = vmul.f32 %v71, %v74
  %v76 = vsub.f32 1.0, %v75
  %v77 = vmul.f32 %v74, %v76
  %v78 = vadd.f32 %v74, %v77
  %vm79 = vweird.f32 %v71
  %vm80 = vweird.f32 %v74
  %vm81 = vmor %vm79, %vm80
  %v82 = vsel %vm81, %v74, %v78
  %v83 = vand.u32 2147483647, %v71
  %vm84 = vcmp.eq.f32.partialorder %v83, 8.507059e+37
  %v85 = vand.u32 %v71, 2147483648
  %v86 = vor.u32 1.1754944e-38, %v85
  %v87 = vsel %vm84, %v86, %v82
  %v88 = vmul.f32 1.0, %v87
  %v89 = vrcp.pop %v72
  %v90 = vmul.f32 %v72, %v89
  %v91 = vsub.f32 1.0, %v90
  %v92 = vmul.f32 %v89, %v91
  %v93 = vadd.f32 %v89, %v92
  %vm94 = vweird.f32 %v72
  %vm95 = vweird.f32 %v89
  %vm96 = vmor %vm94, %vm95
  %v97 = vsel %vm96, %v89, %v93
  %v98 = vand.u32 2147483647, %v72
  %vm99 = vcmp.eq.f32.partialorder %v98, 8.507059e+37
  %v100 = vand.u32 %v72, 2147483648
  %v101 = vor.u32 1.1754944e-38, %v100
  %v102 = vsel %vm99, %v101, %v97
  %v103 = vmul.f32 1.0, %v102
  %v104 = vrcp.pop %v73
  %v105 = vmul.f32 %v73, %v104
  %v106 = vsub.f32 1.0, %v105
  %v107 = vmul.f32 %v104, %v106
  %v108 = vadd.f32 %v104, %v107
  %vm109 = vweird.f32 %v73
  %vm110 = vweird.f32 %v104
  %vm111 = vmor %vm109, %vm110
  %v112 = vsel %vm111, %v104, %v108
  %v113 = vand.u32 2147483647, %v73
  %vm114 = vcmp.eq.f32.partialorder %v113, 8.507059e+37
  %v115 = vand.u32 %v73, 2147483648
  %v116 = vor.u32 1.1754944e-38, %v115
  %v117 = vsel %vm114, %v116, %v112
  %v118 = vmul.f32 1.0, %v117
  %v119 = vmul.f32 %v54, %v88
  %v120 = vmul.f32 %v57, %v103
  %v121 = vmul.f32 %v60, %v118
  %vm122 = vcmask 130048
  %123 = vst.msk [vmem:[%s3] sm:$0xff] %vm122, %v119
  %124 = vst.msk [vmem:[%s3 + $0x8] sm:$0xff] %vm122, %v120
  %125 = vst.msk [vmem:[%s3 + $0x10] sm:$0xff] %vm122, %v121
  // Predicated region
  $region14: #{jvp__.7} parent=0 // pred_check
    _
  $region15: #{jvp__.7} parent=0 // pred_check_branch
    %127 = sbr.rel (0) target = $region17
  $region16: #{jvp__.7} parent=0 // pred_region
    _
  $region17: #{jvp__.7} parent=0 // pred_fallthru
    _
  // Predicated region
  $region18: #{jvp__.7} parent=0 // pred_check
    _
  $region19: #{jvp__.7} parent=0 // pred_check_branch
    %129 = sbr.rel (0) target = $region21
  $region20: #{jvp__.7} parent=0 // pred_region
    _
  $region21: #{jvp__.7} parent=0 // pred_fallthru
    _

// kernel: jvp__.9
$region0: #{jvp__.9}
  #allocation0 [shape = 'u32[]', space=smem, size = 0x4, offset = 0x4, fixed_abs, tag = 'smem constant byte address 0x4 - core index']
  #allocation1 [shape = 'u32[72,128]{1,0:T(1,128)}', space=vmem, size = 0x9000, scoped, tag = 'internal scratch']
  %s0 = inlined_call_operand.vmem [shape: f32[24,48], index: 0, kind: input, shape index: {}]
  %s1 = inlined_call_operand.vmem [shape: f32[48,32], index: 1, kind: input, shape index: {}]
  %s2 = inlined_call_operand.vmem [shape: f32[1,32], index: 2, kind: input, shape index: {}]
  %s3 = inlined_call_operand.vmem [shape: f32[24,16], index: 3, kind: input, shape index: {}, may-alias: {3,4}]
  %s4 = inlined_call_operand.vmem [shape: f32[24,16], index: 4, kind: output, shape index: {}, may-alias: {3,4}]
  %s5 = sld [smem:[#allocation0]]
  $region26: #{jvp__.9} parent=0
    _
  %s7 = ssub.s32 1, %s5
  %s8 = scalar_select 0, %s7, %s5
  // Predicated region
  $region2: #{jvp__.9} parent=0 // pred_check
    _
  $region3: #{jvp__.9} parent=0 // pred_check_branch
    %10 = sbr.rel (0) target = $region5
  $region4: #{jvp__.9} parent=0 // pred_region
    _
  $region5: #{jvp__.9} parent=0 // pred_fallthru
    _
  // Predicated region
  $region6: #{jvp__.9} parent=0 // pred_check
    _
  $region7: #{jvp__.9} parent=0 // pred_check_branch
    %12 = sbr.rel (0) target = $region9
  $region8: #{jvp__.9} parent=0 // pred_region
    _
  $region9: #{jvp__.9} parent=0 // pred_fallthru
    _
  // Predicated region
  $region10: #{jvp__.9} parent=0 // pred_check
    _
  $region11: #{jvp__.9} parent=0 // pred_check_branch
    %14 = sbr.rel (0) target = $region13
  $region12: #{jvp__.9} parent=0 // pred_region
    _
  $region13: #{jvp__.9} parent=0 // pred_fallthru
    _
  // Predicated region
  $region14: #{jvp__.9} parent=0 // pred_check
    _
  $region15: #{jvp__.9} parent=0 // pred_check_branch
    %16 = sbr.rel (0) target = $region17
  $region16: #{jvp__.9} parent=0 // pred_region
    _
  $region17: #{jvp__.9} parent=0 // pred_fallthru
    _
  %v17 = vld [vmem:[%s0] sm:$0xff]
  %v18 = vld [vmem:[%s0 + $0x8] sm:$0xff]
  %v19 = vld [vmem:[%s0 + $0x10] sm:$0xff]
  %v20 = vld [vmem:[%s1] sm:$0xff]
  %v21 = vld [vmem:[%s1 + $0x8] sm:$0xff]
  %v22 = vld [vmem:[%s1 + $0x10] sm:$0xff]
  %v23 = vld [vmem:[%s1 + $0x18] sm:$0xff]
  %v24 = vld [vmem:[%s1 + $0x20] sm:$0xff]
  %v25 = vld [vmem:[%s1 + $0x28] sm:$0xff]
  %v26 = vld [vmem:[%s2] sm:$0x1]
  %v28 = vperm.slane %v26, 0
  %vm30 = vcmask 392192
  %v32 = vsel %vm30, %v17, 0
  %v35 = vsel %vm30, %v18, 0
  %v38 = vsel %vm30, %v19, 0
  %40 = vmatpush.msra.mxu0 0.0
  %41 = vmatpush.msra.mxu0 0.0
  %42 = vmatpush.msra.mxu0 0.0
  %43 = vmatpush.msra.mxu0 0.0
  %44 = vmatpush.msra.mxu0 0.0
  %45 = vmatpush.msra.mxu0 0.0
  %46 = vmatpush.msra.mxu0 0.0
  %47 = vmatpush.msra.mxu0 0.0
  %48 = vmatpush.msra.mxu0 0.0
  %49 = vmatpush.msra.mxu0 0.0
  %50 = vmatpush.msra.mxu0 %v25
  %51 = vmatpush.msra.mxu0 %v24
  %52 = vmatpush.msra.mxu0 %v23
  %53 = vmatpush.msra.mxu0 %v22
  %54 = vmatpush.msra.mxu0 %v21
  %55 = vmatpush.msra.mxu0 %v20
  %56 = vmatmul.f32.gmra.mxu0 %v32
  %v57 = vpop.f32.mrf.mxu0
  %v58 = vadd.f32 %v28, %v57
  %59 = vmatmul.f32.gmra.mxu0 %v35
  %v60 = vpop.f32.mrf.mxu0
  %v61 = vadd.f32 %v28, %v60
  %62 = vmatmul.f32.gmra.mxu0 %v38
  %v63 = vpop.f32.mrf.mxu0
  %v64 = vadd.f32 %v28, %v63
  %65 = vdwg.mxu0
  %v66 = vxor.u32 %v58, 2147483648
  %v67 = vxor.u32 %v61, 2147483648
  %v68 = vxor.u32 %v64, 2147483648
  %v69 = vmul.f32 %v66, 1.442695
  %v70 = vpow.pop %v69
  %v71 = vmul.f32 %v67, 1.442695
  %v72 = vpow.pop %v71
  %v73 = vmul.f32 %v68, 1.442695
  %v74 = vpow.pop %v73
  %v75 = vadd.f32 %v70, 1.0
  %v76 = vadd.f32 %v72, 1.0
  %v77 = vadd.f32 %v74, 1.0
  %v78 = vrcp.pop %v75
  %v79 = vmul.f32 %v75, %v78
  %v80 = vsub.f32 1.0, %v79
  %v81 = vmul.f32 %v78, %v80
  %v82 = vadd.f32 %v78, %v81
  %vm83 = vweird.f32 %v75
  %vm84 = vweird.f32 %v78
  %vm85 = vmor %vm83, %vm84
  %v86 = vsel %vm85, %v78, %v82
  %v87 = vand.u32 2147483647, %v75
  %vm88 = vcmp.eq.f32.partialorder %v87, 8.507059e+37
  %v89 = vand.u32 %v75, 2147483648
  %v90 = vor.u32 1.1754944e-38, %v89
  %v91 = vsel %vm88, %v90, %v86
  %v92 = vmul.f32 1.0, %v91
  %v93 = vrcp.pop %v76
  %v94 = vmul.f32 %v76, %v93
  %v95 = vsub.f32 1.0, %v94
  %v96 = vmul.f32 %v93, %v95
  %v97 = vadd.f32 %v93, %v96
  %vm98 = vweird.f32 %v76
  %vm99 = vweird.f32 %v93
  %vm100 = vmor %vm98, %vm99
  %v101 = vsel %vm100, %v93, %v97
  %v102 = vand.u32 2147483647, %v76
  %vm103 = vcmp.eq.f32.partialorder %v102, 8.507059e+37
  %v104 = vand.u32 %v76, 2147483648
  %v105 = vor.u32 1.1754944e-38, %v104
  %v106 = vsel %vm103, %v105, %v101
  %v107 = vmul.f32 1.0, %v106
  %v108 = vrcp.pop %v77
  %v109 = vmul.f32 %v77, %v108
  %v110 = vsub.f32 1.0, %v109
  %v111 = vmul.f32 %v108, %v110
  %v112 = vadd.f32 %v108, %v111
  %vm113 = vweird.f32 %v77
  %vm114 = vweird.f32 %v108
  %vm115 = vmor %vm113, %vm114
  %v116 = vsel %vm115, %v108, %v112
  %v117 = vand.u32 2147483647, %v77
  %vm118 = vcmp.eq.f32.partialorder %v117, 8.507059e+37
  %v119 = vand.u32 %v77, 2147483648
  %v120 = vor.u32 1.1754944e-38, %v119
  %v121 = vsel %vm118, %v120, %v116
  %v122 = vmul.f32 1.0, %v121
  %v123 = vmul.f32 %v58, %v92
  %v124 = vmul.f32 %v61, %v107
  %v125 = vmul.f32 %v64, %v122
  %129 = vrot.lane.b32.xlu0 %v123, 112
  %v130 = vpop.permute.xlu0 %129
  %131 = vrot.lane.b32.xlu0 %v124, 112
  %v132 = vpop.permute.xlu0 %131
  %133 = vrot.lane.b32.xlu0 %v125, 112
  %v134 = vpop.permute.xlu0 %133
  %v138 = vmul.f32 %v92, %v130
  %v139 = vmul.f32 %v107, %v132
  %v140 = vmul.f32 %v122, %v134
  %v141 = vld [vmem:[%s3] sm:$0xff]
  %v142 = vld [vmem:[%s3 + $0x8] sm:$0xff]
  %v143 = vld [vmem:[%s3 + $0x10] sm:$0xff]
  %v144 = vadd.f32 %v138, %v141
  %v145 = vadd.f32 %v139, %v142
  %v146 = vadd.f32 %v140, %v143
  %vm147 = vcmask 130048
  %148 = vst.msk [vmem:[%s4] sm:$0xff] %vm147, %v144
  %149 = vst.msk [vmem:[%s4 + $0x8] sm:$0xff] %vm147, %v145
  %150 = vst.msk [vmem:[%s4 + $0x10] sm:$0xff] %vm147, %v146
  // Predicated region
  $region18: #{jvp__.9} parent=0 // pred_check
    _
  $region19: #{jvp__.9} parent=0 // pred_check_branch
    %152 = sbr.rel (0) target = $region21
  $region20: #{jvp__.9} parent=0 // pred_region
    _
  $region21: #{jvp__.9} parent=0 // pred_fallthru
    _
  // Predicated region
  $region22: #{jvp__.9} parent=0 // pred_check
    _
  $region23: #{jvp__.9} parent=0 // pred_check_branch
    %154 = sbr.rel (0) target = $region25
  $region24: #{jvp__.9} parent=0 // pred_region
    _
  $region25: #{jvp__.9} parent=0 // pred_fallthru
    _

// kernel: jvp__.10
$region0: #{jvp__.10}
  #allocation0 [shape = 'u32[]', space=smem, size = 0x4, offset = 0x4, fixed_abs, tag = 'smem constant byte address 0x4 - core index']
  #allocation1 [shape = 'u32[72,128]{1,0:T(1,128)}', space=vmem, size = 0x9000, scoped, tag = 'internal scratch']
  %s0 = inlined_call_operand.vmem [shape: f32[24,16], index: 0, kind: input, shape index: {}]
  %s1 = inlined_call_operand.vmem [shape: f32[24,16], index: 1, kind: input, shape index: {}]
  %s2 = inlined_call_operand.vmem [shape: f32[24,16], index: 2, kind: input, shape index: {}]
  %s3 = inlined_call_operand.vmem [shape: f32[48,32], index: 3, kind: input, shape index: {}]
  %s4 = inlined_call_operand.vmem [shape: f32[1,32], index: 4, kind: input, shape index: {}]
  %s5 = inlined_call_operand.vmem [shape: f32[16,32], index: 5, kind: input, shape index: {}]
  %s6 = inlined_call_operand.vmem [shape: f32[1,32], index: 6, kind: input, shape index: {}]
  %s7 = inlined_call_operand.vmem [shape: f32[24,16], index: 7, kind: output, shape index: {0}]
  %s8 = inlined_call_operand.vmem [shape: f32[24,16], index: 8, kind: output, shape index: {1}]
  %9 = xla_tuple %s7, %s8
  %s10 = sld [smem:[#allocation0]]
  $region46: #{jvp__.10} parent=0
    _
  %s12 = ssub.s32 1, %s10
  %s13 = scalar_select 0, %s12, %s10
  // Predicated region
  $region2: #{jvp__.10} parent=0 // pred_check
    _
  $region3: #{jvp__.10} parent=0 // pred_check_branch
    %15 = sbr.rel (0) target = $region5
  $region4: #{jvp__.10} parent=0 // pred_region
    _
  $region5: #{jvp__.10} parent=0 // pred_fallthru
    _
  // Predicated region
  $region6: #{jvp__.10} parent=0 // pred_check
    _
  $region7: #{jvp__.10} parent=0 // pred_check_branch
    %17 = sbr.rel (0) target = $region9
  $region8: #{jvp__.10} parent=0 // pred_region
    _
  $region9: #{jvp__.10} parent=0 // pred_fallthru
    _
  // Predicated region
  $region10: #{jvp__.10} parent=0 // pred_check
    _
  $region11: #{jvp__.10} parent=0 // pred_check_branch
    %19 = sbr.rel (0) target = $region13
  $region12: #{jvp__.10} parent=0 // pred_region
    _
  $region13: #{jvp__.10} parent=0 // pred_fallthru
    _
  // Predicated region
  $region14: #{jvp__.10} parent=0 // pred_check
    _
  $region15: #{jvp__.10} parent=0 // pred_check_branch
    %21 = sbr.rel (0) target = $region17
  $region16: #{jvp__.10} parent=0 // pred_region
    _
  $region17: #{jvp__.10} parent=0 // pred_fallthru
    _
  // Predicated region
  $region18: #{jvp__.10} parent=0 // pred_check
    _
  $region19: #{jvp__.10} parent=0 // pred_check_branch
    %23 = sbr.rel (0) target = $region21
  $region20: #{jvp__.10} parent=0 // pred_region
    _
  $region21: #{jvp__.10} parent=0 // pred_fallthru
    _
  // Predicated region
  $region22: #{jvp__.10} parent=0 // pred_check
    _
  $region23: #{jvp__.10} parent=0 // pred_check_branch
    %25 = sbr.rel (0) target = $region25
  $region24: #{jvp__.10} parent=0 // pred_region
    _
  $region25: #{jvp__.10} parent=0 // pred_fallthru
    _
  // Predicated region
  $region26: #{jvp__.10} parent=0 // pred_check
    _
  $region27: #{jvp__.10} parent=0 // pred_check_branch
    %27 = sbr.rel (0) target = $region29
  $region28: #{jvp__.10} parent=0 // pred_region
    _
  $region29: #{jvp__.10} parent=0 // pred_fallthru
    _
  %v28 = vld [vmem:[%s0] sm:$0xff]
  %v29 = vld [vmem:[%s0 + $0x8] sm:$0xff]
  %v30 = vld [vmem:[%s0 + $0x10] sm:$0xff]
  %v31 = vld [vmem:[%s3] sm:$0xff]
  %v32 = vld [vmem:[%s3 + $0x8] sm:$0xff]
  %v33 = vld [vmem:[%s1] sm:$0xff]
  %v34 = vld [vmem:[%s1 + $0x8] sm:$0xff]
  %v35 = vld [vmem:[%s1 + $0x10] sm:$0xff]
  %v36 = vld [vmem:[%s3 + $0x10] sm:$0xff]
  %v37 = vld [vmem:[%s3 + $0x18] sm:$0xff]
  %vm38 = vcmask 130048
  %v40 = vsel %vm38, %v33, 0
  %v43 = vsel %vm38, %v34, 0
  %v46 = vsel %vm38, %v35, 0
  %48 = vmatpush.msra.mxu0 0.0
  %49 = vmatpush.msra.mxu0 0.0
  %50 = vmatpush.msra.mxu0 0.0
  %51 = vmatpush.msra.mxu0 0.0
  %52 = vmatpush.msra.mxu0 0.0
  %53 = vmatpush.msra.mxu0 0.0
  %54 = vmatpush.msra.mxu0 0.0
  %55 = vmatpush.msra.mxu0 0.0
  %56 = vmatpush.msra.mxu0 0.0
  %57 = vmatpush.msra.mxu0 0.0
  %58 = vmatpush.msra.mxu0 0.0
  %59 = vmatpush.msra.mxu0 0.0
  %60 = vmatpush.msra.mxu0 0.0
  %61 = vmatpush.msra.mxu0 0.0
  %62 = vmatpush.msra.mxu0 %v37
  %63 = vmatpush.msra.mxu0 %v36
  %64 = vmatmul.f32.gmra.mxu0 %v40
  %v65 = vpop.f32.mrf.mxu0
  %v66 = vadd.f32 0.0, %v65
  %67 = vmatmul.f32.gmra.mxu0 %v43
  %v68 = vpop.f32.mrf.mxu0
  %v69 = vadd.f32 0.0, %v68
  %70 = vmatmul.f32.gmra.mxu0 %v46
  %v71 = vpop.f32.mrf.mxu0
  %v72 = vadd.f32 0.0, %v71
  %73 = vdwg.mxu0
  %v75 = vsel %vm38, %v28, 0
  %v78 = vsel %vm38, %v29, 0
  %v81 = vsel %vm38, %v30, 0
  %83 = vmatpush.msra.mxu0 0.0
  %84 = vmatpush.msra.mxu0 0.0
  %85 = vmatpush.msra.mxu0 0.0
  %86 = vmatpush.msra.mxu0 0.0
  %87 = vmatpush.msra.mxu0 0.0
  %88 = vmatpush.msra.mxu0 0.0
  %89 = vmatpush.msra.mxu0 0.0
  %90 = vmatpush.msra.mxu0 0.0
  %91 = vmatpush.msra.mxu0 0.0
  %92 = vmatpush.msra.mxu0 0.0
  %93 = vmatpush.msra.mxu0 0.0
  %94 = vmatpush.msra.mxu0 0.0
  %95 = vmatpush.msra.mxu0 0.0
  %96 = vmatpush.msra.mxu0 0.0
  %97 = vmatpush.msra.mxu0 %v32
  %98 = vmatpush.msra.mxu0 %v31
  %99 = vmatmul.f32.gmra.mxu0 %v75
  %v100 = vpop.f32.mrf.mxu0
  %v101 = vadd.f32 %v66, %v100
  %102 = vmatmul.f32.gmra.mxu0 %v78
  %v103 = vpop.f32.mrf.mxu0
  %v104 = vadd.f32 %v69, %v103
  %105 = vmatmul.f32.gmra.mxu0 %v81
  %v106 = vpop.f32.mrf.mxu0
  %v107 = vadd.f32 %v72, %v106
  %108 = vdwg.mxu0
  %v109 = vld [vmem:[%s2] sm:$0xff]
  %v110 = vld [vmem:[%s2 + $0x8] sm:$0xff]
  %v111 = vld [vmem:[%s2 + $0x10] sm:$0xff]
  %v112 = vld [vmem:[%s3 + $0x20] sm:$0xff]
  %v113 = vld [vmem:[%s3 + $0x28] sm:$0xff]
  %v115 = vsel %vm38, %v109, 0
  %v118 = vsel %vm38, %v110, 0
  %v121 = vsel %vm38, %v111, 0
  %123 = vmatpush.msra.mxu0 0.0
  %124 = vmatpush.msra.mxu0 0.0
  %125 = vmatpush.msra.mxu0 0.0
  %126 = vmatpush.msra.mxu0 0.0
  %127 = vmatpush.msra.mxu0 0.0
  %128 = vmatpush.msra.mxu0 0.0
  %129 = vmatpush.msra.mxu0 0.0
  %130 = vmatpush.msra.mxu0 0.0
  %131 = vmatpush.msra.mxu0 0.0
  %132 = vmatpush.msra.mxu0 0.0
  %133 = vmatpush.msra.mxu0 0.0
  %134 = vmatpush.msra.mxu0 0.0
  %135 = vmatpush.msra.mxu0 0.0
  %136 = vmatpush.msra.mxu0 0.0
  %137 = vmatpush.msra.mxu0 %v113
  %138 = vmatpush.msra.mxu0 %v112
  %139 = vmatmul.f32.gmra.mxu0 %v115
  %v140 = vpop.f32.mrf.mxu0
  %v141 = vadd.f32 0.0, %v140
  %142 = vmatmul.f32.gmra.mxu0 %v118
  %v143 = vpop.f32.mrf.mxu0
  %v144 = vadd.f32 0.0, %v143
  %145 = vmatmul.f32.gmra.mxu0 %v121
  %v146 = vpop.f32.mrf.mxu0
  %v147 = vadd.f32 0.0, %v146
  %148 = vdwg.mxu0
  %v149 = vadd.f32 %v101, %v141
  %v150 = vadd.f32 %v104, %v144
  %v151 = vadd.f32 %v107, %v147
  %v152 = vld [vmem:[%s4] sm:$0x1]
  %v154 = vperm.slane %v152, 0
  %v156 = vadd.f32 %v149, %v154
  %v157 = vadd.f32 %v150, %v154
  %v158 = vadd.f32 %v151, %v154
  %v159 = vxor.u32 %v156, 2147483648
  %v160 = vxor.u32 %v157, 2147483648
  %v161 = vxor.u32 %v158, 2147483648
  %v162 = vmul.f32 %v159, 1.442695
  %v163 = vpow.pop %v162
  %v164 = vmul.f32 %v160, 1.442695
  %v165 = vpow.pop %v164
  %v166 = vmul.f32 %v161, 1.442695
  %v167 = vpow.pop %v166
  %v168 = vadd.f32 %v163, 1.0
  %v169 = vadd.f32 %v165, 1.0
  %v170 = vadd.f32 %v167, 1.0
  %v171 = vrcp.pop %v168
  %v172 = vmul.f32 %v168, %v171
  %v173 = vsub.f32 1.0, %v172
  %v174 = vmul.f32 %v171, %v173
  %v175 = vadd.f32 %v171, %v174
  %vm176 = vweird.f32 %v168
  %vm177 = vweird.f32 %v171
  %vm178 = vmor %vm176, %vm177
  %v179 = vsel %vm178, %v171, %v175
  %v180 = vand.u32 2147483647, %v168
  %vm181 = vcmp.eq.f32.partialorder %v180, 8.507059e+37
  %v182 = vand.u32 %v168, 2147483648
  %v183 = vor.u32 1.1754944e-38, %v182
  %v184 = vsel %vm181, %v183, %v179
  %v185 = vmul.f32 1.0, %v184
  %v186 = vrcp.pop %v169
  %v187 = vmul.f32 %v169, %v186
  %v188 = vsub.f32 1.0, %v187
  %v189 = vmul.f32 %v186, %v188
  %v190 = vadd.f32 %v186, %v189
  %vm191 = vweird.f32 %v169
  %vm192 = vweird.f32 %v186
  %vm193 = vmor %vm191, %vm192
  %v194 = vsel %vm193, %v186, %v190
  %v195 = vand.u32 2147483647, %v169
  %vm196 = vcmp.eq.f32.partialorder %v195, 8.507059e+37
  %v197 = vand.u32 %v169, 2147483648
  %v198 = vor.u32 1.1754944e-38, %v197
  %v199 = vsel %vm196, %v198, %v194
  %v200 = vmul.f32 1.0, %v199
  %v201 = vrcp.pop %v170
  %v202 = vmul.f32 %v170, %v201
  %v203 = vsub.f32 1.0, %v202
  %v204 = vmul.f32 %v201, %v203
  %v205 = vadd.f32 %v201, %v204
  %vm206 = vweird.f32 %v170
  %vm207 = vweird.f32 %v201
  %vm208 = vmor %vm206, %vm207
  %v209 = vsel %vm208, %v201, %v205
  %v210 = vand.u32 2147483647, %v170
  %vm211 = vcmp.eq.f32.partialorder %v210, 8.507059e+37
  %v212 = vand.u32 %v170, 2147483648
  %v213 = vor.u32 1.1754944e-38, %v212
  %v214 = vsel %vm211, %v213, %v209
  %v215 = vmul.f32 1.0, %v214
  %v216 = vmul.f32 %v156, %v185
  %v217 = vmul.f32 %v157, %v200
  %v218 = vmul.f32 %v158, %v215
  %222 = vrot.lane.b32.xlu0 %v216, 112
  %v223 = vpop.permute.xlu0 %222
  %224 = vrot.lane.b32.xlu0 %v217, 112
  %v225 = vpop.permute.xlu0 %224
  %226 = vrot.lane.b32.xlu0 %v218, 112
  %v227 = vpop.permute.xlu0 %226
  %v231 = vmul.f32 %v185, %v223
  %v232 = vmul.f32 %v200, %v225
  %v233 = vmul.f32 %v215, %v227
  %v234 = vld [vmem:[%s5] sm:$0xff]
  %v235 = vld [vmem:[%s5 + $0x8] sm:$0xff]
  %v236 = vld [vmem:[%s6] sm:$0x1]
  %v238 = vperm.slane %v236, 0
  %v241 = vsel %vm38, %v231, 0
  %v244 = vsel %vm38, %v232, 0
  %v247 = vsel %vm38, %v233, 0
  %249 = vmatpush.msra.mxu0 0.0
  %250 = vmatpush.msra.mxu0 0.0
  %251 = vmatpush.msra.mxu0 0.0
  %252 = vmatpush.msra.mxu0 0.0
  %253 = vmatpush.msra.mxu0 0.0
  %254 = vmatpush.msra.mxu0 0.0
  %255 = vmatpush.msra.mxu0 0.0
  %256 = vmatpush.msra.mxu0 0.0
  %257 = vmatpush.msra.mxu0 0.0
  %258 = vmatpush.msra.mxu0 0.0
  %259 = vmatpush.msra.mxu0 0.0
  %260 = vmatpush.msra.mxu0 0.0
  %261 = vmatpush.msra.mxu0 0.0
  %262 = vmatpush.msra.mxu0 0.0
  %263 = vmatpush.msra.mxu0 %v235
  %264 = vmatpush.msra.mxu0 %v234
  %265 = vmatmul.f32.gmra.mxu0 %v241
  %v266 = vpop.f32.mrf.mxu0
  %v267 = vadd.f32 %v238, %v266
  %268 = vmatmul.f32.gmra.mxu0 %v244
  %v269 = vpop.f32.mrf.mxu0
  %v270 = vadd.f32 %v238, %v269
  %271 = vmatmul.f32.gmra.mxu0 %v247
  %v272 = vpop.f32.mrf.mxu0
  %v273 = vadd.f32 %v238, %v272
  %274 = vdwg.mxu0
  %v275 = vxor.u32 %v267, 2147483648
  %v276 = vxor.u32 %v270, 2147483648
  %v277 = vxor.u32 %v273, 2147483648
  %v278 = vmul.f32 %v275, 1.442695
  %v279 = vpow.pop %v278
  %v280 = vmul.f32 %v276, 1.442695
  %v281 = vpow.pop %v280
  %v282 = vmul.f32 %v277, 1.442695
  %v283 = vpow.pop %v282
  %v284 = vadd.f32 %v279, 1.0
  %v285 = vadd.f32 %v281, 1.0
  %v286 = vadd.f32 %v283, 1.0
  %v287 = vrcp.pop %v284
  %v288 = vmul.f32 %v284, %v287
  %v289 = vsub.f32 1.0, %v288
  %v290 = vmul.f32 %v287, %v289
  %v291 = vadd.f32 %v287, %v290
  %vm292 = vweird.f32 %v284
  %vm293 = vweird.f32 %v287
  %vm294 = vmor %vm292, %vm293
  %v295 = vsel %vm294, %v287, %v291
  %v296 = vand.u32 2147483647, %v284
  %vm297 = vcmp.eq.f32.partialorder %v296, 8.507059e+37
  %v298 = vand.u32 %v284, 2147483648
  %v299 = vor.u32 1.1754944e-38, %v298
  %v300 = vsel %vm297, %v299, %v295
  %v301 = vmul.f32 1.0, %v300
  %v302 = vrcp.pop %v285
  %v303 = vmul.f32 %v285, %v302
  %v304 = vsub.f32 1.0, %v303
  %v305 = vmul.f32 %v302, %v304
  %v306 = vadd.f32 %v302, %v305
  %vm307 = vweird.f32 %v285
  %vm308 = vweird.f32 %v302
  %vm309 = vmor %vm307, %vm308
  %v310 = vsel %vm309, %v302, %v306
  %v311 = vand.u32 2147483647, %v285
  %vm312 = vcmp.eq.f32.partialorder %v311, 8.507059e+37
  %v313 = vand.u32 %v285, 2147483648
  %v314 = vor.u32 1.1754944e-38, %v313
  %v315 = vsel %vm312, %v314, %v310
  %v316 = vmul.f32 1.0, %v315
  %v317 = vrcp.pop %v286
  %v318 = vmul.f32 %v286, %v317
  %v319 = vsub.f32 1.0, %v318
  %v320 = vmul.f32 %v317, %v319
  %v321 = vadd.f32 %v317, %v320
  %vm322 = vweird.f32 %v286
  %vm323 = vweird.f32 %v317
  %vm324 = vmor %vm322, %vm323
  %v325 = vsel %vm324, %v317, %v321
  %v326 = vand.u32 2147483647, %v286
  %vm327 = vcmp.eq.f32.partialorder %v326, 8.507059e+37
  %v328 = vand.u32 %v286, 2147483648
  %v329 = vor.u32 1.1754944e-38, %v328
  %v330 = vsel %vm327, %v329, %v325
  %v331 = vmul.f32 1.0, %v330
  %332 = vst.msk [vmem:[%s7] sm:$0xff] %vm38, %v231
  %333 = vst.msk [vmem:[%s7 + $0x8] sm:$0xff] %vm38, %v232
  %334 = vst.msk [vmem:[%s7 + $0x10] sm:$0xff] %vm38, %v233
  %v335 = vmul.f32 %v267, %v301
  %v336 = vmul.f32 %v270, %v316
  %v337 = vmul.f32 %v273, %v331
  %341 = vrot.lane.b32.xlu0 %v335, 112
  %v342 = vpop.permute.xlu0 %341
  %343 = vrot.lane.b32.xlu0 %v336, 112
  %v344 = vpop.permute.xlu0 %343
  %345 = vrot.lane.b32.xlu0 %v337, 112
  %v346 = vpop.permute.xlu0 %345
  %v350 = vmul.f32 %v301, %v342
  %v351 = vmul.f32 %v316, %v344
  %v352 = vmul.f32 %v331, %v346
  %353 = vst.msk [vmem:[%s8] sm:$0xff] %vm38, %v350
  %354 = vst.msk [vmem:[%s8 + $0x8] sm:$0xff] %vm38, %v351
  %355 = vst.msk [vmem:[%s8 + $0x10] sm:$0xff] %vm38, %v352
  // Predicated region
  $region30: #{jvp__.10} parent=0 // pred_check
    _
  $region31: #{jvp__.10} parent=0 // pred_check_branch
    %357 = sbr.rel (0) target = $region33
  $region32: #{jvp__.10} parent=0 // pred_region
    _
  $region33: #{jvp__.10} parent=0 // pred_fallthru
    _
  // Predicated region
  $region34: #{jvp__.10} parent=0 // pred_check
    _
  $region35: #{jvp__.10} parent=0 // pred_check_branch
    %359 = sbr.rel (0) target = $region37
  $region36: #{jvp__.10} parent=0 // pred_region
    _
  $region37: #{jvp__.10} parent=0 // pred_fallthru
    _
  // Predicated region
  $region38: #{jvp__.10} parent=0 // pred_check
    _
  $region39: #{jvp__.10} parent=0 // pred_check_branch
    %361 = sbr.rel (0) target = $region41
  $region40: #{jvp__.10} parent=0 // pred_region
    _
  $region41: #{jvp__.10} parent=0 // pred_fallthru
    _
  // Predicated region
  $region42: #{jvp__.10} parent=0 // pred_check
    _
  $region43: #{jvp__.10} parent=0 // pred_check_branch
    %363 = sbr.rel (0) target = $region45
  $region44: #{jvp__.10} parent=0 // pred_region
    _
  $region45: #{jvp__.10} parent=0 // pred_fallthru
    _

// kernel: jvp__.13
$region0: #{jvp__.13}
  #allocation0 [shape = 'u32[]', space=smem, size = 0x4, offset = 0x4, fixed_abs, tag = 'smem constant byte address 0x4 - core index']
  #allocation1 [shape = 'u32[72,128]{1,0:T(1,128)}', space=vmem, size = 0x9000, scoped, tag = 'internal scratch']
  %s0 = inlined_call_operand.vmem [shape: f32[24,16], index: 0, kind: input, shape index: {}]
  %s1 = inlined_call_operand.vmem [shape: f32[24,16], index: 1, kind: input, shape index: {}]
  %s2 = inlined_call_operand.vmem [shape: f32[24,16], index: 2, kind: input, shape index: {}]
  %s3 = inlined_call_operand.vmem [shape: f32[48,32], index: 3, kind: input, shape index: {}]
  %s4 = inlined_call_operand.vmem [shape: f32[1,32], index: 4, kind: input, shape index: {}]
  %s5 = inlined_call_operand.vmem [shape: f32[16,32], index: 5, kind: input, shape index: {}]
  %s6 = inlined_call_operand.vmem [shape: f32[1,32], index: 6, kind: input, shape index: {}]
  %s7 = inlined_call_operand.hbm [shape: f32[24,16], index: 7, kind: output, shape index: {0}]
  %s8 = inlined_call_operand.vmem [shape: f32[24,16], index: 8, kind: output, shape index: {1}]
  %9 = xla_tuple %s7, %s8
  %s10 = sld [smem:[#allocation0]]
  $region46: #{jvp__.13} parent=0
    _
  %s12 = ssub.s32 1, %s10
  %s13 = scalar_select 0, %s12, %s10
  $region1: #{jvp__.13} parent=0
    #allocation2 [shape = 'u8[12288]{0}', space=vmem, size = 0x3000, scoped, tag = 'output window, operand 0, single buffered']
    #allocation3 [shape = 's32[1]{0}', space=sflag, size = 0x4, scoped, tag = 'scoped memory for jvp__.13']
    %14 = vsyncpa [#allocation3], 0
    // Predicated region
    $region2: #{jvp__.13} parent=1 // pred_check
      _
    $region3: #{jvp__.13} parent=1 // pred_check_branch
      %16 = sbr.rel (0) target = $region5
    $region4: #{jvp__.13} parent=1 // pred_region
      _
    $region5: #{jvp__.13} parent=1 // pred_fallthru
      _
    // Predicated region
    $region6: #{jvp__.13} parent=1 // pred_check
      _
    $region7: #{jvp__.13} parent=1 // pred_check_branch
      %18 = sbr.rel (0) target = $region9
    $region8: #{jvp__.13} parent=1 // pred_region
      _
    $region9: #{jvp__.13} parent=1 // pred_fallthru
      _
    // Predicated region
    $region10: #{jvp__.13} parent=1 // pred_check
      _
    $region11: #{jvp__.13} parent=1 // pred_check_branch
      %20 = sbr.rel (0) target = $region13
    $region12: #{jvp__.13} parent=1 // pred_region
      _
    $region13: #{jvp__.13} parent=1 // pred_fallthru
      _
    // Predicated region
    $region14: #{jvp__.13} parent=1 // pred_check
      _
    $region15: #{jvp__.13} parent=1 // pred_check_branch
      %22 = sbr.rel (0) target = $region17
    $region16: #{jvp__.13} parent=1 // pred_region
      _
    $region17: #{jvp__.13} parent=1 // pred_fallthru
      _
    // Predicated region
    $region18: #{jvp__.13} parent=1 // pred_check
      _
    $region19: #{jvp__.13} parent=1 // pred_check_branch
      %24 = sbr.rel (0) target = $region21
    $region20: #{jvp__.13} parent=1 // pred_region
      _
    $region21: #{jvp__.13} parent=1 // pred_fallthru
      _
    // Predicated region
    $region22: #{jvp__.13} parent=1 // pred_check
      _
    $region23: #{jvp__.13} parent=1 // pred_check_branch
      %26 = sbr.rel (0) target = $region25
    $region24: #{jvp__.13} parent=1 // pred_region
      _
    $region25: #{jvp__.13} parent=1 // pred_fallthru
      _
    // Predicated region
    $region26: #{jvp__.13} parent=1 // pred_check
      _
    $region27: #{jvp__.13} parent=1 // pred_check_branch
      %28 = sbr.rel (0) target = $region29
    $region28: #{jvp__.13} parent=1 // pred_region
      _
    $region29: #{jvp__.13} parent=1 // pred_fallthru
      _
    %v29 = vld [vmem:[%s0] sm:$0xff]
    %v30 = vld [vmem:[%s0 + $0x8] sm:$0xff]
    %v31 = vld [vmem:[%s0 + $0x10] sm:$0xff]
    %v32 = vld [vmem:[%s3] sm:$0xff]
    %v33 = vld [vmem:[%s3 + $0x8] sm:$0xff]
    %v34 = vld [vmem:[%s1] sm:$0xff]
    %v35 = vld [vmem:[%s1 + $0x8] sm:$0xff]
    %v36 = vld [vmem:[%s1 + $0x10] sm:$0xff]
    %v37 = vld [vmem:[%s3 + $0x10] sm:$0xff]
    %v38 = vld [vmem:[%s3 + $0x18] sm:$0xff]
    %vm39 = vcmask 130048
    %v41 = vsel %vm39, %v34, 0
    %v44 = vsel %vm39, %v35, 0
    %v47 = vsel %vm39, %v36, 0
    %49 = vmatpush.msra.mxu0 0.0
    %50 = vmatpush.msra.mxu0 0.0
    %51 = vmatpush.msra.mxu0 0.0
    %52 = vmatpush.msra.mxu0 0.0
    %53 = vmatpush.msra.mxu0 0.0
    %54 = vmatpush.msra.mxu0 0.0
    %55 = vmatpush.msra.mxu0 0.0
    %56 = vmatpush.msra.mxu0 0.0
    %57 = vmatpush.msra.mxu0 0.0
    %58 = vmatpush.msra.mxu0 0.0
    %59 = vmatpush.msra.mxu0 0.0
    %60 = vmatpush.msra.mxu0 0.0
    %61 = vmatpush.msra.mxu0 0.0
    %62 = vmatpush.msra.mxu0 0.0
    %63 = vmatpush.msra.mxu0 %v38
    %64 = vmatpush.msra.mxu0 %v37
    %65 = vmatmul.f32.gmra.mxu0 %v41
    %v66 = vpop.f32.mrf.mxu0
    %v67 = vadd.f32 0.0, %v66
    %68 = vmatmul.f32.gmra.mxu0 %v44
    %v69 = vpop.f32.mrf.mxu0
    %v70 = vadd.f32 0.0, %v69
    %71 = vmatmul.f32.gmra.mxu0 %v47
    %v72 = vpop.f32.mrf.mxu0
    %v73 = vadd.f32 0.0, %v72
    %74 = vdwg.mxu0
    %v76 = vsel %vm39, %v29, 0
    %v79 = vsel %vm39, %v30, 0
    %v82 = vsel %vm39, %v31, 0
    %84 = vmatpush.msra.mxu0 0.0
    %85 = vmatpush.msra.mxu0 0.0
    %86 = vmatpush.msra.mxu0 0.0
    %87 = vmatpush.msra.mxu0 0.0
    %88 = vmatpush.msra.mxu0 0.0
    %89 = vmatpush.msra.mxu0 0.0
    %90 = vmatpush.msra.mxu0 0.0
    %91 = vmatpush.msra.mxu0 0.0
    %92 = vmatpush.msra.mxu0 0.0
    %93 = vmatpush.msra.mxu0 0.0
    %94 = vmatpush.msra.mxu0 0.0
    %95 = vmatpush.msra.mxu0 0.0
    %96 = vmatpush.msra.mxu0 0.0
    %97 = vmatpush.msra.mxu0 0.0
    %98 = vmatpush.msra.mxu0 %v33
    %99 = vmatpush.msra.mxu0 %v32
    %100 = vmatmul.f32.gmra.mxu0 %v76
    %v101 = vpop.f32.mrf.mxu0
    %v102 = vadd.f32 %v67, %v101
    %103 = vmatmul.f32.gmra.mxu0 %v79
    %v104 = vpop.f32.mrf.mxu0
    %v105 = vadd.f32 %v70, %v104
    %106 = vmatmul.f32.gmra.mxu0 %v82
    %v107 = vpop.f32.mrf.mxu0
    %v108 = vadd.f32 %v73, %v107
    %109 = vdwg.mxu0
    %v110 = vld [vmem:[%s2] sm:$0xff]
    %v111 = vld [vmem:[%s2 + $0x8] sm:$0xff]
    %v112 = vld [vmem:[%s2 + $0x10] sm:$0xff]
    %v113 = vld [vmem:[%s3 + $0x20] sm:$0xff]
    %v114 = vld [vmem:[%s3 + $0x28] sm:$0xff]
    %v116 = vsel %vm39, %v110, 0
    %v119 = vsel %vm39, %v111, 0
    %v122 = vsel %vm39, %v112, 0
    %124 = vmatpush.msra.mxu0 0.0
    %125 = vmatpush.msra.mxu0 0.0
    %126 = vmatpush.msra.mxu0 0.0
    %127 = vmatpush.msra.mxu0 0.0
    %128 = vmatpush.msra.mxu0 0.0
    %129 = vmatpush.msra.mxu0 0.0
    %130 = vmatpush.msra.mxu0 0.0
    %131 = vmatpush.msra.mxu0 0.0
    %132 = vmatpush.msra.mxu0 0.0
    %133 = vmatpush.msra.mxu0 0.0
    %134 = vmatpush.msra.mxu0 0.0
    %135 = vmatpush.msra.mxu0 0.0
    %136 = vmatpush.msra.mxu0 0.0
    %137 = vmatpush.msra.mxu0 0.0
    %138 = vmatpush.msra.mxu0 %v114
    %139 = vmatpush.msra.mxu0 %v113
    %140 = vmatmul.f32.gmra.mxu0 %v116
    %v141 = vpop.f32.mrf.mxu0
    %v142 = vadd.f32 0.0, %v141
    %143 = vmatmul.f32.gmra.mxu0 %v119
    %v144 = vpop.f32.mrf.mxu0
    %v145 = vadd.f32 0.0, %v144
    %146 = vmatmul.f32.gmra.mxu0 %v122
    %v147 = vpop.f32.mrf.mxu0
    %v148 = vadd.f32 0.0, %v147
    %149 = vdwg.mxu0
    %v150 = vadd.f32 %v102, %v142
    %v151 = vadd.f32 %v105, %v145
    %v152 = vadd.f32 %v108, %v148
    %v153 = vld [vmem:[%s4] sm:$0x1]
    %v155 = vperm.slane %v153, 0
    %v157 = vadd.f32 %v150, %v155
    %v158 = vadd.f32 %v151, %v155
    %v159 = vadd.f32 %v152, %v155
    %v160 = vxor.u32 %v157, 2147483648
    %v161 = vxor.u32 %v158, 2147483648
    %v162 = vxor.u32 %v159, 2147483648
    %v163 = vmul.f32 %v160, 1.442695
    %v164 = vpow.pop %v163
    %v165 = vmul.f32 %v161, 1.442695
    %v166 = vpow.pop %v165
    %v167 = vmul.f32 %v162, 1.442695
    %v168 = vpow.pop %v167
    %v169 = vadd.f32 %v164, 1.0
    %v170 = vadd.f32 %v166, 1.0
    %v171 = vadd.f32 %v168, 1.0
    %v172 = vrcp.pop %v169
    %v173 = vmul.f32 %v169, %v172
    %v174 = vsub.f32 1.0, %v173
    %v175 = vmul.f32 %v172, %v174
    %v176 = vadd.f32 %v172, %v175
    %vm177 = vweird.f32 %v169
    %vm178 = vweird.f32 %v172
    %vm179 = vmor %vm177, %vm178
    %v180 = vsel %vm179, %v172, %v176
    %v181 = vand.u32 2147483647, %v169
    %vm182 = vcmp.eq.f32.partialorder %v181, 8.507059e+37
    %v183 = vand.u32 %v169, 2147483648
    %v184 = vor.u32 1.1754944e-38, %v183
    %v185 = vsel %vm182, %v184, %v180
    %v186 = vmul.f32 1.0, %v185
    %v187 = vrcp.pop %v170
    %v188 = vmul.f32 %v170, %v187
    %v189 = vsub.f32 1.0, %v188
    %v190 = vmul.f32 %v187, %v189
    %v191 = vadd.f32 %v187, %v190
    %vm192 = vweird.f32 %v170
    %vm193 = vweird.f32 %v187
    %vm194 = vmor %vm192, %vm193
    %v195 = vsel %vm194, %v187, %v191
    %v196 = vand.u32 2147483647, %v170
    %vm197 = vcmp.eq.f32.partialorder %v196, 8.507059e+37
    %v198 = vand.u32 %v170, 2147483648
    %v199 = vor.u32 1.1754944e-38, %v198
    %v200 = vsel %vm197, %v199, %v195
    %v201 = vmul.f32 1.0, %v200
    %v202 = vrcp.pop %v171
    %v203 = vmul.f32 %v171, %v202
    %v204 = vsub.f32 1.0, %v203
    %v205 = vmul.f32 %v202, %v204
    %v206 = vadd.f32 %v202, %v205
    %vm207 = vweird.f32 %v171
    %vm208 = vweird.f32 %v202
    %vm209 = vmor %vm207, %vm208
    %v210 = vsel %vm209, %v202, %v206
    %v211 = vand.u32 2147483647, %v171
    %vm212 = vcmp.eq.f32.partialorder %v211, 8.507059e+37
    %v213 = vand.u32 %v171, 2147483648
    %v214 = vor.u32 1.1754944e-38, %v213
    %v215 = vsel %vm212, %v214, %v210
    %v216 = vmul.f32 1.0, %v215
    %v217 = vmul.f32 %v157, %v186
    %v218 = vmul.f32 %v158, %v201
    %v219 = vmul.f32 %v159, %v216
    %223 = vrot.lane.b32.xlu0 %v217, 112
    %v224 = vpop.permute.xlu0 %223
    %225 = vrot.lane.b32.xlu0 %v218, 112
    %v226 = vpop.permute.xlu0 %225
    %227 = vrot.lane.b32.xlu0 %v219, 112
    %v228 = vpop.permute.xlu0 %227
    %v232 = vmul.f32 %v186, %v224
    %v233 = vmul.f32 %v201, %v226
    %v234 = vmul.f32 %v216, %v228
    %v235 = vld [vmem:[%s5] sm:$0xff]
    %v236 = vld [vmem:[%s5 + $0x8] sm:$0xff]
    %v237 = vld [vmem:[%s6] sm:$0x1]
    %v239 = vperm.slane %v237, 0
    %v242 = vsel %vm39, %v232, 0
    %v245 = vsel %vm39, %v233, 0
    %v248 = vsel %vm39, %v234, 0
    %250 = vmatpush.msra.mxu0 0.0
    %251 = vmatpush.msra.mxu0 0.0
    %252 = vmatpush.msra.mxu0 0.0
    %253 = vmatpush.msra.mxu0 0.0
    %254 = vmatpush.msra.mxu0 0.0
    %255 = vmatpush.msra.mxu0 0.0
    %256 = vmatpush.msra.mxu0 0.0
    %257 = vmatpush.msra.mxu0 0.0
    %258 = vmatpush.msra.mxu0 0.0
    %259 = vmatpush.msra.mxu0 0.0
    %260 = vmatpush.msra.mxu0 0.0
    %261 = vmatpush.msra.mxu0 0.0
    %262 = vmatpush.msra.mxu0 0.0
    %263 = vmatpush.msra.mxu0 0.0
    %264 = vmatpush.msra.mxu0 %v236
    %265 = vmatpush.msra.mxu0 %v235
    %266 = vmatmul.f32.gmra.mxu0 %v242
    %v267 = vpop.f32.mrf.mxu0
    %v268 = vadd.f32 %v239, %v267
    %269 = vmatmul.f32.gmra.mxu0 %v245
    %v270 = vpop.f32.mrf.mxu0
    %v271 = vadd.f32 %v239, %v270
    %272 = vmatmul.f32.gmra.mxu0 %v248
    %v273 = vpop.f32.mrf.mxu0
    %v274 = vadd.f32 %v239, %v273
    %275 = vdwg.mxu0
    %v276 = vxor.u32 %v268, 2147483648
    %v277 = vxor.u32 %v271, 2147483648
    %v278 = vxor.u32 %v274, 2147483648
    %v279 = vmul.f32 %v276, 1.442695
    %v280 = vpow.pop %v279
    %v281 = vmul.f32 %v277, 1.442695
    %v282 = vpow.pop %v281
    %v283 = vmul.f32 %v278, 1.442695
    %v284 = vpow.pop %v283
    %v285 = vadd.f32 %v280, 1.0
    %v286 = vadd.f32 %v282, 1.0
    %v287 = vadd.f32 %v284, 1.0
    %v288 = vrcp.pop %v285
    %v289 = vmul.f32 %v285, %v288
    %v290 = vsub.f32 1.0, %v289
    %v291 = vmul.f32 %v288, %v290
    %v292 = vadd.f32 %v288, %v291
    %vm293 = vweird.f32 %v285
    %vm294 = vweird.f32 %v288
    %vm295 = vmor %vm293, %vm294
    %v296 = vsel %vm295, %v288, %v292
    %v297 = vand.u32 2147483647, %v285
    %vm298 = vcmp.eq.f32.partialorder %v297, 8.507059e+37
    %v299 = vand.u32 %v285, 2147483648
    %v300 = vor.u32 1.1754944e-38, %v299
    %v301 = vsel %vm298, %v300, %v296
    %v302 = vmul.f32 1.0, %v301
    %v303 = vrcp.pop %v286
    %v304 = vmul.f32 %v286, %v303
    %v305 = vsub.f32 1.0, %v304
    %v306 = vmul.f32 %v303, %v305
    %v307 = vadd.f32 %v303, %v306
    %vm308 = vweird.f32 %v286
    %vm309 = vweird.f32 %v303
    %vm310 = vmor %vm308, %vm309
    %v311 = vsel %vm310, %v303, %v307
    %v312 = vand.u32 2147483647, %v286
    %vm313 = vcmp.eq.f32.partialorder %v312, 8.507059e+37
    %v314 = vand.u32 %v286, 2147483648
    %v315 = vor.u32 1.1754944e-38, %v314
    %v316 = vsel %vm313, %v315, %v311
    %v317 = vmul.f32 1.0, %v316
    %v318 = vrcp.pop %v287
    %v319 = vmul.f32 %v287, %v318
    %v320 = vsub.f32 1.0, %v319
    %v321 = vmul.f32 %v318, %v320
    %v322 = vadd.f32 %v318, %v321
    %vm323 = vweird.f32 %v287
    %vm324 = vweird.f32 %v318
    %vm325 = vmor %vm323, %vm324
    %v326 = vsel %vm325, %v318, %v322
    %v327 = vand.u32 2147483647, %v287
    %vm328 = vcmp.eq.f32.partialorder %v327, 8.507059e+37
    %v329 = vand.u32 %v287, 2147483648
    %v330 = vor.u32 1.1754944e-38, %v329
    %v331 = vsel %vm328, %v330, %v326
    %v332 = vmul.f32 1.0, %v331
    %333 = vst.msk [vmem:[#allocation2] sm:$0xff] %vm39, %v232
    %334 = vst.msk [vmem:[#allocation2 + $0x8] sm:$0xff] %vm39, %v233
    %335 = vst.msk [vmem:[#allocation2 + $0x10] sm:$0xff] %vm39, %v234
    %v336 = vmul.f32 %v268, %v302
    %v337 = vmul.f32 %v271, %v317
    %v338 = vmul.f32 %v274, %v332
    %342 = vrot.lane.b32.xlu0 %v336, 112
    %v343 = vpop.permute.xlu0 %342
    %344 = vrot.lane.b32.xlu0 %v337, 112
    %v345 = vpop.permute.xlu0 %344
    %346 = vrot.lane.b32.xlu0 %v338, 112
    %v347 = vpop.permute.xlu0 %346
    %v351 = vmul.f32 %v302, %v343
    %v352 = vmul.f32 %v317, %v345
    %v353 = vmul.f32 %v332, %v347
    %354 = vst.msk [vmem:[%s8] sm:$0xff] %vm39, %v351
    %355 = vst.msk [vmem:[%s8 + $0x8] sm:$0xff] %vm39, %v352
    %356 = vst.msk [vmem:[%s8 + $0x10] sm:$0xff] %vm39, %v353
    // Predicated region
    $region30: #{jvp__.13} parent=1 // pred_check
      _
    $region31: #{jvp__.13} parent=1 // pred_check_branch
      %358 = sbr.rel (0) target = $region33
    $region32: #{jvp__.13} parent=1 // pred_region
      %360 = vsyncadd [#allocation3], 0
      %s361 = sshll.u32 [#allocation2], 4
      %s362 = int_to_ptr.vmem [resolvable:$true] %s361
      %s363 = sshll.u32 %s7, 4
      %s364 = int_to_ptr.hbm [resolvable:$true] %s363
      %369 = dma.vmem_to_hbm [thread:$0]  %s362, 384, %s364, [#allocation3], 128, 128, 8
    $region33: #{jvp__.13} parent=1 // pred_fallthru
      _
    // Predicated region
    $region34: #{jvp__.13} parent=1 // pred_check
      _
    $region35: #{jvp__.13} parent=1 // pred_check_branch
      %371 = sbr.rel (0) target = $region37
    $region36: #{jvp__.13} parent=1 // pred_region
      _
    $region37: #{jvp__.13} parent=1 // pred_fallthru
      _
    // Predicated region
    $region38: #{jvp__.13} parent=1 // pred_check
      _
    $region39: #{jvp__.13} parent=1 // pred_check_branch
      %373 = sbr.rel (0) target = $region41
    $region40: #{jvp__.13} parent=1 // pred_region
      %375 = dma.done [#allocation3], 384
    $region41: #{jvp__.13} parent=1 // pred_fallthru
      _
    // Predicated region
    $region42: #{jvp__.13} parent=1 // pred_check
      _
    $region43: #{jvp__.13} parent=1 // pred_check_branch
      %377 = sbr.rel (0) target = $region45
    $region44: #{jvp__.13} parent=1 // pred_region
      _
    $region45: #{jvp__.13} parent=1 // pred_fallthru
      _
    %378 = vsyncpa [#allocation3], 1

</llo_original>
